<compile_context>
chip_gen: v6e
topology: v6e:2x2x1
jax: 0.10.0
libtpu: 0.0.40
codegen_flags: <defaults>
</compile_context>

<pallas_src>
import jax
import jax.numpy as jnp
from jax.experimental import pallas as pl
from jax.experimental.pallas import tpu as pltpu

LANE = 128
SUBLANE = 8


def _round_up(x, m):
    return ((x + m - 1) // m) * m


# ----------------------------------------------------------------------------
# Fused Pallas kernel: all TemporalBlocks + Linear head + log_softmax
# (one batch tile of B_TILE samples per grid step)
# ----------------------------------------------------------------------------
def _make_tcn_kernel(num_blocks, K, L, BT, dilations, needs_down, down_idx,
                     Cp, Op, n_classes, mm_dtype):

    def kernel(x_ref, w1_ref, b1_ref, w2_ref, b2_ref, wd_ref, bd_ref,
               lw_ref, lb_ref, o_ref):
        cur = x_ref[...]                                    # (BT, L, Cp) f32

        def dconv(v3, w_tap, bias, d):
            """weight-normed Conv1d(dilation=d, padding=(K-1)*d) + Chomp1d.

            v3: (BT, L, Cp) f32.  w_tap(k) -> (Cp, Cp) weight for tap k.
            Accumulates K tap matmuls (M = BT*L rows) into one f32 accumulator
            instead of materializing an (BT*L, K*Cp) im2col buffer."""
            P = (K - 1) * d
            if P > 0:
                # causal left-pad per sample, built in VMEM (no host-side pad)
                vp = jnp.concatenate(
                    [jnp.zeros((BT, P, Cp), jnp.float32), v3], axis=1)
            else:
                vp = v3
            acc = jnp.zeros((BT * L, Cp), jnp.float32)
            for k in range(K):                              # static unroll
                tap = vp[:, k * d:k * d + L, :].reshape(BT * L, Cp)
                acc = acc + jnp.dot(tap.astype(mm_dtype), w_tap(k),
                                    preferred_element_type=jnp.float32)
            return acc + bias                               # (BT*L, Cp) f32

        for b in range(num_blocks):                         # static unroll
            d = dilations[b]
            # conv1 -> chomp -> relu -> dropout(identity)
            h = jnp.maximum(
                dconv(cur, lambda k, b=b: w1_ref[b, k], b1_ref[b], d), 0.0)
            # conv2 -> chomp -> relu -> dropout(identity)
            out = jnp.maximum(
                dconv(h.reshape(BT, L, Cp), lambda k, b=b: w2_ref[b, k],
                      b2_ref[b], d), 0.0)
            # residual branch (1x1 conv only when the channel count changes;
            # identity blocks carry no downsample weight at all)
            if needs_down[b]:
                di = down_idx[b]
                res = jnp.dot(cur.reshape(BT * L, Cp).astype(mm_dtype),
                              wd_ref[di],
                              preferred_element_type=jnp.float32) + bd_ref[di]
            else:
                res = cur.reshape(BT * L, Cp)
            cur = jnp.maximum(out + res, 0.0).reshape(BT, L, Cp)

        # fused head: batched Linear on each sample's last time step,
        # lane-masked log_softmax.  (BT, Cp) @ (Cp, Op) -> (BT, Op).
        y_last = cur[:, L - 1, :]                           # (BT, Cp) f32
        logits = jnp.dot(y_last.astype(mm_dtype), lw_ref[...],
                         preferred_element_type=jnp.float32) + lb_ref[...]
        lane = jax.lax.broadcasted_iota(jnp.int32, logits.shape, 1)
        logits = jnp.where(lane < n_classes, logits, -1e30)  # f32 sentinel
        m = jnp.max(logits, axis=-1, keepdims=True)
        lse = jnp.log(jnp.sum(jnp.exp(logits - m), axis=-1, keepdims=True)) + m
        o_ref[...] = logits - lse                           # (BT, Op) f32

    return kernel


# ----------------------------------------------------------------------------
# Parameter init (raw, PyTorch-like shapes) and lane-dense packing
# ----------------------------------------------------------------------------
def init_params(key, input_size, output_size, num_channels, kernel_size):
    blocks = []
    c_in = input_size
    for i, c_out in enumerate(num_channels):
        key, k1, k2, k3, k4, k5, k6 = jax.random.split(key, 7)
        blk = {
            "dilation": 2 ** i,
            "w1": jax.random.normal(k1, (kernel_size, c_in, c_out), jnp.float32) * 0.3,
            "b1": jax.random.normal(k2, (1, c_out), jnp.float32) * 0.1,
            "w2": jax.random.normal(k3, (kernel_size, c_out, c_out), jnp.float32) * 0.3,
            "b2": jax.random.normal(k4, (1, c_out), jnp.float32) * 0.1,
        }
        if c_in != c_out:   # 1x1 downsample conv on the residual path
            blk["wd"] = jax.random.normal(k5, (1, c_in, c_out), jnp.float32) * 0.3
            blk["bd"] = jax.random.normal(k6, (1, c_out), jnp.float32) * 0.1
        else:
            blk["wd"] = None
            blk["bd"] = None
        blocks.append(blk)
        c_in = c_out
    key, kl1, kl2 = jax.random.split(key, 3)
    return {
        "blocks": blocks,
        "lin_w": jax.random.normal(kl1, (c_in, output_size), jnp.float32) * 0.3,
        "lin_b": jax.random.normal(kl2, (1, output_size), jnp.float32) * 0.1,
    }


def pack_params(params, input_size, output_size, kernel_size,
                matmul_dtype=jnp.bfloat16):
    """Lane-pad channels/classes to 128, stack per-block weights.

    Matmul operands are stored in `matmul_dtype` (bf16 by default, f32
    accumulation happens in-kernel); biases stay f32 (elementwise math is f32
    everywhere, v5e-safe)."""
    num_channels = [blk["w1"].shape[2] for blk in params["blocks"]]
    Cp = _round_up(max([input_size] + num_channels), LANE)
    Op = _round_up(output_size, LANE)
    K = kernel_size

    def pad_w(w):                       # (K, cin, cout) -> (K, Cp, Cp)
        Kk, ci, co = w.shape
        return jnp.pad(w, ((0, 0), (0, Cp - ci), (0, Cp - co))).astype(matmul_dtype)

    def pad_b(b):                       # (1, cout) -> (1, Cp) f32
        return jnp.pad(b, ((0, 0), (0, Cp - b.shape[1]))).astype(jnp.float32)

    w1_all = jnp.stack([pad_w(blk["w1"]) for blk in params["blocks"]])
    b1_all = jnp.stack([pad_b(blk["b1"]) for blk in params["blocks"]])
    w2_all = jnp.stack([pad_w(blk["w2"]) for blk in params["blocks"]])
    b2_all = jnp.stack([pad_b(blk["b2"]) for blk in params["blocks"]])

    # Downsample weights packed ONLY for blocks that change channel count.
    wd_list, bd_list, needs_down, down_idx = [], [], [], []
    for blk in params["blocks"]:
        if blk["wd"] is not None:
            down_idx.append(len(wd_list))
            needs_down.append(True)
            w = blk["wd"][0]            # (cin, cout)
            wd_list.append(
                jnp.pad(w, ((0, Cp - w.shape[0]), (0, Cp - w.shape[1]))
                        ).astype(matmul_dtype))
            bd_list.append(pad_b(blk["bd"]))
        else:
            needs_down.append(False)
            down_idx.append(-1)
    if not wd_list:  # keep the input list static even when no block downsamples
        wd_list = [jnp.zeros((Cp, Cp), matmul_dtype)]
        bd_list = [jnp.zeros((1, Cp), jnp.float32)]
    wd_all = jnp.stack(wd_list)
    bd_all = jnp.stack(bd_list)

    lw = params["lin_w"]
    lw_p = jnp.pad(lw, ((0, Cp - lw.shape[0]), (0, Op - lw.shape[1]))
                   ).astype(matmul_dtype)
    lb_p = jnp.pad(params["lin_b"],
                   ((0, 0), (0, Op - params["lin_b"].shape[1]))
                   ).astype(jnp.float32)

    return {
        "w1": w1_all, "b1": b1_all, "w2": w2_all, "b2": b2_all,
        "wd": wd_all, "bd": bd_all, "lw": lw_p, "lb": lb_p,
        "Cp": Cp, "Op": Op, "K": K,
        "dilations": tuple(blk["dilation"] for blk in params["blocks"]),
        "needs_down": tuple(needs_down),
        "down_idx": tuple(down_idx),
        "n_classes": output_size,
    }


# ----------------------------------------------------------------------------
# Forward pass: one pallas_call for the entire model
# ----------------------------------------------------------------------------
def tcn_model_forward(x_ncl, packed, *, batch_tile=None):
    N, Cin, L = x_ncl.shape
    Cp, Op, K = packed["Cp"], packed["Op"], packed["K"]
    dilations = packed["dilations"]
    needs_down = packed["needs_down"]
    down_idx = packed["down_idx"]
    nb = len(dilations)

    # Batch tile: fold BT samples into the matmul M-dimension so each grid
    # step feeds BT*L rows to the MXU (target >=128 for v5e / >=256 for
    # v6e/v7x).  BT is rounded to a sublane multiple for dense blocks.
    if batch_tile is None:
        batch_tile = max(1, 256 // max(L, 1))
    BT = _round_up(max(1, min(batch_tile, N)), SUBLANE)
    Np = _round_up(N, BT)               # ragged batch -> zero-pad & drop later

    # One-time layout change: NCL -> channels-last + lane-dense channel pad.
    # TODO(synk): for very large L/N, DMA the (BT, L, Cin) block un-padded and
    #             zero-extend to Cp inside the kernel instead.
    x = jnp.transpose(x_ncl, (0, 2, 1)).astype(jnp.float32)     # (N, L, Cin)
    x = jnp.pad(x, ((0, Np - N), (0, 0), (0, Cp - Cin)))        # (Np, L, Cp)

    kernel = _make_tcn_kernel(nb, K, L, BT, dilations, needs_down, down_idx,
                              Cp, Op, packed["n_classes"],
                              packed["w1"].dtype)

    # Grid-invariant weights/biases live whole-array in VMEM (no pipeline
    # double-buffering); only the activations are pipelined over the grid.
    def vmem_resident():
        return pl.BlockSpec(memory_space=pltpu.MemorySpace.VMEM)

    out = pl.pallas_call(
        kernel,
        grid=(Np // BT,),
        in_specs=[
            pl.BlockSpec((BT, L, Cp), lambda n: (n, 0, 0)),   # x (batch tile)
            vmem_resident(),   # w1 (nb, K, Cp, Cp)
            vmem_resident(),   # b1 (nb, 1, Cp)
            vmem_resident(),   # w2 (nb, K, Cp, Cp)
            vmem_resident(),   # b2 (nb, 1, Cp)
            vmem_resident(),   # wd (n_down, Cp, Cp)
            vmem_resident(),   # bd (n_down, 1, Cp)
            vmem_resident(),   # head weight (Cp, Op)
            vmem_resident(),   # head bias (1, Op)
        ],
        out_specs=pl.BlockSpec((BT, Op), lambda n: (n, 0)),
        out_shape=jax.ShapeDtypeStruct((Np, Op), jnp.float32),
        compiler_params=pltpu.CompilerParams(
            dimension_semantics=("parallel",),       # shard tiles across TCs (v7x)
            vmem_limit_bytes=64 * 1024 * 1024),
    )(x, packed["w1"], packed["b1"], packed["w2"], packed["b2"],
      packed["wd"], packed["bd"], packed["lw"], packed["lb"])

    return out[:N, :packed["n_classes"]]                       # (N, classes)


# ----------------------------------------------------------------------------
# Pure-JAX reference (for correctness check)
# ----------------------------------------------------------------------------
def _ref_forward(x_ncl, params):
    x = jnp.transpose(x_ncl, (0, 2, 1)).astype(jnp.float32)    # (N, L, C)

    def dconv(v, w, b, d):
        K = w.shape[0]
        P = (K - 1) * d
        vp = jnp.pad(v, ((0, 0), (P, 0), (0, 0)))
        out = b
        for k in range(K):
            out = out + jnp.einsum("nlc,co->nlo",
                                   vp[:, k * d:k * d + v.shape[1], :], w[k])
        return out

    for blk in params["blocks"]:
        d = blk["dilation"]
        h = jax.nn.relu(dconv(x, blk["w1"], blk["b1"], d))
        o = jax.nn.relu(dconv(h, blk["w2"], blk["b2"], d))
        res = x if blk["wd"] is None else dconv(x, blk["wd"], blk["bd"], 1)
        x = jax.nn.relu(o + res)

    y_last = x[:, -1, :]
    logits = y_last @ params["lin_w"] + params["lin_b"]
    return jax.nn.log_softmax(logits, axis=1)


# ----------------------------------------------------------------------------
if __name__ == "__main__":
    key = jax.random.PRNGKey(0)

    # Small, forward-consistent shapes.  N=12 with batch_tile=8 exercises a
    # 2-step parallel grid AND a ragged last tile (12 -> padded to 16).
    N, input_size, L = 12, 4, 16
    num_channels = [8, 8]      # block 0: 4->8 (downsample), block 1: 8->8 (identity)
    kernel_size = 3
    output_size = 5

    key, kx, kp = jax.random.split(key, 3)
    x = jax.random.normal(kx, (N, input_size, L), jnp.float32)   # PyTorch NCL input
    params = init_params(kp, input_size, output_size, num_channels, kernel_size)

    ref = _ref_forward(x, params)

    # --- f32 matmul operands: tight check against the pure-JAX reference ----
    packed_f32 = pack_params(params, input_size, output_size, kernel_size,
                             matmul_dtype=jnp.float32)
    out_f32 = jax.block_until_ready(
        tcn_model_forward(x, packed_f32, batch_tile=8))
    assert out_f32.shape == (N, output_size), out_f32.shape
    assert bool(jnp.all(jnp.isfinite(out_f32)))
    assert bool(jnp.allclose(jnp.sum(jnp.exp(out_f32), axis=1), 1.0, atol=1e-4))
    assert bool(jnp.allclose(out_f32, ref, atol=1e-4, rtol=1e-4))

    # --- bf16 matmul operands (f32 accumulation / elementwise): loose check --
    packed_bf16 = pack_params(params, input_size, output_size, kernel_size,
                              matmul_dtype=jnp.bfloat16)
    out_bf16 = jax.block_until_ready(
        tcn_model_forward(x, packed_bf16, batch_tile=8))
    assert out_bf16.shape == (N, output_size), out_bf16.shape
    assert bool(jnp.all(jnp.isfinite(out_bf16)))
    assert bool(jnp.allclose(jnp.sum(jnp.exp(out_bf16), axis=1), 1.0, atol=1e-2))
    assert bool(jnp.allclose(out_bf16, ref, atol=0.2, rtol=0.1))

    print("KERNEL_OK")
</pallas_src>

<mosaic_0001>
module attributes {stable_mosaic.version = 11 : i64} {
  func.func @kernel(%arg0: i32, %arg1: memref<8x16x128xf32, #tpu.memory_space<vmem>>, %arg2: memref<2x3x128x128xf32, #tpu.memory_space<vmem>>, %arg3: memref<2x1x128xf32, #tpu.memory_space<vmem>>, %arg4: memref<2x3x128x128xf32, #tpu.memory_space<vmem>>, %arg5: memref<2x1x128xf32, #tpu.memory_space<vmem>>, %arg6: memref<1x128x128xf32, #tpu.memory_space<vmem>>, %arg7: memref<1x1x128xf32, #tpu.memory_space<vmem>>, %arg8: memref<128x128xf32, #tpu.memory_space<vmem>>, %arg9: memref<1x128xf32, #tpu.memory_space<vmem>>, %arg10: memref<8x128xf32, #tpu.memory_space<vmem>>) attributes {dimension_semantics = [#tpu.dimension_semantics<parallel>], iteration_bounds = array<i64: 2>, scalar_prefetch = 0 : i64, scratch_operands = 0 : i64, tpu.core_type = #tpu.core_type<tc>, window_params = [{transform_indices = @transform_0, window_bounds = array<i64: 8, 16, 128>}, {pipeline_mode = #tpu.pipeline_mode<synchronous>, transform_indices = @transform_1, window_bounds = array<i64: 2, 3, 128, 128>}, {pipeline_mode = #tpu.pipeline_mode<synchronous>, transform_indices = @transform_2, window_bounds = array<i64: 2, 1, 128>}, {pipeline_mode = #tpu.pipeline_mode<synchronous>, transform_indices = @transform_3, window_bounds = array<i64: 2, 3, 128, 128>}, {pipeline_mode = #tpu.pipeline_mode<synchronous>, transform_indices = @transform_4, window_bounds = array<i64: 2, 1, 128>}, {pipeline_mode = #tpu.pipeline_mode<synchronous>, transform_indices = @transform_5, window_bounds = array<i64: 1, 128, 128>}, {pipeline_mode = #tpu.pipeline_mode<synchronous>, transform_indices = @transform_6, window_bounds = array<i64: 1, 1, 128>}, {pipeline_mode = #tpu.pipeline_mode<synchronous>, transform_indices = @transform_7, window_bounds = array<i64: 128, 128>}, {pipeline_mode = #tpu.pipeline_mode<synchronous>, transform_indices = @transform_8, window_bounds = array<i64: 1, 128>}, {transform_indices = @transform_9, window_bounds = array<i64: 8, 128>}]} {
    %c0 = arith.constant 0 : index
    %c0_0 = arith.constant 0 : index
    %c0_1 = arith.constant 0 : index
    %0 = vector.load %arg1[%c0, %c0_0, %c0_1] : memref<8x16x128xf32, #tpu.memory_space<vmem>>, vector<8x16x128xf32>
    %c0_2 = arith.constant 0 : index
    %c0_3 = arith.constant 0 : index
    %c0_4 = arith.constant 0 : index
    %1 = vector.load %arg3[%c0_2, %c0_3, %c0_4] : memref<2x1x128xf32, #tpu.memory_space<vmem>>, vector<1x1x128xf32>
    %2 = vector.shape_cast %1 : vector<1x1x128xf32> to vector<1x128xf32>
    %cst = arith.constant 0.000000e+00 : f32
    %3 = vector.broadcast %cst : f32 to vector<8x2x128xf32>
    %4 = tpu.concatenate %3, %0 in 1 : vector<8x2x128xf32>, vector<8x16x128xf32> -> vector<8x18x128xf32>
    %cst_5 = arith.constant 0.000000e+00 : f32
    %5 = vector.broadcast %cst_5 : f32 to vector<128x128xf32>
    %6 = vector.extract_strided_slice %4 {offsets = [0, 0, 0], sizes = [8, 16, 128], strides = [1, 1, 1]} : vector<8x18x128xf32> to vector<8x16x128xf32>
    %7 = vector.shape_cast %6 : vector<8x16x128xf32> to vector<128x128xf32>
    %c0_6 = arith.constant 0 : index
    %c0_7 = arith.constant 0 : index
    %c0_8 = arith.constant 0 : index
    %c0_9 = arith.constant 0 : index
    %8 = vector.load %arg2[%c0_6, %c0_7, %c0_8, %c0_9] : memref<2x3x128x128xf32, #tpu.memory_space<vmem>>, vector<1x1x128x128xf32>
    %9 = vector.shape_cast %8 : vector<1x1x128x128xf32> to vector<128x128xf32>
    %cst_10 = arith.constant dense<0.000000e+00> : vector<128x128xf32>
    %10 = tpu.matmul %7, %9, %cst_10 {dimension_numbers = #tpu.dot_dimension_numbers<[1], [0], [0], [1], [0, 0, 1, 1], [], []>} : vector<128x128xf32>, vector<128x128xf32>, vector<128x128xf32> -> vector<128x128xf32>
    %11 = arith.addf %5, %10 : vector<128x128xf32>
    %12 = vector.extract_strided_slice %4 {offsets = [0, 1, 0], sizes = [8, 16, 128], strides = [1, 1, 1]} : vector<8x18x128xf32> to vector<8x16x128xf32>
    %13 = vector.shape_cast %12 : vector<8x16x128xf32> to vector<128x128xf32>
    %c0_11 = arith.constant 0 : index
    %c1 = arith.constant 1 : index
    %c0_12 = arith.constant 0 : index
    %c0_13 = arith.constant 0 : index
    %14 = vector.load %arg2[%c0_11, %c1, %c0_12, %c0_13] : memref<2x3x128x128xf32, #tpu.memory_space<vmem>>, vector<1x1x128x128xf32>
    %15 = vector.shape_cast %14 : vector<1x1x128x128xf32> to vector<128x128xf32>
    %cst_14 = arith.constant dense<0.000000e+00> : vector<128x128xf32>
    %16 = tpu.matmul %13, %15, %cst_14 {dimension_numbers = #tpu.dot_dimension_numbers<[1], [0], [0], [1], [0, 0, 1, 1], [], []>} : vector<128x128xf32>, vector<128x128xf32>, vector<128x128xf32> -> vector<128x128xf32>
    %17 = arith.addf %11, %16 : vector<128x128xf32>
    %18 = vector.extract_strided_slice %4 {offsets = [0, 2, 0], sizes = [8, 16, 128], strides = [1, 1, 1]} : vector<8x18x128xf32> to vector<8x16x128xf32>
    %19 = vector.shape_cast %18 : vector<8x16x128xf32> to vector<128x128xf32>
    %c0_15 = arith.constant 0 : index
    %c2 = arith.constant 2 : index
    %c0_16 = arith.constant 0 : index
    %c0_17 = arith.constant 0 : index
    %20 = vector.load %arg2[%c0_15, %c2, %c0_16, %c0_17] : memref<2x3x128x128xf32, #tpu.memory_space<vmem>>, vector<1x1x128x128xf32>
    %21 = vector.shape_cast %20 : vector<1x1x128x128xf32> to vector<128x128xf32>
    %cst_18 = arith.constant dense<0.000000e+00> : vector<128x128xf32>
    %22 = tpu.matmul %19, %21, %cst_18 {dimension_numbers = #tpu.dot_dimension_numbers<[1], [0], [0], [1], [0, 0, 1, 1], [], []>} : vector<128x128xf32>, vector<128x128xf32>, vector<128x128xf32> -> vector<128x128xf32>
    %23 = arith.addf %17, %22 : vector<128x128xf32>
    %24 = vector.broadcast %2 : vector<1x128xf32> to vector<128x128xf32>
    %25 = arith.addf %23, %24 : vector<128x128xf32>
    %cst_19 = arith.constant 0.000000e+00 : f32
    %26 = vector.broadcast %cst_19 : f32 to vector<128x128xf32>
    %27 = arith.maximumf %25, %26 : vector<128x128xf32>
    %28 = vector.shape_cast %27 : vector<128x128xf32> to vector<8x16x128xf32>
    %c0_20 = arith.constant 0 : index
    %c0_21 = arith.constant 0 : index
    %c0_22 = arith.constant 0 : index
    %29 = vector.load %arg5[%c0_20, %c0_21, %c0_22] : memref<2x1x128xf32, #tpu.memory_space<vmem>>, vector<1x1x128xf32>
    %30 = vector.shape_cast %29 : vector<1x1x128xf32> to vector<1x128xf32>
    %cst_23 = arith.constant 0.000000e+00 : f32
    %31 = vector.broadcast %cst_23 : f32 to vector<8x2x128xf32>
    %32 = tpu.concatenate %31, %28 in 1 : vector<8x2x128xf32>, vector<8x16x128xf32> -> vector<8x18x128xf32>
    %cst_24 = arith.constant 0.000000e+00 : f32
    %33 = vector.broadcast %cst_24 : f32 to vector<128x128xf32>
    %34 = vector.extract_strided_slice %32 {offsets = [0, 0, 0], sizes = [8, 16, 128], strides = [1, 1, 1]} : vector<8x18x128xf32> to vector<8x16x128xf32>
    %35 = vector.shape_cast %34 : vector<8x16x128xf32> to vector<128x128xf32>
    %c0_25 = arith.constant 0 : index
    %c0_26 = arith.constant 0 : index
    %c0_27 = arith.constant 0 : index
    %c0_28 = arith.constant 0 : index
    %36 = vector.load %arg4[%c0_25, %c0_26, %c0_27, %c0_28] : memref<2x3x128x128xf32, #tpu.memory_space<vmem>>, vector<1x1x128x128xf32>
    %37 = vector.shape_cast %36 : vector<1x1x128x128xf32> to vector<128x128xf32>
    %cst_29 = arith.constant dense<0.000000e+00> : vector<128x128xf32>
    %38 = tpu.matmul %35, %37, %cst_29 {dimension_numbers = #tpu.dot_dimension_numbers<[1], [0], [0], [1], [0, 0, 1, 1], [], []>} : vector<128x128xf32>, vector<128x128xf32>, vector<128x128xf32> -> vector<128x128xf32>
    %39 = arith.addf %33, %38 : vector<128x128xf32>
    %40 = vector.extract_strided_slice %32 {offsets = [0, 1, 0], sizes = [8, 16, 128], strides = [1, 1, 1]} : vector<8x18x128xf32> to vector<8x16x128xf32>
    %41 = vector.shape_cast %40 : vector<8x16x128xf32> to vector<128x128xf32>
    %c0_30 = arith.constant 0 : index
    %c1_31 = arith.constant 1 : index
    %c0_32 = arith.constant 0 : index
    %c0_33 = arith.constant 0 : index
    %42 = vector.load %arg4[%c0_30, %c1_31, %c0_32, %c0_33] : memref<2x3x128x128xf32, #tpu.memory_space<vmem>>, vector<1x1x128x128xf32>
    %43 = vector.shape_cast %42 : vector<1x1x128x128xf32> to vector<128x128xf32>
    %cst_34 = arith.constant dense<0.000000e+00> : vector<128x128xf32>
    %44 = tpu.matmul %41, %43, %cst_34 {dimension_numbers = #tpu.dot_dimension_numbers<[1], [0], [0], [1], [0, 0, 1, 1], [], []>} : vector<128x128xf32>, vector<128x128xf32>, vector<128x128xf32> -> vector<128x128xf32>
    %45 = arith.addf %39, %44 : vector<128x128xf32>
    %46 = vector.extract_strided_slice %32 {offsets = [0, 2, 0], sizes = [8, 16, 128], strides = [1, 1, 1]} : vector<8x18x128xf32> to vector<8x16x128xf32>
    %47 = vector.shape_cast %46 : vector<8x16x128xf32> to vector<128x128xf32>
    %c0_35 = arith.constant 0 : index
    %c2_36 = arith.constant 2 : index
    %c0_37 = arith.constant 0 : index
    %c0_38 = arith.constant 0 : index
    %48 = vector.load %arg4[%c0_35, %c2_36, %c0_37, %c0_38] : memref<2x3x128x128xf32, #tpu.memory_space<vmem>>, vector<1x1x128x128xf32>
    %49 = vector.shape_cast %48 : vector<1x1x128x128xf32> to vector<128x128xf32>
    %cst_39 = arith.constant dense<0.000000e+00> : vector<128x128xf32>
    %50 = tpu.matmul %47, %49, %cst_39 {dimension_numbers = #tpu.dot_dimension_numbers<[1], [0], [0], [1], [0, 0, 1, 1], [], []>} : vector<128x128xf32>, vector<128x128xf32>, vector<128x128xf32> -> vector<128x128xf32>
    %51 = arith.addf %45, %50 : vector<128x128xf32>
    %52 = vector.broadcast %30 : vector<1x128xf32> to vector<128x128xf32>
    %53 = arith.addf %51, %52 : vector<128x128xf32>
    %cst_40 = arith.constant 0.000000e+00 : f32
    %54 = vector.broadcast %cst_40 : f32 to vector<128x128xf32>
    %55 = arith.maximumf %53, %54 : vector<128x128xf32>
    %56 = vector.shape_cast %0 : vector<8x16x128xf32> to vector<128x128xf32>
    %c0_41 = arith.constant 0 : index
    %c0_42 = arith.constant 0 : index
    %c0_43 = arith.constant 0 : index
    %57 = vector.load %arg6[%c0_41, %c0_42, %c0_43] : memref<1x128x128xf32, #tpu.memory_space<vmem>>, vector<1x128x128xf32>
    %58 = vector.shape_cast %57 : vector<1x128x128xf32> to vector<128x128xf32>
    %cst_44 = arith.constant dense<0.000000e+00> : vector<128x128xf32>
    %59 = tpu.matmul %56, %58, %cst_44 {dimension_numbers = #tpu.dot_dimension_numbers<[1], [0], [0], [1], [0, 0, 1, 1], [], []>} : vector<128x128xf32>, vector<128x128xf32>, vector<128x128xf32> -> vector<128x128xf32>
    %c0_45 = arith.constant 0 : index
    %c0_46 = arith.constant 0 : index
    %c0_47 = arith.constant 0 : index
    %60 = vector.load %arg7[%c0_45, %c0_46, %c0_47] : memref<1x1x128xf32, #tpu.memory_space<vmem>>, vector<1x1x128xf32>
    %61 = vector.shape_cast %60 : vector<1x1x128xf32> to vector<1x128xf32>
    %62 = vector.broadcast %61 : vector<1x128xf32> to vector<128x128xf32>
    %63 = arith.addf %59, %62 : vector<128x128xf32>
    %64 = arith.addf %55, %63 : vector<128x128xf32>
    %cst_48 = arith.constant 0.000000e+00 : f32
    %65 = vector.broadcast %cst_48 : f32 to vector<128x128xf32>
    %66 = arith.maximumf %64, %65 : vector<128x128xf32>
    %67 = vector.shape_cast %66 : vector<128x128xf32> to vector<8x16x128xf32>
    %c1_49 = arith.constant 1 : index
    %c0_50 = arith.constant 0 : index
    %c0_51 = arith.constant 0 : index
    %68 = vector.load %arg3[%c1_49, %c0_50, %c0_51] : memref<2x1x128xf32, #tpu.memory_space<vmem>>, vector<1x1x128xf32>
    %69 = vector.shape_cast %68 : vector<1x1x128xf32> to vector<1x128xf32>
    %cst_52 = arith.constant 0.000000e+00 : f32
    %70 = vector.broadcast %cst_52 : f32 to vector<8x4x128xf32>
    %71 = tpu.concatenate %70, %67 in 1 : vector<8x4x128xf32>, vector<8x16x128xf32> -> vector<8x20x128xf32>
    %cst_53 = arith.constant 0.000000e+00 : f32
    %72 = vector.broadcast %cst_53 : f32 to vector<128x128xf32>
    %73 = vector.extract_strided_slice %71 {offsets = [0, 0, 0], sizes = [8, 16, 128], strides = [1, 1, 1]} : vector<8x20x128xf32> to vector<8x16x128xf32>
    %74 = vector.shape_cast %73 : vector<8x16x128xf32> to vector<128x128xf32>
    %c1_54 = arith.constant 1 : index
    %c0_55 = arith.constant 0 : index
    %c0_56 = arith.constant 0 : index
    %c0_57 = arith.constant 0 : index
    %75 = vector.load %arg2[%c1_54, %c0_55, %c0_56, %c0_57] : memref<2x3x128x128xf32, #tpu.memory_space<vmem>>, vector<1x1x128x128xf32>
    %76 = vector.shape_cast %75 : vector<1x1x128x128xf32> to vector<128x128xf32>
    %cst_58 = arith.constant dense<0.000000e+00> : vector<128x128xf32>
    %77 = tpu.matmul %74, %76, %cst_58 {dimension_numbers = #tpu.dot_dimension_numbers<[1], [0], [0], [1], [0, 0, 1, 1], [], []>} : vector<128x128xf32>, vector<128x128xf32>, vector<128x128xf32> -> vector<128x128xf32>
    %78 = arith.addf %72, %77 : vector<128x128xf32>
    %79 = vector.extract_strided_slice %71 {offsets = [0, 2, 0], sizes = [8, 16, 128], strides = [1, 1, 1]} : vector<8x20x128xf32> to vector<8x16x128xf32>
    %80 = vector.shape_cast %79 : vector<8x16x128xf32> to vector<128x128xf32>
    %c1_59 = arith.constant 1 : index
    %c1_60 = arith.constant 1 : index
    %c0_61 = arith.constant 0 : index
    %c0_62 = arith.constant 0 : index
    %81 = vector.load %arg2[%c1_59, %c1_60, %c0_61, %c0_62] : memref<2x3x128x128xf32, #tpu.memory_space<vmem>>, vector<1x1x128x128xf32>
    %82 = vector.shape_cast %81 : vector<1x1x128x128xf32> to vector<128x128xf32>
    %cst_63 = arith.constant dense<0.000000e+00> : vector<128x128xf32>
    %83 = tpu.matmul %80, %82, %cst_63 {dimension_numbers = #tpu.dot_dimension_numbers<[1], [0], [0], [1], [0, 0, 1, 1], [], []>} : vector<128x128xf32>, vector<128x128xf32>, vector<128x128xf32> -> vector<128x128xf32>
    %84 = arith.addf %78, %83 : vector<128x128xf32>
    %85 = vector.extract_strided_slice %71 {offsets = [0, 4, 0], sizes = [8, 16, 128], strides = [1, 1, 1]} : vector<8x20x128xf32> to vector<8x16x128xf32>
    %86 = vector.shape_cast %85 : vector<8x16x128xf32> to vector<128x128xf32>
    %c1_64 = arith.constant 1 : index
    %c2_65 = arith.constant 2 : index
    %c0_66 = arith.constant 0 : index
    %c0_67 = arith.constant 0 : index
    %87 = vector.load %arg2[%c1_64, %c2_65, %c0_66, %c0_67] : memref<2x3x128x128xf32, #tpu.memory_space<vmem>>, vector<1x1x128x128xf32>
    %88 = vector.shape_cast %87 : vector<1x1x128x128xf32> to vector<128x128xf32>
    %cst_68 = arith.constant dense<0.000000e+00> : vector<128x128xf32>
    %89 = tpu.matmul %86, %88, %cst_68 {dimension_numbers = #tpu.dot_dimension_numbers<[1], [0], [0], [1], [0, 0, 1, 1], [], []>} : vector<128x128xf32>, vector<128x128xf32>, vector<128x128xf32> -> vector<128x128xf32>
    %90 = arith.addf %84, %89 : vector<128x128xf32>
    %91 = vector.broadcast %69 : vector<1x128xf32> to vector<128x128xf32>
    %92 = arith.addf %90, %91 : vector<128x128xf32>
    %cst_69 = arith.constant 0.000000e+00 : f32
    %93 = vector.broadcast %cst_69 : f32 to vector<128x128xf32>
    %94 = arith.maximumf %92, %93 : vector<128x128xf32>
    %95 = vector.shape_cast %94 : vector<128x128xf32> to vector<8x16x128xf32>
    %c1_70 = arith.constant 1 : index
    %c0_71 = arith.constant 0 : index
    %c0_72 = arith.constant 0 : index
    %96 = vector.load %arg5[%c1_70, %c0_71, %c0_72] : memref<2x1x128xf32, #tpu.memory_space<vmem>>, vector<1x1x128xf32>
    %97 = vector.shape_cast %96 : vector<1x1x128xf32> to vector<1x128xf32>
    %cst_73 = arith.constant 0.000000e+00 : f32
    %98 = vector.broadcast %cst_73 : f32 to vector<8x4x128xf32>
    %99 = tpu.concatenate %98, %95 in 1 : vector<8x4x128xf32>, vector<8x16x128xf32> -> vector<8x20x128xf32>
    %cst_74 = arith.constant 0.000000e+00 : f32
    %100 = vector.broadcast %cst_74 : f32 to vector<128x128xf32>
    %101 = vector.extract_strided_slice %99 {offsets = [0, 0, 0], sizes = [8, 16, 128], strides = [1, 1, 1]} : vector<8x20x128xf32> to vector<8x16x128xf32>
    %102 = vector.shape_cast %101 : vector<8x16x128xf32> to vector<128x128xf32>
    %c1_75 = arith.constant 1 : index
    %c0_76 = arith.constant 0 : index
    %c0_77 = arith.constant 0 : index
    %c0_78 = arith.constant 0 : index
    %103 = vector.load %arg4[%c1_75, %c0_76, %c0_77, %c0_78] : memref<2x3x128x128xf32, #tpu.memory_space<vmem>>, vector<1x1x128x128xf32>
    %104 = vector.shape_cast %103 : vector<1x1x128x128xf32> to vector<128x128xf32>
    %cst_79 = arith.constant dense<0.000000e+00> : vector<128x128xf32>
    %105 = tpu.matmul %102, %104, %cst_79 {dimension_numbers = #tpu.dot_dimension_numbers<[1], [0], [0], [1], [0, 0, 1, 1], [], []>} : vector<128x128xf32>, vector<128x128xf32>, vector<128x128xf32> -> vector<128x128xf32>
    %106 = arith.addf %100, %105 : vector<128x128xf32>
    %107 = vector.extract_strided_slice %99 {offsets = [0, 2, 0], sizes = [8, 16, 128], strides = [1, 1, 1]} : vector<8x20x128xf32> to vector<8x16x128xf32>
    %108 = vector.shape_cast %107 : vector<8x16x128xf32> to vector<128x128xf32>
    %c1_80 = arith.constant 1 : index
    %c1_81 = arith.constant 1 : index
    %c0_82 = arith.constant 0 : index
    %c0_83 = arith.constant 0 : index
    %109 = vector.load %arg4[%c1_80, %c1_81, %c0_82, %c0_83] : memref<2x3x128x128xf32, #tpu.memory_space<vmem>>, vector<1x1x128x128xf32>
    %110 = vector.shape_cast %109 : vector<1x1x128x128xf32> to vector<128x128xf32>
    %cst_84 = arith.constant dense<0.000000e+00> : vector<128x128xf32>
    %111 = tpu.matmul %108, %110, %cst_84 {dimension_numbers = #tpu.dot_dimension_numbers<[1], [0], [0], [1], [0, 0, 1, 1], [], []>} : vector<128x128xf32>, vector<128x128xf32>, vector<128x128xf32> -> vector<128x128xf32>
    %112 = arith.addf %106, %111 : vector<128x128xf32>
    %113 = vector.extract_strided_slice %99 {offsets = [0, 4, 0], sizes = [8, 16, 128], strides = [1, 1, 1]} : vector<8x20x128xf32> to vector<8x16x128xf32>
    %114 = vector.shape_cast %113 : vector<8x16x128xf32> to vector<128x128xf32>
    %c1_85 = arith.constant 1 : index
    %c2_86 = arith.constant 2 : index
    %c0_87 = arith.constant 0 : index
    %c0_88 = arith.constant 0 : index
    %115 = vector.load %arg4[%c1_85, %c2_86, %c0_87, %c0_88] : memref<2x3x128x128xf32, #tpu.memory_space<vmem>>, vector<1x1x128x128xf32>
    %116 = vector.shape_cast %115 : vector<1x1x128x128xf32> to vector<128x128xf32>
    %cst_89 = arith.constant dense<0.000000e+00> : vector<128x128xf32>
    %117 = tpu.matmul %114, %116, %cst_89 {dimension_numbers = #tpu.dot_dimension_numbers<[1], [0], [0], [1], [0, 0, 1, 1], [], []>} : vector<128x128xf32>, vector<128x128xf32>, vector<128x128xf32> -> vector<128x128xf32>
    %118 = arith.addf %112, %117 : vector<128x128xf32>
    %119 = vector.broadcast %97 : vector<1x128xf32> to vector<128x128xf32>
    %120 = arith.addf %118, %119 : vector<128x128xf32>
    %cst_90 = arith.constant 0.000000e+00 : f32
    %121 = vector.broadcast %cst_90 : f32 to vector<128x128xf32>
    %122 = arith.maximumf %120, %121 : vector<128x128xf32>
    %123 = vector.shape_cast %67 : vector<8x16x128xf32> to vector<128x128xf32>
    %124 = arith.addf %122, %123 : vector<128x128xf32>
    %cst_91 = arith.constant 0.000000e+00 : f32
    %125 = vector.broadcast %cst_91 : f32 to vector<128x128xf32>
    %126 = arith.maximumf %124, %125 : vector<128x128xf32>
    %127 = vector.shape_cast %126 : vector<128x128xf32> to vector<8x16x128xf32>
    %128 = vector.extract_strided_slice %127 {offsets = [0, 15, 0], sizes = [8, 1, 128], strides = [1, 1, 1]} : vector<8x16x128xf32> to vector<8x1x128xf32>
    %129 = vector.shape_cast %128 : vector<8x1x128xf32> to vector<8x128xf32>
    %c0_92 = arith.constant 0 : index
    %c0_93 = arith.constant 0 : index
    %130 = vector.load %arg8[%c0_92, %c0_93] : memref<128x128xf32, #tpu.memory_space<vmem>>, vector<128x128xf32>
    %cst_94 = arith.constant dense<0.000000e+00> : vector<8x128xf32>
    %131 = tpu.matmul %129, %130, %cst_94 {dimension_numbers = #tpu.dot_dimension_numbers<[1], [0], [0], [1], [0, 0, 1, 1], [], []>} : vector<8x128xf32>, vector<128x128xf32>, vector<8x128xf32> -> vector<8x128xf32>
    %c0_95 = arith.constant 0 : index
    %c0_96 = arith.constant 0 : index
    %132 = vector.load %arg9[%c0_95, %c0_96] : memref<1x128xf32, #tpu.memory_space<vmem>>, vector<1x128xf32>
    %133 = vector.broadcast %132 : vector<1x128xf32> to vector<8x128xf32>
    %134 = arith.addf %131, %133 : vector<8x128xf32>
    %135 = tpu.iota {dimensions = array<i32: 1>} : vector<8x128xi32>
    %c5_i32 = arith.constant 5 : i32
    %136 = vector.broadcast %c5_i32 : i32 to vector<8x128xi32>
    %137 = arith.cmpi slt, %135, %136 : vector<8x128xi32>
    %cst_97 = arith.constant -1.000000e+30 : f32
    %138 = vector.broadcast %cst_97 : f32 to vector<8x128xf32>
    %139 = arith.select %137, %134, %138 : vector<8x128xi1>, vector<8x128xf32>
    %cst_98 = arith.constant dense<0xFF800000> : vector<8xf32>
    %140 = vector.multi_reduction <maximumf>, %139, %cst_98 [1] : vector<8x128xf32> to vector<8xf32>
    %141 = vector.shape_cast %140 : vector<8xf32> to vector<8x1xf32>
    %142 = vector.broadcast %141 : vector<8x1xf32> to vector<8x128xf32>
    %143 = arith.subf %139, %142 : vector<8x128xf32>
    %144 = math.exp %143 : vector<8x128xf32>
    %cst_99 = arith.constant dense<0.000000e+00> : vector<8xf32>
    %145 = vector.multi_reduction <add>, %144, %cst_99 [1] : vector<8x128xf32> to vector<8xf32>
    %146 = vector.shape_cast %145 : vector<8xf32> to vector<8x1xf32>
    %147 = math.log %146 : vector<8x1xf32>
    %148 = arith.addf %147, %141 : vector<8x1xf32>
    %149 = vector.broadcast %148 : vector<8x1xf32> to vector<8x128xf32>
    %150 = arith.subf %139, %149 : vector<8x128xf32>
    %c0_100 = arith.constant 0 : index
    %c0_101 = arith.constant 0 : index
    %151 = vector.load %arg10[%c0_100, %c0_101] : memref<8x128xf32, #tpu.memory_space<vmem>>, vector<8x128xf32>
    tpu.vector_store %arg10[%c0_100, %c0_101], %150 {strides = array<i32>} : memref<8x128xf32, #tpu.memory_space<vmem>>, vector<8x128xf32>,
    return
  }
  func.func @transform_0(%arg0: i32) -> (i32, i32, i32) {
    %c0_i32 = arith.constant 0 : i32
    %c0_i32_0 = arith.constant 0 : i32
    %c0_i32_1 = arith.constant 0 : i32
    return %arg0, %c0_i32, %c0_i32_0 : i32, i32, i32
  }
  func.func @transform_1(%arg0: i32) -> (i32, i32, i32, i32) {
    %c0_i32 = arith.constant 0 : i32
    %c0_i32_0 = arith.constant 0 : i32
    %c0_i32_1 = arith.constant 0 : i32
    %c0_i32_2 = arith.constant 0 : i32
    %c0_i32_3 = arith.constant 0 : i32
    return %c0_i32, %c0_i32_0, %c0_i32_1, %c0_i32_2 : i32, i32, i32, i32
  }
  func.func @transform_2(%arg0: i32) -> (i32, i32, i32) {
    %c0_i32 = arith.constant 0 : i32
    %c0_i32_0 = arith.constant 0 : i32
    %c0_i32_1 = arith.constant 0 : i32
    %c0_i32_2 = arith.constant 0 : i32
    return %c0_i32, %c0_i32_0, %c0_i32_1 : i32, i32, i32
  }
  func.func @transform_3(%arg0: i32) -> (i32, i32, i32, i32) {
    %c0_i32 = arith.constant 0 : i32
    %c0_i32_0 = arith.constant 0 : i32
    %c0_i32_1 = arith.constant 0 : i32
    %c0_i32_2 = arith.constant 0 : i32
    %c0_i32_3 = arith.constant 0 : i32
    return %c0_i32, %c0_i32_0, %c0_i32_1, %c0_i32_2 : i32, i32, i32, i32
  }
  func.func @transform_4(%arg0: i32) -> (i32, i32, i32) {
    %c0_i32 = arith.constant 0 : i32
    %c0_i32_0 = arith.constant 0 : i32
    %c0_i32_1 = arith.constant 0 : i32
    %c0_i32_2 = arith.constant 0 : i32
    return %c0_i32, %c0_i32_0, %c0_i32_1 : i32, i32, i32
  }
  func.func @transform_5(%arg0: i32) -> (i32, i32, i32) {
    %c0_i32 = arith.constant 0 : i32
    %c0_i32_0 = arith.constant 0 : i32
    %c0_i32_1 = arith.constant 0 : i32
    %c0_i32_2 = arith.constant 0 : i32
    return %c0_i32, %c0_i32_0, %c0_i32_1 : i32, i32, i32
  }
  func.func @transform_6(%arg0: i32) -> (i32, i32, i32) {
    %c0_i32 = arith.constant 0 : i32
    %c0_i32_0 = arith.constant 0 : i32
    %c0_i32_1 = arith.constant 0 : i32
    %c0_i32_2 = arith.constant 0 : i32
    return %c0_i32, %c0_i32_0, %c0_i32_1 : i32, i32, i32
  }
  func.func @transform_7(%arg0: i32) -> (i32, i32) {
    %c0_i32 = arith.constant 0 : i32
    %c0_i32_0 = arith.constant 0 : i32
    %c0_i32_1 = arith.constant 0 : i32
    return %c0_i32, %c0_i32_0 : i32, i32
  }
  func.func @transform_8(%arg0: i32) -> (i32, i32) {
    %c0_i32 = arith.constant 0 : i32
    %c0_i32_0 = arith.constant 0 : i32
    %c0_i32_1 = arith.constant 0 : i32
    return %c0_i32, %c0_i32_0 : i32, i32
  }
  func.func @transform_9(%arg0: i32) -> (i32, i32) {
    %c0_i32 = arith.constant 0 : i32
    %c0_i32_0 = arith.constant 0 : i32
    return %arg0, %c0_i32 : i32, i32
  }
}

</mosaic_0001>

<llo_original>
// kernel: tpu_custom_call.1
$region0: #{tpu_custom_call.1}
  #allocation0 [shape = 'u32[]', space=smem, size = 0x4, offset = 0x4, fixed_abs, tag = 'smem constant byte address 0x4 - core index']
  #allocation1 [shape = 'u32[144,128]{1,0:T(1,128)}', space=vmem, size = 0x12000, scoped, tag = 'internal scratch']
  %s0 = inlined_call_operand.hbm [shape: f32[16,16,128], index: 0, kind: input, shape index: {}]
  %s1 = inlined_call_operand.hbm [shape: f32[2,3,128,128], index: 1, kind: input, shape index: {}]
  %s2 = inlined_call_operand.vmem [shape: f32[2,1,128], index: 2, kind: input, shape index: {}]
  %s3 = inlined_call_operand.hbm [shape: f32[2,3,128,128], index: 3, kind: input, shape index: {}]
  %s4 = inlined_call_operand.vmem [shape: f32[2,1,128], index: 4, kind: input, shape index: {}]
  %s5 = inlined_call_operand.hbm [shape: f32[1,128,128], index: 5, kind: input, shape index: {}]
  %s6 = inlined_call_operand.vmem [shape: f32[1,1,128], index: 6, kind: input, shape index: {}]
  %s7 = inlined_call_operand.hbm [shape: f32[128,128], index: 7, kind: input, shape index: {}]
  %s8 = inlined_call_operand.vmem [shape: f32[1,128], index: 8, kind: input, shape index: {}]
  %s9 = inlined_call_operand.hbm [shape: f32[16,128], index: 9, kind: output, shape index: {}]
  %s10 = sld [smem:[#allocation0]]
  $region89: #{tpu_custom_call.1} parent=0
    _
  %s12 = ssub.s32 1, %s10
  %s13 = scalar_select 0, %s12, %s10
  $region1: #{tpu_custom_call.1} parent=0
    #allocation2 [shape = 'u8[131072]{0}', space=vmem, size = 0x20000, scoped, tag = 'input window, operand 0']
    #allocation3 [shape = 's32[2]{0}', space=sflag, size = 0x8, scoped, tag = 'scoped memory for tpu_custom_call.1']
    #allocation4 [shape = 's32[2]{0}', space=sflag, size = 0x8, scoped, tag = 'scoped memory for tpu_custom_call.1']
    #allocation5 [shape = 'u8[393216]{0}', space=vmem, size = 0x60000, scoped, tag = 'input window, operand 1, single buffered']
    #allocation6 [shape = 's32[1]{0}', space=sflag, size = 0x4, scoped, tag = 'scoped memory for tpu_custom_call.1']
    #allocation7 [shape = 'u8[393216]{0}', space=vmem, size = 0x60000, scoped, tag = 'input window, operand 3, single buffered']
    #allocation8 [shape = 'u8[65536]{0}', space=vmem, size = 0x10000, scoped, tag = 'input window, operand 5, single buffered']
    #allocation9 [shape = 's32[1]{0}', space=sflag, size = 0x4, scoped, tag = 'scoped memory for tpu_custom_call.1']
    #allocation10 [shape = 'u8[65536]{0}', space=vmem, size = 0x10000, scoped, tag = 'input window, operand 7, single buffered']
    #allocation11 [shape = 'u8[8192]{0}', space=vmem, size = 0x2000, scoped, tag = 'output window, operand 0']
    %14 = vsyncpa [#allocation3], 0
    %s15 = scalar_lea.sflag [#allocation3], 1
    %16 = vsyncpa %s15, 0
    %17 = vsyncpa [#allocation6], 0
    %18 = vsyncpa [#allocation9], 0
    %19 = vsyncpa [#allocation4], 0
    %s20 = scalar_lea.sflag [#allocation4], 1
    %21 = vsyncpa %s20, 0
    loop: start=0, step=1, limit=4
    $region2: #{tpu_custom_call.1} parent=1 // loop_pre_header
      _
    $region3: #{tpu_custom_call.1} parent=1 // loop_header
      %s23 = sphi 0, %s27
      %p24 = scmp.ge.s32.totalorder %s23, 4
      %s33 = sphi 0, %s35
      %s36 = sphi 0, %s33
      %s37 = sphi 0, %s36
      %s53 = sphi 0, %s37
      %s57 = sphi 0, %s57
      %s59 = sphi 0, %s57
      %s60 = sphi 0, %s59
      %s74 = sphi 0, %s60
      %s78 = sphi 0, %s78
      %s80 = sphi 0, %s78
      %s81 = sphi 0, %s80
      %s95 = sphi 0, %s81
      %s99 = sphi 0, %s99
      %s101 = sphi 0, %s99
      %s102 = sphi 0, %s101
      %s116 = sphi 0, %s102
      %s120 = sphi 0, %s120
      %s122 = sphi 0, %s120
      %s123 = sphi 0, %s122
      %s137 = sphi 0, %s123
      %s141 = sphi 0, %s141
      %s143 = sphi 0, %s141
      %s144 = sphi 0, %s143
      %s158 = sphi 0, %s144
      %s162 = sphi 0, %s162
      %s164 = sphi 0, %s162
      %s165 = sphi 0, %s164
      %s179 = sphi 0, %s165
      %s183 = sphi 0, %s183
      %s185 = sphi 0, %s183
      %s186 = sphi 0, %s185
      %s200 = sphi 0, %s186
      %s204 = sphi 0, %s204
      %s206 = sphi 0, %s204
      %s207 = sphi 0, %s206
      %s221 = sphi 0, %s207
      %s227 = sphi 0, %s229
      %s230 = sphi 0, %s227
      %s231 = sphi 0, %s230
      %s247 = sphi 0, %s231
    $region4: #{tpu_custom_call.1} parent=1 // loop_header_branch
      %26 = sbr.rel (%p24) target = $region8
    $region5: #{tpu_custom_call.1} parent=1 // loop_body
      %s28 = ssub.s32 %s23, 1
      %s29 = ssub.s32 %s23, 2
      %s30 = sadd.s32 %s23, 1
      %s31 = ssub.s32 %s23, %s30
      %p32 = scmp.eq.s32.totalorder %s31, 0
      %s34 = sadd.s32 %s33, 1
      %s35 = scalar_select %p32, %s33, %s34
      %p38 = pneg %p32
      %p39 = scmp.eq.s32.totalorder %s23, 1
      %p40 = por %p38, %p39
      %p41 = scmp.ne.s32.totalorder %s33, %s36
      %p42 = scmp.eq.s32.totalorder %s23, 0
      %p43 = por %p41, %p42
      %p44 = scmp.ne.s32.totalorder %s33, %s36
      %p45 = scmp.eq.s32.totalorder %s28, 1
      %p46 = por %p44, %p45
      %p47 = scmp.ne.s32.totalorder %s36, %s37
      %p48 = scmp.eq.s32.totalorder %s28, 0
      %p49 = por %p47, %p48
      %p50 = scmp.ne.s32.totalorder %s36, %s37
      %p51 = scmp.eq.s32.totalorder %s29, 1
      %p52 = por %p50, %p51
      %p54 = scmp.ne.s32.totalorder %s37, %s53
      %p55 = scmp.eq.s32.totalorder %s29, 0
      %p56 = por %p54, %p55
      %s58 = sadd.s32 %s57, 1
      %p61 = scmp.eq.s32.totalorder %s23, 1
      %p62 = scmp.ne.s32.totalorder %s57, %s59
      %p63 = scmp.eq.s32.totalorder %s23, 0
      %p64 = por %p62, %p63
      %p65 = scmp.ne.s32.totalorder %s57, %s59
      %p66 = scmp.eq.s32.totalorder %s28, 1
      %p67 = por %p65, %p66
      %p68 = scmp.ne.s32.totalorder %s59, %s60
      %p69 = scmp.eq.s32.totalorder %s28, 0
      %p70 = por %p68, %p69
      %p71 = scmp.ne.s32.totalorder %s59, %s60
      %p72 = scmp.eq.s32.totalorder %s29, 1
      %p73 = por %p71, %p72
      %p75 = scmp.ne.s32.totalorder %s60, %s74
      %p76 = scmp.eq.s32.totalorder %s29, 0
      %p77 = por %p75, %p76
      %s79 = sadd.s32 %s78, 1
      %p82 = scmp.eq.s32.totalorder %s23, 1
      %p83 = scmp.ne.s32.totalorder %s78, %s80
      %p84 = scmp.eq.s32.totalorder %s23, 0
      %p85 = por %p83, %p84
      %p86 = scmp.ne.s32.totalorder %s78, %s80
      %p87 = scmp.eq.s32.totalorder %s28, 1
      %p88 = por %p86, %p87
      %p89 = scmp.ne.s32.totalorder %s80, %s81
      %p90 = scmp.eq.s32.totalorder %s28, 0
      %p91 = por %p89, %p90
      %p92 = scmp.ne.s32.totalorder %s80, %s81
      %p93 = scmp.eq.s32.totalorder %s29, 1
      %p94 = por %p92, %p93
      %p96 = scmp.ne.s32.totalorder %s81, %s95
      %p97 = scmp.eq.s32.totalorder %s29, 0
      %p98 = por %p96, %p97
      %s100 = sadd.s32 %s99, 1
      %p103 = scmp.eq.s32.totalorder %s23, 1
      %p104 = scmp.ne.s32.totalorder %s99, %s101
      %p105 = scmp.eq.s32.totalorder %s23, 0
      %p106 = por %p104, %p105
      %p107 = scmp.ne.s32.totalorder %s99, %s101
      %p108 = scmp.eq.s32.totalorder %s28, 1
      %p109 = por %p107, %p108
      %p110 = scmp.ne.s32.totalorder %s101, %s102
      %p111 = scmp.eq.s32.totalorder %s28, 0
      %p112 = por %p110, %p111
      %p113 = scmp.ne.s32.totalorder %s101, %s102
      %p114 = scmp.eq.s32.totalorder %s29, 1
      %p115 = por %p113, %p114
      %p117 = scmp.ne.s32.totalorder %s102, %s116
      %p118 = scmp.eq.s32.totalorder %s29, 0
      %p119 = por %p117, %p118
      %s121 = sadd.s32 %s120, 1
      %p124 = scmp.eq.s32.totalorder %s23, 1
      %p125 = scmp.ne.s32.totalorder %s120, %s122
      %p126 = scmp.eq.s32.totalorder %s23, 0
      %p127 = por %p125, %p126
      %p128 = scmp.ne.s32.totalorder %s120, %s122
      %p129 = scmp.eq.s32.totalorder %s28, 1
      %p130 = por %p128, %p129
      %p131 = scmp.ne.s32.totalorder %s122, %s123
      %p132 = scmp.eq.s32.totalorder %s28, 0
      %p133 = por %p131, %p132
      %p134 = scmp.ne.s32.totalorder %s122, %s123
      %p135 = scmp.eq.s32.totalorder %s29, 1
      %p136 = por %p134, %p135
      %p138 = scmp.ne.s32.totalorder %s123, %s137
      %p139 = scmp.eq.s32.totalorder %s29, 0
      %p140 = por %p138, %p139
      %s142 = sadd.s32 %s141, 1
      %p145 = scmp.eq.s32.totalorder %s23, 1
      %p146 = scmp.ne.s32.totalorder %s141, %s143
      %p147 = scmp.eq.s32.totalorder %s23, 0
      %p148 = por %p146, %p147
      %p149 = scmp.ne.s32.totalorder %s141, %s143
      %p150 = scmp.eq.s32.totalorder %s28, 1
      %p151 = por %p149, %p150
      %p152 = scmp.ne.s32.totalorder %s143, %s144
      %p153 = scmp.eq.s32.totalorder %s28, 0
      %p154 = por %p152, %p153
      %p155 = scmp.ne.s32.totalorder %s143, %s144
      %p156 = scmp.eq.s32.totalorder %s29, 1
      %p157 = por %p155, %p156
      %p159 = scmp.ne.s32.totalorder %s144, %s158
      %p160 = scmp.eq.s32.totalorder %s29, 0
      %p161 = por %p159, %p160
      %s163 = sadd.s32 %s162, 1
      %p166 = scmp.eq.s32.totalorder %s23, 1
      %p167 = scmp.ne.s32.totalorder %s162, %s164
      %p168 = scmp.eq.s32.totalorder %s23, 0
      %p169 = por %p167, %p168
      %p170 = scmp.ne.s32.totalorder %s162, %s164
      %p171 = scmp.eq.s32.totalorder %s28, 1
      %p172 = por %p170, %p171
      %p173 = scmp.ne.s32.totalorder %s164, %s165
      %p174 = scmp.eq.s32.totalorder %s28, 0
      %p175 = por %p173, %p174
      %p176 = scmp.ne.s32.totalorder %s164, %s165
      %p177 = scmp.eq.s32.totalorder %s29, 1
      %p178 = por %p176, %p177
      %p180 = scmp.ne.s32.totalorder %s165, %s179
      %p181 = scmp.eq.s32.totalorder %s29, 0
      %p182 = por %p180, %p181
      %s184 = sadd.s32 %s183, 1
      %p187 = scmp.eq.s32.totalorder %s23, 1
      %p188 = scmp.ne.s32.totalorder %s183, %s185
      %p189 = scmp.eq.s32.totalorder %s23, 0
      %p190 = por %p188, %p189
      %p191 = scmp.ne.s32.totalorder %s183, %s185
      %p192 = scmp.eq.s32.totalorder %s28, 1
      %p193 = por %p191, %p192
      %p194 = scmp.ne.s32.totalorder %s185, %s186
      %p195 = scmp.eq.s32.totalorder %s28, 0
      %p196 = por %p194, %p195
      %p197 = scmp.ne.s32.totalorder %s185, %s186
      %p198 = scmp.eq.s32.totalorder %s29, 1
      %p199 = por %p197, %p198
      %p201 = scmp.ne.s32.totalorder %s186, %s200
      %p202 = scmp.eq.s32.totalorder %s29, 0
      %p203 = por %p201, %p202
      %s205 = sadd.s32 %s204, 1
      %p208 = scmp.eq.s32.totalorder %s23, 1
      %p209 = scmp.ne.s32.totalorder %s204, %s206
      %p210 = scmp.eq.s32.totalorder %s23, 0
      %p211 = por %p209, %p210
      %p212 = scmp.ne.s32.totalorder %s204, %s206
      %p213 = scmp.eq.s32.totalorder %s28, 1
      %p214 = por %p212, %p213
      %p215 = scmp.ne.s32.totalorder %s206, %s207
      %p216 = scmp.eq.s32.totalorder %s28, 0
      %p217 = por %p215, %p216
      %p218 = scmp.ne.s32.totalorder %s206, %s207
      %p219 = scmp.eq.s32.totalorder %s29, 1
      %p220 = por %p218, %p219
      %p222 = scmp.ne.s32.totalorder %s207, %s221
      %p223 = scmp.eq.s32.totalorder %s29, 0
      %p224 = por %p222, %p223
      %s225 = ssub.s32 %s23, %s30
      %p226 = scmp.eq.s32.totalorder %s225, 0
      %s228 = sadd.s32 %s227, 1
      %s229 = scalar_select %p226, %s227, %s228
      %p232 = pneg %p226
      %p233 = scmp.eq.s32.totalorder %s23, 1
      %p234 = por %p232, %p233
      %p235 = scmp.ne.s32.totalorder %s227, %s230
      %p236 = scmp.eq.s32.totalorder %s23, 0
      %p237 = por %p235, %p236
      %p238 = scmp.ne.s32.totalorder %s227, %s230
      %p239 = scmp.eq.s32.totalorder %s28, 1
      %p240 = por %p238, %p239
      %p241 = scmp.ne.s32.totalorder %s230, %s231
      %p242 = scmp.eq.s32.totalorder %s28, 0
      %p243 = por %p241, %p242
      %p244 = scmp.ne.s32.totalorder %s230, %s231
      %p245 = scmp.eq.s32.totalorder %s29, 1
      %p246 = por %p244, %p245
      %p248 = scmp.ne.s32.totalorder %s231, %s247
      %p249 = scmp.eq.s32.totalorder %s29, 0
      %p250 = por %p248, %p249
      %p251 = scmp.le.s32.totalorder 1, %s23
      %p252 = scmp.lt.s32.totalorder %s23, 3
      %p253 = pnand %p251, %p252
      %p254 = pneg %p253
      // Predicated region
      $region9: #{tpu_custom_call.1} parent=5 // pred_check
        _
      $region10: #{tpu_custom_call.1} parent=5 // pred_check_branch
        %256 = sbr.rel (%p253) target = $region12
      $region11: #{tpu_custom_call.1} parent=5 // pred_region
        %s257 = ssub.s32 %s23, 1
        // Predicated region
        $region13: #{tpu_custom_call.1} parent=11 // pred_check
          %p258 = pneg %p70
        $region14: #{tpu_custom_call.1} parent=11 // pred_check_branch
          %260 = sbr.rel (%p258) target = $region16
        $region15: #{tpu_custom_call.1} parent=11 // pred_region
          %s262 = ssub.s32 12288, 12288
          %263 = vsyncadd [#allocation6], %s262
          %s264 = sshll.u32 [#allocation5], 4
          %s265 = int_to_ptr.vmem [resolvable:$true] %s264
          %270 = dma.hbm_to_vmem [thread:$0]  %s1, 12288, %s265, [#allocation6], 128, 128, 8
        $region16: #{tpu_custom_call.1} parent=11 // pred_fallthru
          _
        // Predicated region
        $region17: #{tpu_custom_call.1} parent=11 // pred_check
          %p271 = pneg %p91
        $region18: #{tpu_custom_call.1} parent=11 // pred_check_branch
          %273 = sbr.rel (%p271) target = $region20
        $region19: #{tpu_custom_call.1} parent=11 // pred_region
          _
        $region20: #{tpu_custom_call.1} parent=11 // pred_fallthru
          _
        // Predicated region
        $region21: #{tpu_custom_call.1} parent=11 // pred_check
          %p274 = pneg %p112
        $region22: #{tpu_custom_call.1} parent=11 // pred_check_branch
          %276 = sbr.rel (%p274) target = $region24
        $region23: #{tpu_custom_call.1} parent=11 // pred_region
          %s278 = ssub.s32 12288, 12288
          %279 = vsyncadd [#allocation6], %s278
          %s280 = sshll.u32 [#allocation7], 4
          %s281 = int_to_ptr.vmem [resolvable:$true] %s280
          %286 = dma.hbm_to_vmem [thread:$0]  %s3, 12288, %s281, [#allocation6], 128, 128, 8
        $region24: #{tpu_custom_call.1} parent=11 // pred_fallthru
          _
        // Predicated region
        $region25: #{tpu_custom_call.1} parent=11 // pred_check
          %p287 = pneg %p133
        $region26: #{tpu_custom_call.1} parent=11 // pred_check_branch
          %289 = sbr.rel (%p287) target = $region28
        $region27: #{tpu_custom_call.1} parent=11 // pred_region
          _
        $region28: #{tpu_custom_call.1} parent=11 // pred_fallthru
          _
        // Predicated region
        $region29: #{tpu_custom_call.1} parent=11 // pred_check
          %p290 = pneg %p154
        $region30: #{tpu_custom_call.1} parent=11 // pred_check_branch
          %292 = sbr.rel (%p290) target = $region32
        $region31: #{tpu_custom_call.1} parent=11 // pred_region
          %s294 = ssub.s32 2048, 2048
          %295 = vsyncadd [#allocation9], %s294
          %s296 = sshll.u32 [#allocation8], 4
          %s297 = int_to_ptr.vmem [resolvable:$true] %s296
          %302 = dma.hbm_to_vmem [thread:$0]  %s5, 2048, %s297, [#allocation9], 128, 128, 8
        $region32: #{tpu_custom_call.1} parent=11 // pred_fallthru
          _
        // Predicated region
        $region33: #{tpu_custom_call.1} parent=11 // pred_check
          %p303 = pneg %p175
        $region34: #{tpu_custom_call.1} parent=11 // pred_check_branch
          %305 = sbr.rel (%p303) target = $region36
        $region35: #{tpu_custom_call.1} parent=11 // pred_region
          _
        $region36: #{tpu_custom_call.1} parent=11 // pred_fallthru
          _
        // Predicated region
        $region37: #{tpu_custom_call.1} parent=11 // pred_check
          %p306 = pneg %p196
        $region38: #{tpu_custom_call.1} parent=11 // pred_check_branch
          %308 = sbr.rel (%p306) target = $region40
        $region39: #{tpu_custom_call.1} parent=11 // pred_region
          %s310 = ssub.s32 2048, 2048
          %311 = vsyncadd [#allocation9], %s310
          %s312 = sshll.u32 [#allocation10], 4
          %s313 = int_to_ptr.vmem [resolvable:$true] %s312
          %318 = dma.hbm_to_vmem [thread:$0]  %s7, 2048, %s313, [#allocation9], 128, 128, 8
        $region40: #{tpu_custom_call.1} parent=11 // pred_fallthru
          _
        // Predicated region
        $region41: #{tpu_custom_call.1} parent=11 // pred_check
          %p319 = pneg %p217
        $region42: #{tpu_custom_call.1} parent=11 // pred_check_branch
          %321 = sbr.rel (%p319) target = $region44
        $region43: #{tpu_custom_call.1} parent=11 // pred_region
          _
        $region44: #{tpu_custom_call.1} parent=11 // pred_fallthru
          _
      $region12: #{tpu_custom_call.1} parent=5 // pred_fallthru
        _
      %p322 = scmp.lt.s32.totalorder %s23, 2
      // Predicated region
      $region45: #{tpu_custom_call.1} parent=5 // pred_check
        %p323 = pneg %p322
      $region46: #{tpu_custom_call.1} parent=5 // pred_check_branch
        %325 = sbr.rel (%p323) target = $region48
      $region47: #{tpu_custom_call.1} parent=5 // pred_region
        // Predicated region
        $region49: #{tpu_custom_call.1} parent=47 // pred_check
          %p326 = pneg %p43
        $region50: #{tpu_custom_call.1} parent=47 // pred_check_branch
          %328 = sbr.rel (%p326) target = $region52
        $region51: #{tpu_custom_call.1} parent=47 // pred_region
          %s329 = sand.u32 %s33, 1
          %s330 = scalar_lea.sflag [#allocation3], %s329
          %s331 = sand.u32 %s33, 1
          %s332 = smul.addr %s331, 128
          %s333 = scalar_lea.vmem [#allocation2], %s332
          %s334 = smul.u32 8, %s23
          %s336 = ssub.s32 2048, 2048
          %337 = vsyncadd %s330, %s336
          %s338 = smul.addr %s334, 2
          %s339 = smul.addr %s338, 128
          %s340 = scalar_lea.hbm %s0, %s339
          %s341 = sshll.u32 %s333, 4
          %s342 = int_to_ptr.vmem [resolvable:$true] %s341
          %347 = dma.hbm_to_vmem [thread:$0]  %s340, 2048, %s342, %s330, 128, 128, 8
        $region52: #{tpu_custom_call.1} parent=47 // pred_fallthru
          _
      $region48: #{tpu_custom_call.1} parent=5 // pred_fallthru
        _
      %p348 = scmp.le.s32.totalorder 1, %s23
      %p349 = scmp.lt.s32.totalorder %s23, 3
      %p350 = pnand %p348, %p349
      %p351 = pneg %p350
      // Predicated region
      $region53: #{tpu_custom_call.1} parent=5 // pred_check
        _
      $region54: #{tpu_custom_call.1} parent=5 // pred_check_branch
        %353 = sbr.rel (%p350) target = $region56
      $region55: #{tpu_custom_call.1} parent=5 // pred_region
        %s354 = ssub.s32 %s23, 1
        %s355 = sand.u32 %s36, 1
        %s356 = scalar_lea.sflag [#allocation3], %s355
        %s357 = sand.u32 %s36, 1
        %s358 = smul.addr %s357, 128
        %s359 = scalar_lea.vmem [#allocation2], %s358
        // Predicated region
        $region57: #{tpu_custom_call.1} parent=55 // pred_check
          %p360 = pneg %p49
        $region58: #{tpu_custom_call.1} parent=55 // pred_check_branch
          %362 = sbr.rel (%p360) target = $region60
        $region59: #{tpu_custom_call.1} parent=55 // pred_region
          %363 = dma.done %s356, 2048
        $region60: #{tpu_custom_call.1} parent=55 // pred_fallthru
          _
        // Predicated region
        $region61: #{tpu_custom_call.1} parent=55 // pred_check
          %p364 = pneg %p70
        $region62: #{tpu_custom_call.1} parent=55 // pred_check_branch
          %366 = sbr.rel (%p364) target = $region64
        $region63: #{tpu_custom_call.1} parent=55 // pred_region
          %367 = dma.done [#allocation6], 12288
        $region64: #{tpu_custom_call.1} parent=55 // pred_fallthru
          _
        // Predicated region
        $region65: #{tpu_custom_call.1} parent=55 // pred_check
          %p368 = pneg %p112
        $region66: #{tpu_custom_call.1} parent=55 // pred_check_branch
          %370 = sbr.rel (%p368) target = $region68
        $region67: #{tpu_custom_call.1} parent=55 // pred_region
          %371 = dma.done [#allocation6], 12288
        $region68: #{tpu_custom_call.1} parent=55 // pred_fallthru
          _
        // Predicated region
        $region69: #{tpu_custom_call.1} parent=55 // pred_check
          %p372 = pneg %p154
        $region70: #{tpu_custom_call.1} parent=55 // pred_check_branch
          %374 = sbr.rel (%p372) target = $region72
        $region71: #{tpu_custom_call.1} parent=55 // pred_region
          %375 = dma.done [#allocation9], 2048
        $region72: #{tpu_custom_call.1} parent=55 // pred_fallthru
          _
        // Predicated region
        $region73: #{tpu_custom_call.1} parent=55 // pred_check
          %p376 = pneg %p196
        $region74: #{tpu_custom_call.1} parent=55 // pred_check_branch
          %378 = sbr.rel (%p376) target = $region76
        $region75: #{tpu_custom_call.1} parent=55 // pred_region
          %379 = dma.done [#allocation9], 2048
        $region76: #{tpu_custom_call.1} parent=55 // pred_fallthru
          _
        %s380 = sand.u32 %s36, 1
        %s381 = scalar_lea.sflag [#allocation3], %s380
        %s382 = sand.u32 %s36, 1
        %s383 = smul.addr %s382, 128
        %s384 = scalar_lea.vmem [#allocation2], %s383
        %p385 = pneg %p49
        %p386 = pneg %p46
        %p387 = pneg %p70
        %p388 = pneg %p67
        %p389 = pneg %p91
        %p390 = pneg %p88
        %p391 = pneg %p112
        %p392 = pneg %p109
        %p393 = pneg %p133
        %p394 = pneg %p130
        %p395 = pneg %p154
        %p396 = pneg %p151
        %p397 = pneg %p175
        %p398 = pneg %p172
        %p399 = pneg %p196
        %p400 = pneg %p193
        %p401 = pneg %p217
        %p402 = pneg %p214
        %p403 = pneg %p243
        %p404 = pneg %p240
        %s405 = sand.u32 %s230, 1
        %s406 = scalar_lea.sflag [#allocation4], %s405
        %s407 = sand.u32 %s230, 1
        %s408 = smul.addr %s407, 8
        %s409 = scalar_lea.vmem [#allocation11], %s408
        %s410 = smul.u32 8, %s28
        %v411 = vld [vmem:[%s359] sm:$0xff]
        %v412 = vld [vmem:[%s359 + $0x8] sm:$0xff]
        %v413 = vld [vmem:[%s359 + $0x10] sm:$0xff]
        %v414 = vld [vmem:[%s359 + $0x18] sm:$0xff]
        %v415 = vld [vmem:[%s359 + $0x20] sm:$0xff]
        %v416 = vld [vmem:[%s359 + $0x28] sm:$0xff]
        %v417 = vld [vmem:[%s359 + $0x30] sm:$0xff]
        %v418 = vld [vmem:[%s359 + $0x38] sm:$0xff]
        %v419 = vld [vmem:[%s359 + $0x40] sm:$0xff]
        %v420 = vld [vmem:[%s359 + $0x48] sm:$0xff]
        %v421 = vld [vmem:[%s359 + $0x50] sm:$0xff]
        %v422 = vld [vmem:[%s359 + $0x58] sm:$0xff]
        %v423 = vld [vmem:[%s359 + $0x60] sm:$0xff]
        %v424 = vld [vmem:[%s359 + $0x68] sm:$0xff]
        %v425 = vld [vmem:[%s359 + $0x70] sm:$0xff]
        %v426 = vld [vmem:[%s359 + $0x78] sm:$0xff]
        %v427 = vld [vmem:[%s2] sm:$0x1]
        %vm444 = vcmask 1041408
        %v445 = vrot.slane %v411, 6
        %v446 = vrot.slane %v412, 6
        %v447 = vsel %vm444, %v445, %v446
        %v448 = vrot.slane %v413, 6
        %v449 = vrot.slane %v414, 6
        %v450 = vsel %vm444, %v448, %v449
        %v451 = vrot.slane %v415, 6
        %v452 = vrot.slane %v416, 6
        %v453 = vsel %vm444, %v451, %v452
        %v454 = vrot.slane %v417, 6
        %v455 = vrot.slane %v418, 6
        %v456 = vsel %vm444, %v454, %v455
        %v457 = vrot.slane %v419, 6
        %v458 = vrot.slane %v420, 6
        %v459 = vsel %vm444, %v457, %v458
        %v460 = vrot.slane %v421, 6
        %v461 = vrot.slane %v422, 6
        %v462 = vsel %vm444, %v460, %v461
        %v463 = vrot.slane %v423, 6
        %v464 = vrot.slane %v424, 6
        %v465 = vsel %vm444, %v463, %v464
        %v466 = vrot.slane %v425, 6
        %v467 = vrot.slane %v426, 6
        %v468 = vsel %vm444, %v466, %v467
        %v485 = vsel %vm444, 0.0, %v445
        %v486 = vsel %vm444, 0.0, %v448
        %v487 = vsel %vm444, 0.0, %v451
        %v488 = vsel %vm444, 0.0, %v454
        %v489 = vsel %vm444, 0.0, %v457
        %v490 = vsel %vm444, 0.0, %v460
        %v491 = vsel %vm444, 0.0, %v463
        %v492 = vsel %vm444, 0.0, %v466
        %v493 = vld [vmem:[#allocation5] sm:$0xff]
        %v494 = vld [vmem:[#allocation5 + $0x8] sm:$0xff]
        %v495 = vld [vmem:[#allocation5 + $0x10] sm:$0xff]
        %v496 = vld [vmem:[#allocation5 + $0x18] sm:$0xff]
        %v497 = vld [vmem:[#allocation5 + $0x20] sm:$0xff]
        %v498 = vld [vmem:[#allocation5 + $0x28] sm:$0xff]
        %v499 = vld [vmem:[#allocation5 + $0x30] sm:$0xff]
        %v500 = vld [vmem:[#allocation5 + $0x38] sm:$0xff]
        %v501 = vld [vmem:[#allocation5 + $0x40] sm:$0xff]
        %v502 = vld [vmem:[#allocation5 + $0x48] sm:$0xff]
        %v503 = vld [vmem:[#allocation5 + $0x50] sm:$0xff]
        %v504 = vld [vmem:[#allocation5 + $0x58] sm:$0xff]
        %v505 = vld [vmem:[#allocation5 + $0x60] sm:$0xff]
        %v506 = vld [vmem:[#allocation5 + $0x68] sm:$0xff]
        %v507 = vld [vmem:[#allocation5 + $0x70] sm:$0xff]
        %v508 = vld [vmem:[#allocation5 + $0x78] sm:$0xff]
        %vm517 = vcmask 1046528
        %v518 = vrot.slane %v485, 1
        %v519 = vrot.slane %v447, 1
        %v520 = vsel %vm517, %v518, %v519
        %v521 = vrot.slane %v446, 1
        %v522 = vsel %vm517, %v519, %v521
        %v523 = vrot.slane %v486, 1
        %v524 = vrot.slane %v450, 1
        %v525 = vsel %vm517, %v523, %v524
        %v526 = vrot.slane %v449, 1
        %v527 = vsel %vm517, %v524, %v526
        %v528 = vrot.slane %v487, 1
        %v529 = vrot.slane %v453, 1
        %v530 = vsel %vm517, %v528, %v529
        %v531 = vrot.slane %v452, 1
        %v532 = vsel %vm517, %v529, %v531
        %v533 = vrot.slane %v488, 1
        %v534 = vrot.slane %v456, 1
        %v535 = vsel %vm517, %v533, %v534
        %v536 = vrot.slane %v455, 1
        %v537 = vsel %vm517, %v534, %v536
        %v538 = vrot.slane %v489, 1
        %v539 = vrot.slane %v459, 1
        %v540 = vsel %vm517, %v538, %v539
        %v541 = vrot.slane %v458, 1
        %v542 = vsel %vm517, %v539, %v541
        %v543 = vrot.slane %v490, 1
        %v544 = vrot.slane %v462, 1
        %v545 = vsel %vm517, %v543, %v544
        %v546 = vrot.slane %v461, 1
        %v547 = vsel %vm517, %v544, %v546
        %v548 = vrot.slane %v491, 1
        %v549 = vrot.slane %v465, 1
        %v550 = vsel %vm517, %v548, %v549
        %v551 = vrot.slane %v464, 1
        %v552 = vsel %vm517, %v549, %v551
        %v553 = vrot.slane %v492, 1
        %v554 = vrot.slane %v468, 1
        %v555 = vsel %vm517, %v553, %v554
        %v556 = vrot.slane %v467, 1
        %v557 = vsel %vm517, %v554, %v556
        %s574 = scalar_lea.vmem [#allocation5], 128
        %v575 = vld [vmem:[%s574] sm:$0xff]
        %v576 = vld [vmem:[%s574 + $0x8] sm:$0xff]
        %v577 = vld [vmem:[%s574 + $0x10] sm:$0xff]
        %v578 = vld [vmem:[%s574 + $0x18] sm:$0xff]
        %v579 = vld [vmem:[%s574 + $0x20] sm:$0xff]
        %v580 = vld [vmem:[%s574 + $0x28] sm:$0xff]
        %v581 = vld [vmem:[%s574 + $0x30] sm:$0xff]
        %v582 = vld [vmem:[%s574 + $0x38] sm:$0xff]
        %v583 = vld [vmem:[%s574 + $0x40] sm:$0xff]
        %v584 = vld [vmem:[%s574 + $0x48] sm:$0xff]
        %v585 = vld [vmem:[%s574 + $0x50] sm:$0xff]
        %v586 = vld [vmem:[%s574 + $0x58] sm:$0xff]
        %v587 = vld [vmem:[%s574 + $0x60] sm:$0xff]
        %v588 = vld [vmem:[%s574 + $0x68] sm:$0xff]
        %v589 = vld [vmem:[%s574 + $0x70] sm:$0xff]
        %v590 = vld [vmem:[%s574 + $0x78] sm:$0xff]
        %591 = vmatprep.subr.mxu0 0.0
        %592 = vmatpush1.msra.mxu0 %v590
        %593 = vmatprep.subr.mxu0 0.0
        %594 = vmatpush1.msra.mxu0 %v589
        %595 = vmatprep.subr.mxu0 0.0
        %596 = vmatpush1.msra.mxu0 %v588
        %597 = vmatprep.subr.mxu0 0.0
        %598 = vmatpush1.msra.mxu0 %v587
        %599 = vmatprep.subr.mxu0 0.0
        %600 = vmatpush1.msra.mxu0 %v586
        %601 = vmatprep.subr.mxu0 0.0
        %602 = vmatpush1.msra.mxu0 %v585
        %603 = vmatprep.subr.mxu0 0.0
        %604 = vmatpush1.msra.mxu0 %v584
        %605 = vmatprep.subr.mxu0 0.0
        %606 = vmatpush1.msra.mxu0 %v583
        %607 = vmatprep.subr.mxu0 0.0
        %608 = vmatpush1.msra.mxu0 %v582
        %609 = vmatprep.subr.mxu0 0.0
        %610 = vmatpush1.msra.mxu0 %v581
        %611 = vmatprep.subr.mxu0 0.0
        %612 = vmatpush1.msra.mxu0 %v580
        %613 = vmatprep.subr.mxu0 0.0
        %614 = vmatpush1.msra.mxu0 %v579
        %615 = vmatprep.subr.mxu0 0.0
        %616 = vmatpush1.msra.mxu0 %v578
        %617 = vmatprep.subr.mxu0 0.0
        %618 = vmatpush1.msra.mxu0 %v577
        %619 = vmatprep.subr.mxu0 0.0
        %620 = vmatpush1.msra.mxu0 %v576
        %621 = vmatprep.subr.mxu0 0.0
        %622 = vmatpush1.msra.mxu0 %v575
        %623 = vmatprep.subr.mxu0 0.0
        %624 = vmatpush2.msra.mxu0 0.0
        %625 = vmatprep.subr.mxu0 0.0
        %626 = vmatpush2.msra.mxu0 0.0
        %627 = vmatprep.subr.mxu0 0.0
        %628 = vmatpush2.msra.mxu0 0.0
        %629 = vmatprep.subr.mxu0 0.0
        %630 = vmatpush2.msra.mxu0 0.0
        %631 = vmatprep.subr.mxu0 0.0
        %632 = vmatpush2.msra.mxu0 0.0
        %633 = vmatprep.subr.mxu0 0.0
        %634 = vmatpush2.msra.mxu0 0.0
        %635 = vmatprep.subr.mxu0 0.0
        %636 = vmatpush2.msra.mxu0 0.0
        %637 = vmatprep.subr.mxu0 0.0
        %638 = vmatpush2.msra.mxu0 0.0
        %639 = vmatprep.subr.mxu0 0.0
        %640 = vmatpush2.msra.mxu0 0.0
        %641 = vmatprep.subr.mxu0 0.0
        %642 = vmatpush2.msra.mxu0 0.0
        %643 = vmatprep.subr.mxu0 0.0
        %644 = vmatpush2.msra.mxu0 0.0
        %645 = vmatprep.subr.mxu0 0.0
        %646 = vmatpush2.msra.mxu0 0.0
        %647 = vmatprep.subr.mxu0 0.0
        %648 = vmatpush2.msra.mxu0 0.0
        %649 = vmatprep.subr.mxu0 0.0
        %650 = vmatpush2.msra.mxu0 0.0
        %651 = vmatprep.subr.mxu0 0.0
        %652 = vmatpush2.msra.mxu0 0.0
        %653 = vmatprep.subr.mxu0 0.0
        %654 = vmatpush2.msra.mxu0 0.0
        %655 = vmatprep.mubr.f32.mxu0 0.0
        %656 = vmatmul.mubr.f32.gmra.mxu0 %v520
        %v657 = vpop.f32.mrf.mxu0
        %v658 = vadd.f32 0.0, %v657
        %v659 = vpop.f32.mrf.mxu0
        %660 = vmatprep.mubr.f32.mxu0 0.0
        %661 = vmatmul.mubr.f32.gmra.mxu0 %v522
        %v662 = vpop.f32.mrf.mxu0
        %v663 = vadd.f32 0.0, %v662
        %v664 = vpop.f32.mrf.mxu0
        %665 = vmatprep.mubr.f32.mxu0 0.0
        %666 = vmatmul.mubr.f32.gmra.mxu0 %v525
        %v667 = vpop.f32.mrf.mxu0
        %v668 = vadd.f32 0.0, %v667
        %v669 = vpop.f32.mrf.mxu0
        %670 = vmatprep.mubr.f32.mxu0 0.0
        %671 = vmatmul.mubr.f32.gmra.mxu0 %v527
        %v672 = vpop.f32.mrf.mxu0
        %v673 = vadd.f32 0.0, %v672
        %v674 = vpop.f32.mrf.mxu0
        %675 = vmatprep.mubr.f32.mxu0 0.0
        %676 = vmatmul.mubr.f32.gmra.mxu0 %v530
        %v677 = vpop.f32.mrf.mxu0
        %v678 = vadd.f32 0.0, %v677
        %v679 = vpop.f32.mrf.mxu0
        %680 = vmatprep.mubr.f32.mxu0 0.0
        %681 = vmatmul.mubr.f32.gmra.mxu0 %v532
        %v682 = vpop.f32.mrf.mxu0
        %v683 = vadd.f32 0.0, %v682
        %v684 = vpop.f32.mrf.mxu0
        %685 = vmatprep.mubr.f32.mxu0 0.0
        %686 = vmatmul.mubr.f32.gmra.mxu0 %v535
        %v687 = vpop.f32.mrf.mxu0
        %v688 = vadd.f32 0.0, %v687
        %v689 = vpop.f32.mrf.mxu0
        %690 = vmatprep.mubr.f32.mxu0 0.0
        %691 = vmatmul.mubr.f32.gmra.mxu0 %v537
        %v692 = vpop.f32.mrf.mxu0
        %v693 = vadd.f32 0.0, %v692
        %v694 = vpop.f32.mrf.mxu0
        %695 = vmatprep.mubr.f32.mxu0 0.0
        %696 = vmatmul.mubr.f32.gmra.mxu0 %v540
        %v697 = vpop.f32.mrf.mxu0
        %v698 = vadd.f32 0.0, %v697
        %v699 = vpop.f32.mrf.mxu0
        %700 = vmatprep.mubr.f32.mxu0 0.0
        %701 = vmatmul.mubr.f32.gmra.mxu0 %v542
        %v702 = vpop.f32.mrf.mxu0
        %v703 = vadd.f32 0.0, %v702
        %v704 = vpop.f32.mrf.mxu0
        %705 = vmatprep.mubr.f32.mxu0 0.0
        %706 = vmatmul.mubr.f32.gmra.mxu0 %v545
        %v707 = vpop.f32.mrf.mxu0
        %v708 = vadd.f32 0.0, %v707
        %v709 = vpop.f32.mrf.mxu0
        %710 = vmatprep.mubr.f32.mxu0 0.0
        %711 = vmatmul.mubr.f32.gmra.mxu0 %v547
        %v712 = vpop.f32.mrf.mxu0
        %v713 = vadd.f32 0.0, %v712
        %v714 = vpop.f32.mrf.mxu0
        %715 = vmatprep.mubr.f32.mxu0 0.0
        %716 = vmatmul.mubr.f32.gmra.mxu0 %v550
        %v717 = vpop.f32.mrf.mxu0
        %v718 = vadd.f32 0.0, %v717
        %v719 = vpop.f32.mrf.mxu0
        %720 = vmatprep.mubr.f32.mxu0 0.0
        %721 = vmatmul.mubr.f32.gmra.mxu0 %v552
        %v722 = vpop.f32.mrf.mxu0
        %v723 = vadd.f32 0.0, %v722
        %v724 = vpop.f32.mrf.mxu0
        %725 = vmatprep.mubr.f32.mxu0 0.0
        %726 = vmatmul.mubr.f32.gmra.mxu0 %v555
        %v727 = vpop.f32.mrf.mxu0
        %v728 = vadd.f32 0.0, %v727
        %v729 = vpop.f32.mrf.mxu0
        %730 = vmatprep.mubr.f32.mxu0 0.0
        %731 = vmatmul.mubr.f32.gmra.mxu0 %v557
        %v732 = vpop.f32.mrf.mxu0
        %v733 = vadd.f32 0.0, %v732
        %v734 = vpop.f32.mrf.mxu0
        %735 = vdwg.mxu0
        %736 = vmatprep.subr.mxu0 0.0
        %737 = vmatpush1.msra.mxu0 %v508
        %738 = vmatprep.subr.mxu0 0.0
        %739 = vmatpush1.msra.mxu0 %v507
        %740 = vmatprep.subr.mxu0 0.0
        %741 = vmatpush1.msra.mxu0 %v506
        %742 = vmatprep.subr.mxu0 0.0
        %743 = vmatpush1.msra.mxu0 %v505
        %744 = vmatprep.subr.mxu0 0.0
        %745 = vmatpush1.msra.mxu0 %v504
        %746 = vmatprep.subr.mxu0 0.0
        %747 = vmatpush1.msra.mxu0 %v503
        %748 = vmatprep.subr.mxu0 0.0
        %749 = vmatpush1.msra.mxu0 %v502
        %750 = vmatprep.subr.mxu0 0.0
        %751 = vmatpush1.msra.mxu0 %v501
        %752 = vmatprep.subr.mxu0 0.0
        %753 = vmatpush1.msra.mxu0 %v500
        %754 = vmatprep.subr.mxu0 0.0
        %755 = vmatpush1.msra.mxu0 %v499
        %756 = vmatprep.subr.mxu0 0.0
        %757 = vmatpush1.msra.mxu0 %v498
        %758 = vmatprep.subr.mxu0 0.0
        %759 = vmatpush1.msra.mxu0 %v497
        %760 = vmatprep.subr.mxu0 0.0
        %761 = vmatpush1.msra.mxu0 %v496
        %762 = vmatprep.subr.mxu0 0.0
        %763 = vmatpush1.msra.mxu0 %v495
        %764 = vmatprep.subr.mxu0 0.0
        %765 = vmatpush1.msra.mxu0 %v494
        %766 = vmatprep.subr.mxu0 0.0
        %767 = vmatpush1.msra.mxu0 %v493
        %768 = vmatprep.subr.mxu0 0.0
        %769 = vmatpush2.msra.mxu0 0.0
        %770 = vmatprep.subr.mxu0 0.0
        %771 = vmatpush2.msra.mxu0 0.0
        %772 = vmatprep.subr.mxu0 0.0
        %773 = vmatpush2.msra.mxu0 0.0
        %774 = vmatprep.subr.mxu0 0.0
        %775 = vmatpush2.msra.mxu0 0.0
        %776 = vmatprep.subr.mxu0 0.0
        %777 = vmatpush2.msra.mxu0 0.0
        %778 = vmatprep.subr.mxu0 0.0
        %779 = vmatpush2.msra.mxu0 0.0
        %780 = vmatprep.subr.mxu0 0.0
        %781 = vmatpush2.msra.mxu0 0.0
        %782 = vmatprep.subr.mxu0 0.0
        %783 = vmatpush2.msra.mxu0 0.0
        %784 = vmatprep.subr.mxu0 0.0
        %785 = vmatpush2.msra.mxu0 0.0
        %786 = vmatprep.subr.mxu0 0.0
        %787 = vmatpush2.msra.mxu0 0.0
        %788 = vmatprep.subr.mxu0 0.0
        %789 = vmatpush2.msra.mxu0 0.0
        %790 = vmatprep.subr.mxu0 0.0
        %791 = vmatpush2.msra.mxu0 0.0
        %792 = vmatprep.subr.mxu0 0.0
        %793 = vmatpush2.msra.mxu0 0.0
        %794 = vmatprep.subr.mxu0 0.0
        %795 = vmatpush2.msra.mxu0 0.0
        %796 = vmatprep.subr.mxu0 0.0
        %797 = vmatpush2.msra.mxu0 0.0
        %798 = vmatprep.subr.mxu0 0.0
        %799 = vmatpush2.msra.mxu0 0.0
        %800 = vmatprep.mubr.f32.mxu0 0.0
        %801 = vmatmul.mubr.f32.gmra.mxu0 %v485
        %v802 = vpop.f32.mrf.mxu0
        %v803 = vadd.f32 %v658, %v802
        %v804 = vpop.f32.mrf.mxu0
        %805 = vmatprep.mubr.f32.mxu0 0.0
        %806 = vmatmul.mubr.f32.gmra.mxu0 %v447
        %v807 = vpop.f32.mrf.mxu0
        %v808 = vadd.f32 %v663, %v807
        %v809 = vpop.f32.mrf.mxu0
        %810 = vmatprep.mubr.f32.mxu0 0.0
        %811 = vmatmul.mubr.f32.gmra.mxu0 %v486
        %v812 = vpop.f32.mrf.mxu0
        %v813 = vadd.f32 %v668, %v812
        %v814 = vpop.f32.mrf.mxu0
        %815 = vmatprep.mubr.f32.mxu0 0.0
        %816 = vmatmul.mubr.f32.gmra.mxu0 %v450
        %v817 = vpop.f32.mrf.mxu0
        %v818 = vadd.f32 %v673, %v817
        %v819 = vpop.f32.mrf.mxu0
        %820 = vmatprep.mubr.f32.mxu0 0.0
        %821 = vmatmul.mubr.f32.gmra.mxu0 %v487
        %v822 = vpop.f32.mrf.mxu0
        %v823 = vadd.f32 %v678, %v822
        %v824 = vpop.f32.mrf.mxu0
        %825 = vmatprep.mubr.f32.mxu0 0.0
        %826 = vmatmul.mubr.f32.gmra.mxu0 %v453
        %v827 = vpop.f32.mrf.mxu0
        %v828 = vadd.f32 %v683, %v827
        %v829 = vpop.f32.mrf.mxu0
        %830 = vmatprep.mubr.f32.mxu0 0.0
        %831 = vmatmul.mubr.f32.gmra.mxu0 %v488
        %v832 = vpop.f32.mrf.mxu0
        %v833 = vadd.f32 %v688, %v832
        %v834 = vpop.f32.mrf.mxu0
        %835 = vmatprep.mubr.f32.mxu0 0.0
        %836 = vmatmul.mubr.f32.gmra.mxu0 %v456
        %v837 = vpop.f32.mrf.mxu0
        %v838 = vadd.f32 %v693, %v837
        %v839 = vpop.f32.mrf.mxu0
        %840 = vmatprep.mubr.f32.mxu0 0.0
        %841 = vmatmul.mubr.f32.gmra.mxu0 %v489
        %v842 = vpop.f32.mrf.mxu0
        %v843 = vadd.f32 %v698, %v842
        %v844 = vpop.f32.mrf.mxu0
        %845 = vmatprep.mubr.f32.mxu0 0.0
        %846 = vmatmul.mubr.f32.gmra.mxu0 %v459
        %v847 = vpop.f32.mrf.mxu0
        %v848 = vadd.f32 %v703, %v847
        %v849 = vpop.f32.mrf.mxu0
        %850 = vmatprep.mubr.f32.mxu0 0.0
        %851 = vmatmul.mubr.f32.gmra.mxu0 %v490
        %v852 = vpop.f32.mrf.mxu0
        %v853 = vadd.f32 %v708, %v852
        %v854 = vpop.f32.mrf.mxu0
        %855 = vmatprep.mubr.f32.mxu0 0.0
        %856 = vmatmul.mubr.f32.gmra.mxu0 %v462
        %v857 = vpop.f32.mrf.mxu0
        %v858 = vadd.f32 %v713, %v857
        %v859 = vpop.f32.mrf.mxu0
        %860 = vmatprep.mubr.f32.mxu0 0.0
        %861 = vmatmul.mubr.f32.gmra.mxu0 %v491
        %v862 = vpop.f32.mrf.mxu0
        %v863 = vadd.f32 %v718, %v862
        %v864 = vpop.f32.mrf.mxu0
        %865 = vmatprep.mubr.f32.mxu0 0.0
        %866 = vmatmul.mubr.f32.gmra.mxu0 %v465
        %v867 = vpop.f32.mrf.mxu0
        %v868 = vadd.f32 %v723, %v867
        %v869 = vpop.f32.mrf.mxu0
        %870 = vmatprep.mubr.f32.mxu0 0.0
        %871 = vmatmul.mubr.f32.gmra.mxu0 %v492
        %v872 = vpop.f32.mrf.mxu0
        %v873 = vadd.f32 %v728, %v872
        %v874 = vpop.f32.mrf.mxu0
        %875 = vmatprep.mubr.f32.mxu0 0.0
        %876 = vmatmul.mubr.f32.gmra.mxu0 %v468
        %v877 = vpop.f32.mrf.mxu0
        %v878 = vadd.f32 %v733, %v877
        %v879 = vpop.f32.mrf.mxu0
        %880 = vdwg.mxu0
        %vm881 = vcmask 1045504
        %v882 = vrot.slane %v485, 2
        %v883 = vrot.slane %v447, 2
        %v884 = vsel %vm881, %v882, %v883
        %v885 = vrot.slane %v446, 2
        %v886 = vsel %vm881, %v883, %v885
        %v887 = vrot.slane %v486, 2
        %v888 = vrot.slane %v450, 2
        %v889 = vsel %vm881, %v887, %v888
        %v890 = vrot.slane %v449, 2
        %v891 = vsel %vm881, %v888, %v890
        %v892 = vrot.slane %v487, 2
        %v893 = vrot.slane %v453, 2
        %v894 = vsel %vm881, %v892, %v893
        %v895 = vrot.slane %v452, 2
        %v896 = vsel %vm881, %v893, %v895
        %v897 = vrot.slane %v488, 2
        %v898 = vrot.slane %v456, 2
        %v899 = vsel %vm881, %v897, %v898
        %v900 = vrot.slane %v455, 2
        %v901 = vsel %vm881, %v898, %v900
        %v902 = vrot.slane %v489, 2
        %v903 = vrot.slane %v459, 2
        %v904 = vsel %vm881, %v902, %v903
        %v905 = vrot.slane %v458, 2
        %v906 = vsel %vm881, %v903, %v905
        %v907 = vrot.slane %v490, 2
        %v908 = vrot.slane %v462, 2
        %v909 = vsel %vm881, %v907, %v908
        %v910 = vrot.slane %v461, 2
        %v911 = vsel %vm881, %v908, %v910
        %v912 = vrot.slane %v491, 2
        %v913 = vrot.slane %v465, 2
        %v914 = vsel %vm881, %v912, %v913
        %v915 = vrot.slane %v464, 2
        %v916 = vsel %vm881, %v913, %v915
        %v917 = vrot.slane %v492, 2
        %v918 = vrot.slane %v468, 2
        %v919 = vsel %vm881, %v917, %v918
        %v920 = vrot.slane %v467, 2
        %v921 = vsel %vm881, %v918, %v920
        %s938 = scalar_lea.vmem [#allocation5], 256
        %v939 = vld [vmem:[%s938] sm:$0xff]
        %v940 = vld [vmem:[%s938 + $0x8] sm:$0xff]
        %v941 = vld [vmem:[%s938 + $0x10] sm:$0xff]
        %v942 = vld [vmem:[%s938 + $0x18] sm:$0xff]
        %v943 = vld [vmem:[%s938 + $0x20] sm:$0xff]
        %v944 = vld [vmem:[%s938 + $0x28] sm:$0xff]
        %v945 = vld [vmem:[%s938 + $0x30] sm:$0xff]
        %v946 = vld [vmem:[%s938 + $0x38] sm:$0xff]
        %v947 = vld [vmem:[%s938 + $0x40] sm:$0xff]
        %v948 = vld [vmem:[%s938 + $0x48] sm:$0xff]
        %v949 = vld [vmem:[%s938 + $0x50] sm:$0xff]
        %v950 = vld [vmem:[%s938 + $0x58] sm:$0xff]
        %v951 = vld [vmem:[%s938 + $0x60] sm:$0xff]
        %v952 = vld [vmem:[%s938 + $0x68] sm:$0xff]
        %v953 = vld [vmem:[%s938 + $0x70] sm:$0xff]
        %v954 = vld [vmem:[%s938 + $0x78] sm:$0xff]
        %955 = vmatprep.subr.mxu0 0.0
        %956 = vmatpush1.msra.mxu0 %v954
        %957 = vmatprep.subr.mxu0 0.0
        %958 = vmatpush1.msra.mxu0 %v953
        %959 = vmatprep.subr.mxu0 0.0
        %960 = vmatpush1.msra.mxu0 %v952
        %961 = vmatprep.subr.mxu0 0.0
        %962 = vmatpush1.msra.mxu0 %v951
        %963 = vmatprep.subr.mxu0 0.0
        %964 = vmatpush1.msra.mxu0 %v950
        %965 = vmatprep.subr.mxu0 0.0
        %966 = vmatpush1.msra.mxu0 %v949
        %967 = vmatprep.subr.mxu0 0.0
        %968 = vmatpush1.msra.mxu0 %v948
        %969 = vmatprep.subr.mxu0 0.0
        %970 = vmatpush1.msra.mxu0 %v947
        %971 = vmatprep.subr.mxu0 0.0
        %972 = vmatpush1.msra.mxu0 %v946
        %973 = vmatprep.subr.mxu0 0.0
        %974 = vmatpush1.msra.mxu0 %v945
        %975 = vmatprep.subr.mxu0 0.0
        %976 = vmatpush1.msra.mxu0 %v944
        %977 = vmatprep.subr.mxu0 0.0
        %978 = vmatpush1.msra.mxu0 %v943
        %979 = vmatprep.subr.mxu0 0.0
        %980 = vmatpush1.msra.mxu0 %v942
        %981 = vmatprep.subr.mxu0 0.0
        %982 = vmatpush1.msra.mxu0 %v941
        %983 = vmatprep.subr.mxu0 0.0
        %984 = vmatpush1.msra.mxu0 %v940
        %985 = vmatprep.subr.mxu0 0.0
        %986 = vmatpush1.msra.mxu0 %v939
        %987 = vmatprep.subr.mxu0 0.0
        %988 = vmatpush2.msra.mxu0 0.0
        %989 = vmatprep.subr.mxu0 0.0
        %990 = vmatpush2.msra.mxu0 0.0
        %991 = vmatprep.subr.mxu0 0.0
        %992 = vmatpush2.msra.mxu0 0.0
        %993 = vmatprep.subr.mxu0 0.0
        %994 = vmatpush2.msra.mxu0 0.0
        %995 = vmatprep.subr.mxu0 0.0
        %996 = vmatpush2.msra.mxu0 0.0
        %997 = vmatprep.subr.mxu0 0.0
        %998 = vmatpush2.msra.mxu0 0.0
        %999 = vmatprep.subr.mxu0 0.0
        %1000 = vmatpush2.msra.mxu0 0.0
        %1001 = vmatprep.subr.mxu0 0.0
        %1002 = vmatpush2.msra.mxu0 0.0
        %1003 = vmatprep.subr.mxu0 0.0
        %1004 = vmatpush2.msra.mxu0 0.0
        %1005 = vmatprep.subr.mxu0 0.0
        %1006 = vmatpush2.msra.mxu0 0.0
        %1007 = vmatprep.subr.mxu0 0.0
        %1008 = vmatpush2.msra.mxu0 0.0
        %1009 = vmatprep.subr.mxu0 0.0
        %1010 = vmatpush2.msra.mxu0 0.0
        %1011 = vmatprep.subr.mxu0 0.0
        %1012 = vmatpush2.msra.mxu0 0.0
        %1013 = vmatprep.subr.mxu0 0.0
        %1014 = vmatpush2.msra.mxu0 0.0
        %1015 = vmatprep.subr.mxu0 0.0
        %1016 = vmatpush2.msra.mxu0 0.0
        %1017 = vmatprep.subr.mxu0 0.0
        %1018 = vmatpush2.msra.mxu0 0.0
        %1019 = vmatprep.mubr.f32.mxu0 0.0
        %1020 = vmatmul.mubr.f32.gmra.mxu0 %v884
        %v1021 = vpop.f32.mrf.mxu0
        %v1022 = vadd.f32 0.0, %v1021
        %v1023 = vpop.f32.mrf.mxu0
        %1024 = vmatprep.mubr.f32.mxu0 0.0
        %1025 = vmatmul.mubr.f32.gmra.mxu0 %v886
        %v1026 = vpop.f32.mrf.mxu0
        %v1027 = vadd.f32 0.0, %v1026
        %v1028 = vpop.f32.mrf.mxu0
        %1029 = vmatprep.mubr.f32.mxu0 0.0
        %1030 = vmatmul.mubr.f32.gmra.mxu0 %v889
        %v1031 = vpop.f32.mrf.mxu0
        %v1032 = vadd.f32 0.0, %v1031
        %v1033 = vpop.f32.mrf.mxu0
        %1034 = vmatprep.mubr.f32.mxu0 0.0
        %1035 = vmatmul.mubr.f32.gmra.mxu0 %v891
        %v1036 = vpop.f32.mrf.mxu0
        %v1037 = vadd.f32 0.0, %v1036
        %v1038 = vpop.f32.mrf.mxu0
        %1039 = vmatprep.mubr.f32.mxu0 0.0
        %1040 = vmatmul.mubr.f32.gmra.mxu0 %v894
        %v1041 = vpop.f32.mrf.mxu0
        %v1042 = vadd.f32 0.0, %v1041
        %v1043 = vpop.f32.mrf.mxu0
        %1044 = vmatprep.mubr.f32.mxu0 0.0
        %1045 = vmatmul.mubr.f32.gmra.mxu0 %v896
        %v1046 = vpop.f32.mrf.mxu0
        %v1047 = vadd.f32 0.0, %v1046
        %v1048 = vpop.f32.mrf.mxu0
        %1049 = vmatprep.mubr.f32.mxu0 0.0
        %1050 = vmatmul.mubr.f32.gmra.mxu0 %v899
        %v1051 = vpop.f32.mrf.mxu0
        %v1052 = vadd.f32 0.0, %v1051
        %v1053 = vpop.f32.mrf.mxu0
        %1054 = vmatprep.mubr.f32.mxu0 0.0
        %1055 = vmatmul.mubr.f32.gmra.mxu0 %v901
        %v1056 = vpop.f32.mrf.mxu0
        %v1057 = vadd.f32 0.0, %v1056
        %v1058 = vpop.f32.mrf.mxu0
        %1059 = vmatprep.mubr.f32.mxu0 0.0
        %1060 = vmatmul.mubr.f32.gmra.mxu0 %v904
        %v1061 = vpop.f32.mrf.mxu0
        %v1062 = vadd.f32 0.0, %v1061
        %v1063 = vpop.f32.mrf.mxu0
        %1064 = vmatprep.mubr.f32.mxu0 0.0
        %1065 = vmatmul.mubr.f32.gmra.mxu0 %v906
        %v1066 = vpop.f32.mrf.mxu0
        %v1067 = vadd.f32 0.0, %v1066
        %v1068 = vpop.f32.mrf.mxu0
        %1069 = vmatprep.mubr.f32.mxu0 0.0
        %1070 = vmatmul.mubr.f32.gmra.mxu0 %v909
        %v1071 = vpop.f32.mrf.mxu0
        %v1072 = vadd.f32 0.0, %v1071
        %v1073 = vpop.f32.mrf.mxu0
        %1074 = vmatprep.mubr.f32.mxu0 0.0
        %1075 = vmatmul.mubr.f32.gmra.mxu0 %v911
        %v1076 = vpop.f32.mrf.mxu0
        %v1077 = vadd.f32 0.0, %v1076
        %v1078 = vpop.f32.mrf.mxu0
        %1079 = vmatprep.mubr.f32.mxu0 0.0
        %1080 = vmatmul.mubr.f32.gmra.mxu0 %v914
        %v1081 = vpop.f32.mrf.mxu0
        %v1082 = vadd.f32 0.0, %v1081
        %v1083 = vpop.f32.mrf.mxu0
        %1084 = vmatprep.mubr.f32.mxu0 0.0
        %1085 = vmatmul.mubr.f32.gmra.mxu0 %v916
        %v1086 = vpop.f32.mrf.mxu0
        %v1087 = vadd.f32 0.0, %v1086
        %v1088 = vpop.f32.mrf.mxu0
        %1089 = vmatprep.mubr.f32.mxu0 0.0
        %1090 = vmatmul.mubr.f32.gmra.mxu0 %v919
        %v1091 = vpop.f32.mrf.mxu0
        %v1092 = vadd.f32 0.0, %v1091
        %v1093 = vpop.f32.mrf.mxu0
        %1094 = vmatprep.mubr.f32.mxu0 0.0
        %1095 = vmatmul.mubr.f32.gmra.mxu0 %v921
        %v1096 = vpop.f32.mrf.mxu0
        %v1097 = vadd.f32 0.0, %v1096
        %v1098 = vpop.f32.mrf.mxu0
        %1099 = vdwg.mxu0
        %v1100 = vadd.f32 %v803, %v1022
        %v1101 = vadd.f32 %v808, %v1027
        %v1102 = vadd.f32 %v813, %v1032
        %v1103 = vadd.f32 %v818, %v1037
        %v1104 = vadd.f32 %v823, %v1042
        %v1105 = vadd.f32 %v828, %v1047
        %v1106 = vadd.f32 %v833, %v1052
        %v1107 = vadd.f32 %v838, %v1057
        %v1108 = vadd.f32 %v843, %v1062
        %v1109 = vadd.f32 %v848, %v1067
        %v1110 = vadd.f32 %v853, %v1072
        %v1111 = vadd.f32 %v858, %v1077
        %v1112 = vadd.f32 %v863, %v1082
        %v1113 = vadd.f32 %v868, %v1087
        %v1114 = vadd.f32 %v873, %v1092
        %v1115 = vadd.f32 %v878, %v1097
        %v1117 = vlaneseq
        %v1118 = vshrl.u32 %v1117, 7
        %v1119 = vsub.s32 0, %v1118
        %v1120 = vrot.slane %v427, %v1119
        %v1122 = vadd.f32 %v1100, %v1120
        %v1123 = vadd.f32 %v1101, %v1120
        %v1124 = vadd.f32 %v1102, %v1120
        %v1125 = vadd.f32 %v1103, %v1120
        %v1126 = vadd.f32 %v1104, %v1120
        %v1127 = vadd.f32 %v1105, %v1120
        %v1128 = vadd.f32 %v1106, %v1120
        %v1129 = vadd.f32 %v1107, %v1120
        %v1130 = vadd.f32 %v1108, %v1120
        %v1131 = vadd.f32 %v1109, %v1120
        %v1132 = vadd.f32 %v1110, %v1120
        %v1133 = vadd.f32 %v1111, %v1120
        %v1134 = vadd.f32 %v1112, %v1120
        %v1135 = vadd.f32 %v1113, %v1120
        %v1136 = vadd.f32 %v1114, %v1120
        %v1137 = vadd.f32 %v1115, %v1120
        %v1138 = vmax.f32 %v1122, 0.0
        %v1139 = vmax.f32 %v1123, 0.0
        %v1140 = vmax.f32 %v1124, 0.0
        %v1141 = vmax.f32 %v1125, 0.0
        %v1142 = vmax.f32 %v1126, 0.0
        %v1143 = vmax.f32 %v1127, 0.0
        %v1144 = vmax.f32 %v1128, 0.0
        %v1145 = vmax.f32 %v1129, 0.0
        %v1146 = vmax.f32 %v1130, 0.0
        %v1147 = vmax.f32 %v1131, 0.0
        %v1148 = vmax.f32 %v1132, 0.0
        %v1149 = vmax.f32 %v1133, 0.0
        %v1150 = vmax.f32 %v1134, 0.0
        %v1151 = vmax.f32 %v1135, 0.0
        %v1152 = vmax.f32 %v1136, 0.0
        %v1153 = vmax.f32 %v1137, 0.0
        %v1154 = vld [vmem:[%s4] sm:$0x1]
        %v1171 = vrot.slane %v1138, 6
        %v1172 = vrot.slane %v1139, 6
        %v1173 = vsel %vm444, %v1171, %v1172
        %v1174 = vrot.slane %v1140, 6
        %v1175 = vrot.slane %v1141, 6
        %v1176 = vsel %vm444, %v1174, %v1175
        %v1177 = vrot.slane %v1142, 6
        %v1178 = vrot.slane %v1143, 6
        %v1179 = vsel %vm444, %v1177, %v1178
        %v1180 = vrot.slane %v1144, 6
        %v1181 = vrot.slane %v1145, 6
        %v1182 = vsel %vm444, %v1180, %v1181
        %v1183 = vrot.slane %v1146, 6
        %v1184 = vrot.slane %v1147, 6
        %v1185 = vsel %vm444, %v1183, %v1184
        %v1186 = vrot.slane %v1148, 6
        %v1187 = vrot.slane %v1149, 6
        %v1188 = vsel %vm444, %v1186, %v1187
        %v1189 = vrot.slane %v1150, 6
        %v1190 = vrot.slane %v1151, 6
        %v1191 = vsel %vm444, %v1189, %v1190
        %v1192 = vrot.slane %v1152, 6
        %v1193 = vrot.slane %v1153, 6
        %v1194 = vsel %vm444, %v1192, %v1193
        %v1211 = vsel %vm444, 0.0, %v1171
        %v1212 = vsel %vm444, 0.0, %v1174
        %v1213 = vsel %vm444, 0.0, %v1177
        %v1214 = vsel %vm444, 0.0, %v1180
        %v1215 = vsel %vm444, 0.0, %v1183
        %v1216 = vsel %vm444, 0.0, %v1186
        %v1217 = vsel %vm444, 0.0, %v1189
        %v1218 = vsel %vm444, 0.0, %v1192
        %v1219 = vld [vmem:[#allocation7] sm:$0xff]
        %v1220 = vld [vmem:[#allocation7 + $0x8] sm:$0xff]
        %v1221 = vld [vmem:[#allocation7 + $0x10] sm:$0xff]
        %v1222 = vld [vmem:[#allocation7 + $0x18] sm:$0xff]
        %v1223 = vld [vmem:[#allocation7 + $0x20] sm:$0xff]
        %v1224 = vld [vmem:[#allocation7 + $0x28] sm:$0xff]
        %v1225 = vld [vmem:[#allocation7 + $0x30] sm:$0xff]
        %v1226 = vld [vmem:[#allocation7 + $0x38] sm:$0xff]
        %v1227 = vld [vmem:[#allocation7 + $0x40] sm:$0xff]
        %v1228 = vld [vmem:[#allocation7 + $0x48] sm:$0xff]
        %v1229 = vld [vmem:[#allocation7 + $0x50] sm:$0xff]
        %v1230 = vld [vmem:[#allocation7 + $0x58] sm:$0xff]
        %v1231 = vld [vmem:[#allocation7 + $0x60] sm:$0xff]
        %v1232 = vld [vmem:[#allocation7 + $0x68] sm:$0xff]
        %v1233 = vld [vmem:[#allocation7 + $0x70] sm:$0xff]
        %v1234 = vld [vmem:[#allocation7 + $0x78] sm:$0xff]
        %v1243 = vrot.slane %v1211, 1
        %v1244 = vrot.slane %v1173, 1
        %v1245 = vsel %vm517, %v1243, %v1244
        %v1246 = vrot.slane %v1172, 1
        %v1247 = vsel %vm517, %v1244, %v1246
        %v1248 = vrot.slane %v1212, 1
        %v1249 = vrot.slane %v1176, 1
        %v1250 = vsel %vm517, %v1248, %v1249
        %v1251 = vrot.slane %v1175, 1
        %v1252 = vsel %vm517, %v1249, %v1251
        %v1253 = vrot.slane %v1213, 1
        %v1254 = vrot.slane %v1179, 1
        %v1255 = vsel %vm517, %v1253, %v1254
        %v1256 = vrot.slane %v1178, 1
        %v1257 = vsel %vm517, %v1254, %v1256
        %v1258 = vrot.slane %v1214, 1
        %v1259 = vrot.slane %v1182, 1
        %v1260 = vsel %vm517, %v1258, %v1259
        %v1261 = vrot.slane %v1181, 1
        %v1262 = vsel %vm517, %v1259, %v1261
        %v1263 = vrot.slane %v1215, 1
        %v1264 = vrot.slane %v1185, 1
        %v1265 = vsel %vm517, %v1263, %v1264
        %v1266 = vrot.slane %v1184, 1
        %v1267 = vsel %vm517, %v1264, %v1266
        %v1268 = vrot.slane %v1216, 1
        %v1269 = vrot.slane %v1188, 1
        %v1270 = vsel %vm517, %v1268, %v1269
        %v1271 = vrot.slane %v1187, 1
        %v1272 = vsel %vm517, %v1269, %v1271
        %v1273 = vrot.slane %v1217, 1
        %v1274 = vrot.slane %v1191, 1
        %v1275 = vsel %vm517, %v1273, %v1274
        %v1276 = vrot.slane %v1190, 1
        %v1277 = vsel %vm517, %v1274, %v1276
        %v1278 = vrot.slane %v1218, 1
        %v1279 = vrot.slane %v1194, 1
        %v1280 = vsel %vm517, %v1278, %v1279
        %v1281 = vrot.slane %v1193, 1
        %v1282 = vsel %vm517, %v1279, %v1281
        %s1299 = scalar_lea.vmem [#allocation7], 128
        %v1300 = vld [vmem:[%s1299] sm:$0xff]
        %v1301 = vld [vmem:[%s1299 + $0x8] sm:$0xff]
        %v1302 = vld [vmem:[%s1299 + $0x10] sm:$0xff]
        %v1303 = vld [vmem:[%s1299 + $0x18] sm:$0xff]
        %v1304 = vld [vmem:[%s1299 + $0x20] sm:$0xff]
        %v1305 = vld [vmem:[%s1299 + $0x28] sm:$0xff]
        %v1306 = vld [vmem:[%s1299 + $0x30] sm:$0xff]
        %v1307 = vld [vmem:[%s1299 + $0x38] sm:$0xff]
        %v1308 = vld [vmem:[%s1299 + $0x40] sm:$0xff]
        %v1309 = vld [vmem:[%s1299 + $0x48] sm:$0xff]
        %v1310 = vld [vmem:[%s1299 + $0x50] sm:$0xff]
        %v1311 = vld [vmem:[%s1299 + $0x58] sm:$0xff]
        %v1312 = vld [vmem:[%s1299 + $0x60] sm:$0xff]
        %v1313 = vld [vmem:[%s1299 + $0x68] sm:$0xff]
        %v1314 = vld [vmem:[%s1299 + $0x70] sm:$0xff]
        %v1315 = vld [vmem:[%s1299 + $0x78] sm:$0xff]
        %1316 = vmatprep.subr.mxu0 0.0
        %1317 = vmatpush1.msra.mxu0 %v1315
        %1318 = vmatprep.subr.mxu0 0.0
        %1319 = vmatpush1.msra.mxu0 %v1314
        %1320 = vmatprep.subr.mxu0 0.0
        %1321 = vmatpush1.msra.mxu0 %v1313
        %1322 = vmatprep.subr.mxu0 0.0
        %1323 = vmatpush1.msra.mxu0 %v1312
        %1324 = vmatprep.subr.mxu0 0.0
        %1325 = vmatpush1.msra.mxu0 %v1311
        %1326 = vmatprep.subr.mxu0 0.0
        %1327 = vmatpush1.msra.mxu0 %v1310
        %1328 = vmatprep.subr.mxu0 0.0
        %1329 = vmatpush1.msra.mxu0 %v1309
        %1330 = vmatprep.subr.mxu0 0.0
        %1331 = vmatpush1.msra.mxu0 %v1308
        %1332 = vmatprep.subr.mxu0 0.0
        %1333 = vmatpush1.msra.mxu0 %v1307
        %1334 = vmatprep.subr.mxu0 0.0
        %1335 = vmatpush1.msra.mxu0 %v1306
        %1336 = vmatprep.subr.mxu0 0.0
        %1337 = vmatpush1.msra.mxu0 %v1305
        %1338 = vmatprep.subr.mxu0 0.0
        %1339 = vmatpush1.msra.mxu0 %v1304
        %1340 = vmatprep.subr.mxu0 0.0
        %1341 = vmatpush1.msra.mxu0 %v1303
        %1342 = vmatprep.subr.mxu0 0.0
        %1343 = vmatpush1.msra.mxu0 %v1302
        %1344 = vmatprep.subr.mxu0 0.0
        %1345 = vmatpush1.msra.mxu0 %v1301
        %1346 = vmatprep.subr.mxu0 0.0
        %1347 = vmatpush1.msra.mxu0 %v1300
        %1348 = vmatprep.subr.mxu0 0.0
        %1349 = vmatpush2.msra.mxu0 0.0
        %1350 = vmatprep.subr.mxu0 0.0
        %1351 = vmatpush2.msra.mxu0 0.0
        %1352 = vmatprep.subr.mxu0 0.0
        %1353 = vmatpush2.msra.mxu0 0.0
        %1354 = vmatprep.subr.mxu0 0.0
        %1355 = vmatpush2.msra.mxu0 0.0
        %1356 = vmatprep.subr.mxu0 0.0
        %1357 = vmatpush2.msra.mxu0 0.0
        %1358 = vmatprep.subr.mxu0 0.0
        %1359 = vmatpush2.msra.mxu0 0.0
        %1360 = vmatprep.subr.mxu0 0.0
        %1361 = vmatpush2.msra.mxu0 0.0
        %1362 = vmatprep.subr.mxu0 0.0
        %1363 = vmatpush2.msra.mxu0 0.0
        %1364 = vmatprep.subr.mxu0 0.0
        %1365 = vmatpush2.msra.mxu0 0.0
        %1366 = vmatprep.subr.mxu0 0.0
        %1367 = vmatpush2.msra.mxu0 0.0
        %1368 = vmatprep.subr.mxu0 0.0
        %1369 = vmatpush2.msra.mxu0 0.0
        %1370 = vmatprep.subr.mxu0 0.0
        %1371 = vmatpush2.msra.mxu0 0.0
        %1372 = vmatprep.subr.mxu0 0.0
        %1373 = vmatpush2.msra.mxu0 0.0
        %1374 = vmatprep.subr.mxu0 0.0
        %1375 = vmatpush2.msra.mxu0 0.0
        %1376 = vmatprep.subr.mxu0 0.0
        %1377 = vmatpush2.msra.mxu0 0.0
        %1378 = vmatprep.subr.mxu0 0.0
        %1379 = vmatpush2.msra.mxu0 0.0
        %1380 = vmatprep.mubr.f32.mxu0 0.0
        %1381 = vmatmul.mubr.f32.gmra.mxu0 %v1245
        %v1382 = vpop.f32.mrf.mxu0
        %v1383 = vadd.f32 0.0, %v1382
        %v1384 = vpop.f32.mrf.mxu0
        %1385 = vmatprep.mubr.f32.mxu0 0.0
        %1386 = vmatmul.mubr.f32.gmra.mxu0 %v1247
        %v1387 = vpop.f32.mrf.mxu0
        %v1388 = vadd.f32 0.0, %v1387
        %v1389 = vpop.f32.mrf.mxu0
        %1390 = vmatprep.mubr.f32.mxu0 0.0
        %1391 = vmatmul.mubr.f32.gmra.mxu0 %v1250
        %v1392 = vpop.f32.mrf.mxu0
        %v1393 = vadd.f32 0.0, %v1392
        %v1394 = vpop.f32.mrf.mxu0
        %1395 = vmatprep.mubr.f32.mxu0 0.0
        %1396 = vmatmul.mubr.f32.gmra.mxu0 %v1252
        %v1397 = vpop.f32.mrf.mxu0
        %v1398 = vadd.f32 0.0, %v1397
        %v1399 = vpop.f32.mrf.mxu0
        %1400 = vmatprep.mubr.f32.mxu0 0.0
        %1401 = vmatmul.mubr.f32.gmra.mxu0 %v1255
        %v1402 = vpop.f32.mrf.mxu0
        %v1403 = vadd.f32 0.0, %v1402
        %v1404 = vpop.f32.mrf.mxu0
        %1405 = vmatprep.mubr.f32.mxu0 0.0
        %1406 = vmatmul.mubr.f32.gmra.mxu0 %v1257
        %v1407 = vpop.f32.mrf.mxu0
        %v1408 = vadd.f32 0.0, %v1407
        %v1409 = vpop.f32.mrf.mxu0
        %1410 = vmatprep.mubr.f32.mxu0 0.0
        %1411 = vmatmul.mubr.f32.gmra.mxu0 %v1260
        %v1412 = vpop.f32.mrf.mxu0
        %v1413 = vadd.f32 0.0, %v1412
        %v1414 = vpop.f32.mrf.mxu0
        %1415 = vmatprep.mubr.f32.mxu0 0.0
        %1416 = vmatmul.mubr.f32.gmra.mxu0 %v1262
        %v1417 = vpop.f32.mrf.mxu0
        %v1418 = vadd.f32 0.0, %v1417
        %v1419 = vpop.f32.mrf.mxu0
        %1420 = vmatprep.mubr.f32.mxu0 0.0
        %1421 = vmatmul.mubr.f32.gmra.mxu0 %v1265
        %v1422 = vpop.f32.mrf.mxu0
        %v1423 = vadd.f32 0.0, %v1422
        %v1424 = vpop.f32.mrf.mxu0
        %1425 = vmatprep.mubr.f32.mxu0 0.0
        %1426 = vmatmul.mubr.f32.gmra.mxu0 %v1267
        %v1427 = vpop.f32.mrf.mxu0
        %v1428 = vadd.f32 0.0, %v1427
        %v1429 = vpop.f32.mrf.mxu0
        %1430 = vmatprep.mubr.f32.mxu0 0.0
        %1431 = vmatmul.mubr.f32.gmra.mxu0 %v1270
        %v1432 = vpop.f32.mrf.mxu0
        %v1433 = vadd.f32 0.0, %v1432
        %v1434 = vpop.f32.mrf.mxu0
        %1435 = vmatprep.mubr.f32.mxu0 0.0
        %1436 = vmatmul.mubr.f32.gmra.mxu0 %v1272
        %v1437 = vpop.f32.mrf.mxu0
        %v1438 = vadd.f32 0.0, %v1437
        %v1439 = vpop.f32.mrf.mxu0
        %1440 = vmatprep.mubr.f32.mxu0 0.0
        %1441 = vmatmul.mubr.f32.gmra.mxu0 %v1275
        %v1442 = vpop.f32.mrf.mxu0
        %v1443 = vadd.f32 0.0, %v1442
        %v1444 = vpop.f32.mrf.mxu0
        %1445 = vmatprep.mubr.f32.mxu0 0.0
        %1446 = vmatmul.mubr.f32.gmra.mxu0 %v1277
        %v1447 = vpop.f32.mrf.mxu0
        %v1448 = vadd.f32 0.0, %v1447
        %v1449 = vpop.f32.mrf.mxu0
        %1450 = vmatprep.mubr.f32.mxu0 0.0
        %1451 = vmatmul.mubr.f32.gmra.mxu0 %v1280
        %v1452 = vpop.f32.mrf.mxu0
        %v1453 = vadd.f32 0.0, %v1452
        %v1454 = vpop.f32.mrf.mxu0
        %1455 = vmatprep.mubr.f32.mxu0 0.0
        %1456 = vmatmul.mubr.f32.gmra.mxu0 %v1282
        %v1457 = vpop.f32.mrf.mxu0
        %v1458 = vadd.f32 0.0, %v1457
        %v1459 = vpop.f32.mrf.mxu0
        %1460 = vdwg.mxu0
        %1461 = vmatprep.subr.mxu0 0.0
        %1462 = vmatpush1.msra.mxu0 %v1234
        %1463 = vmatprep.subr.mxu0 0.0
        %1464 = vmatpush1.msra.mxu0 %v1233
        %1465 = vmatprep.subr.mxu0 0.0
        %1466 = vmatpush1.msra.mxu0 %v1232
        %1467 = vmatprep.subr.mxu0 0.0
        %1468 = vmatpush1.msra.mxu0 %v1231
        %1469 = vmatprep.subr.mxu0 0.0
        %1470 = vmatpush1.msra.mxu0 %v1230
        %1471 = vmatprep.subr.mxu0 0.0
        %1472 = vmatpush1.msra.mxu0 %v1229
        %1473 = vmatprep.subr.mxu0 0.0
        %1474 = vmatpush1.msra.mxu0 %v1228
        %1475 = vmatprep.subr.mxu0 0.0
        %1476 = vmatpush1.msra.mxu0 %v1227
        %1477 = vmatprep.subr.mxu0 0.0
        %1478 = vmatpush1.msra.mxu0 %v1226
        %1479 = vmatprep.subr.mxu0 0.0
        %1480 = vmatpush1.msra.mxu0 %v1225
        %1481 = vmatprep.subr.mxu0 0.0
        %1482 = vmatpush1.msra.mxu0 %v1224
        %1483 = vmatprep.subr.mxu0 0.0
        %1484 = vmatpush1.msra.mxu0 %v1223
        %1485 = vmatprep.subr.mxu0 0.0
        %1486 = vmatpush1.msra.mxu0 %v1222
        %1487 = vmatprep.subr.mxu0 0.0
        %1488 = vmatpush1.msra.mxu0 %v1221
        %1489 = vmatprep.subr.mxu0 0.0
        %1490 = vmatpush1.msra.mxu0 %v1220
        %1491 = vmatprep.subr.mxu0 0.0
        %1492 = vmatpush1.msra.mxu0 %v1219
        %1493 = vmatprep.subr.mxu0 0.0
        %1494 = vmatpush2.msra.mxu0 0.0
        %1495 = vmatprep.subr.mxu0 0.0
        %1496 = vmatpush2.msra.mxu0 0.0
        %1497 = vmatprep.subr.mxu0 0.0
        %1498 = vmatpush2.msra.mxu0 0.0
        %1499 = vmatprep.subr.mxu0 0.0
        %1500 = vmatpush2.msra.mxu0 0.0
        %1501 = vmatprep.subr.mxu0 0.0
        %1502 = vmatpush2.msra.mxu0 0.0
        %1503 = vmatprep.subr.mxu0 0.0
        %1504 = vmatpush2.msra.mxu0 0.0
        %1505 = vmatprep.subr.mxu0 0.0
        %1506 = vmatpush2.msra.mxu0 0.0
        %1507 = vmatprep.subr.mxu0 0.0
        %1508 = vmatpush2.msra.mxu0 0.0
        %1509 = vmatprep.subr.mxu0 0.0
        %1510 = vmatpush2.msra.mxu0 0.0
        %1511 = vmatprep.subr.mxu0 0.0
        %1512 = vmatpush2.msra.mxu0 0.0
        %1513 = vmatprep.subr.mxu0 0.0
        %1514 = vmatpush2.msra.mxu0 0.0
        %1515 = vmatprep.subr.mxu0 0.0
        %1516 = vmatpush2.msra.mxu0 0.0
        %1517 = vmatprep.subr.mxu0 0.0
        %1518 = vmatpush2.msra.mxu0 0.0
        %1519 = vmatprep.subr.mxu0 0.0
        %1520 = vmatpush2.msra.mxu0 0.0
        %1521 = vmatprep.subr.mxu0 0.0
        %1522 = vmatpush2.msra.mxu0 0.0
        %1523 = vmatprep.subr.mxu0 0.0
        %1524 = vmatpush2.msra.mxu0 0.0
        %1525 = vmatprep.mubr.f32.mxu0 0.0
        %1526 = vmatmul.mubr.f32.gmra.mxu0 %v1211
        %v1527 = vpop.f32.mrf.mxu0
        %v1528 = vadd.f32 %v1383, %v1527
        %v1529 = vpop.f32.mrf.mxu0
        %1530 = vmatprep.mubr.f32.mxu0 0.0
        %1531 = vmatmul.mubr.f32.gmra.mxu0 %v1173
        %v1532 = vpop.f32.mrf.mxu0
        %v1533 = vadd.f32 %v1388, %v1532
        %v1534 = vpop.f32.mrf.mxu0
        %1535 = vmatprep.mubr.f32.mxu0 0.0
        %1536 = vmatmul.mubr.f32.gmra.mxu0 %v1212
        %v1537 = vpop.f32.mrf.mxu0
        %v1538 = vadd.f32 %v1393, %v1537
        %v1539 = vpop.f32.mrf.mxu0
        %1540 = vmatprep.mubr.f32.mxu0 0.0
        %1541 = vmatmul.mubr.f32.gmra.mxu0 %v1176
        %v1542 = vpop.f32.mrf.mxu0
        %v1543 = vadd.f32 %v1398, %v1542
        %v1544 = vpop.f32.mrf.mxu0
        %1545 = vmatprep.mubr.f32.mxu0 0.0
        %1546 = vmatmul.mubr.f32.gmra.mxu0 %v1213
        %v1547 = vpop.f32.mrf.mxu0
        %v1548 = vadd.f32 %v1403, %v1547
        %v1549 = vpop.f32.mrf.mxu0
        %1550 = vmatprep.mubr.f32.mxu0 0.0
        %1551 = vmatmul.mubr.f32.gmra.mxu0 %v1179
        %v1552 = vpop.f32.mrf.mxu0
        %v1553 = vadd.f32 %v1408, %v1552
        %v1554 = vpop.f32.mrf.mxu0
        %1555 = vmatprep.mubr.f32.mxu0 0.0
        %1556 = vmatmul.mubr.f32.gmra.mxu0 %v1214
        %v1557 = vpop.f32.mrf.mxu0
        %v1558 = vadd.f32 %v1413, %v1557
        %v1559 = vpop.f32.mrf.mxu0
        %1560 = vmatprep.mubr.f32.mxu0 0.0
        %1561 = vmatmul.mubr.f32.gmra.mxu0 %v1182
        %v1562 = vpop.f32.mrf.mxu0
        %v1563 = vadd.f32 %v1418, %v1562
        %v1564 = vpop.f32.mrf.mxu0
        %1565 = vmatprep.mubr.f32.mxu0 0.0
        %1566 = vmatmul.mubr.f32.gmra.mxu0 %v1215
        %v1567 = vpop.f32.mrf.mxu0
        %v1568 = vadd.f32 %v1423, %v1567
        %v1569 = vpop.f32.mrf.mxu0
        %1570 = vmatprep.mubr.f32.mxu0 0.0
        %1571 = vmatmul.mubr.f32.gmra.mxu0 %v1185
        %v1572 = vpop.f32.mrf.mxu0
        %v1573 = vadd.f32 %v1428, %v1572
        %v1574 = vpop.f32.mrf.mxu0
        %1575 = vmatprep.mubr.f32.mxu0 0.0
        %1576 = vmatmul.mubr.f32.gmra.mxu0 %v1216
        %v1577 = vpop.f32.mrf.mxu0
        %v1578 = vadd.f32 %v1433, %v1577
        %v1579 = vpop.f32.mrf.mxu0
        %1580 = vmatprep.mubr.f32.mxu0 0.0
        %1581 = vmatmul.mubr.f32.gmra.mxu0 %v1188
        %v1582 = vpop.f32.mrf.mxu0
        %v1583 = vadd.f32 %v1438, %v1582
        %v1584 = vpop.f32.mrf.mxu0
        %1585 = vmatprep.mubr.f32.mxu0 0.0
        %1586 = vmatmul.mubr.f32.gmra.mxu0 %v1217
        %v1587 = vpop.f32.mrf.mxu0
        %v1588 = vadd.f32 %v1443, %v1587
        %v1589 = vpop.f32.mrf.mxu0
        %1590 = vmatprep.mubr.f32.mxu0 0.0
        %1591 = vmatmul.mubr.f32.gmra.mxu0 %v1191
        %v1592 = vpop.f32.mrf.mxu0
        %v1593 = vadd.f32 %v1448, %v1592
        %v1594 = vpop.f32.mrf.mxu0
        %1595 = vmatprep.mubr.f32.mxu0 0.0
        %1596 = vmatmul.mubr.f32.gmra.mxu0 %v1218
        %v1597 = vpop.f32.mrf.mxu0
        %v1598 = vadd.f32 %v1453, %v1597
        %v1599 = vpop.f32.mrf.mxu0
        %1600 = vmatprep.mubr.f32.mxu0 0.0
        %1601 = vmatmul.mubr.f32.gmra.mxu0 %v1194
        %v1602 = vpop.f32.mrf.mxu0
        %v1603 = vadd.f32 %v1458, %v1602
        %v1604 = vpop.f32.mrf.mxu0
        %1605 = vdwg.mxu0
        %v1606 = vrot.slane %v1211, 2
        %v1607 = vrot.slane %v1173, 2
        %v1608 = vsel %vm881, %v1606, %v1607
        %v1609 = vrot.slane %v1172, 2
        %v1610 = vsel %vm881, %v1607, %v1609
        %v1611 = vrot.slane %v1212, 2
        %v1612 = vrot.slane %v1176, 2
        %v1613 = vsel %vm881, %v1611, %v1612
        %v1614 = vrot.slane %v1175, 2
        %v1615 = vsel %vm881, %v1612, %v1614
        %v1616 = vrot.slane %v1213, 2
        %v1617 = vrot.slane %v1179, 2
        %v1618 = vsel %vm881, %v1616, %v1617
        %v1619 = vrot.slane %v1178, 2
        %v1620 = vsel %vm881, %v1617, %v1619
        %v1621 = vrot.slane %v1214, 2
        %v1622 = vrot.slane %v1182, 2
        %v1623 = vsel %vm881, %v1621, %v1622
        %v1624 = vrot.slane %v1181, 2
        %v1625 = vsel %vm881, %v1622, %v1624
        %v1626 = vrot.slane %v1215, 2
        %v1627 = vrot.slane %v1185, 2
        %v1628 = vsel %vm881, %v1626, %v1627
        %v1629 = vrot.slane %v1184, 2
        %v1630 = vsel %vm881, %v1627, %v1629
        %v1631 = vrot.slane %v1216, 2
        %v1632 = vrot.slane %v1188, 2
        %v1633 = vsel %vm881, %v1631, %v1632
        %v1634 = vrot.slane %v1187, 2
        %v1635 = vsel %vm881, %v1632, %v1634
        %v1636 = vrot.slane %v1217, 2
        %v1637 = vrot.slane %v1191, 2
        %v1638 = vsel %vm881, %v1636, %v1637
        %v1639 = vrot.slane %v1190, 2
        %v1640 = vsel %vm881, %v1637, %v1639
        %v1641 = vrot.slane %v1218, 2
        %v1642 = vrot.slane %v1194, 2
        %v1643 = vsel %vm881, %v1641, %v1642
        %v1644 = vrot.slane %v1193, 2
        %v1645 = vsel %vm881, %v1642, %v1644
        %s1662 = scalar_lea.vmem [#allocation7], 256
        %v1663 = vld [vmem:[%s1662] sm:$0xff]
        %v1664 = vld [vmem:[%s1662 + $0x8] sm:$0xff]
        %v1665 = vld [vmem:[%s1662 + $0x10] sm:$0xff]
        %v1666 = vld [vmem:[%s1662 + $0x18] sm:$0xff]
        %v1667 = vld [vmem:[%s1662 + $0x20] sm:$0xff]
        %v1668 = vld [vmem:[%s1662 + $0x28] sm:$0xff]
        %v1669 = vld [vmem:[%s1662 + $0x30] sm:$0xff]
        %v1670 = vld [vmem:[%s1662 + $0x38] sm:$0xff]
        %v1671 = vld [vmem:[%s1662 + $0x40] sm:$0xff]
        %v1672 = vld [vmem:[%s1662 + $0x48] sm:$0xff]
        %v1673 = vld [vmem:[%s1662 + $0x50] sm:$0xff]
        %v1674 = vld [vmem:[%s1662 + $0x58] sm:$0xff]
        %v1675 = vld [vmem:[%s1662 + $0x60] sm:$0xff]
        %v1676 = vld [vmem:[%s1662 + $0x68] sm:$0xff]
        %v1677 = vld [vmem:[%s1662 + $0x70] sm:$0xff]
        %v1678 = vld [vmem:[%s1662 + $0x78] sm:$0xff]
        %1679 = vmatprep.subr.mxu0 0.0
        %1680 = vmatpush1.msra.mxu0 %v1678
        %1681 = vmatprep.subr.mxu0 0.0
        %1682 = vmatpush1.msra.mxu0 %v1677
        %1683 = vmatprep.subr.mxu0 0.0
        %1684 = vmatpush1.msra.mxu0 %v1676
        %1685 = vmatprep.subr.mxu0 0.0
        %1686 = vmatpush1.msra.mxu0 %v1675
        %1687 = vmatprep.subr.mxu0 0.0
        %1688 = vmatpush1.msra.mxu0 %v1674
        %1689 = vmatprep.subr.mxu0 0.0
        %1690 = vmatpush1.msra.mxu0 %v1673
        %1691 = vmatprep.subr.mxu0 0.0
        %1692 = vmatpush1.msra.mxu0 %v1672
        %1693 = vmatprep.subr.mxu0 0.0
        %1694 = vmatpush1.msra.mxu0 %v1671
        %1695 = vmatprep.subr.mxu0 0.0
        %1696 = vmatpush1.msra.mxu0 %v1670
        %1697 = vmatprep.subr.mxu0 0.0
        %1698 = vmatpush1.msra.mxu0 %v1669
        %1699 = vmatprep.subr.mxu0 0.0
        %1700 = vmatpush1.msra.mxu0 %v1668
        %1701 = vmatprep.subr.mxu0 0.0
        %1702 = vmatpush1.msra.mxu0 %v1667
        %1703 = vmatprep.subr.mxu0 0.0
        %1704 = vmatpush1.msra.mxu0 %v1666
        %1705 = vmatprep.subr.mxu0 0.0
        %1706 = vmatpush1.msra.mxu0 %v1665
        %1707 = vmatprep.subr.mxu0 0.0
        %1708 = vmatpush1.msra.mxu0 %v1664
        %1709 = vmatprep.subr.mxu0 0.0
        %1710 = vmatpush1.msra.mxu0 %v1663
        %1711 = vmatprep.subr.mxu0 0.0
        %1712 = vmatpush2.msra.mxu0 0.0
        %1713 = vmatprep.subr.mxu0 0.0
        %1714 = vmatpush2.msra.mxu0 0.0
        %1715 = vmatprep.subr.mxu0 0.0
        %1716 = vmatpush2.msra.mxu0 0.0
        %1717 = vmatprep.subr.mxu0 0.0
        %1718 = vmatpush2.msra.mxu0 0.0
        %1719 = vmatprep.subr.mxu0 0.0
        %1720 = vmatpush2.msra.mxu0 0.0
        %1721 = vmatprep.subr.mxu0 0.0
        %1722 = vmatpush2.msra.mxu0 0.0
        %1723 = vmatprep.subr.mxu0 0.0
        %1724 = vmatpush2.msra.mxu0 0.0
        %1725 = vmatprep.subr.mxu0 0.0
        %1726 = vmatpush2.msra.mxu0 0.0
        %1727 = vmatprep.subr.mxu0 0.0
        %1728 = vmatpush2.msra.mxu0 0.0
        %1729 = vmatprep.subr.mxu0 0.0
        %1730 = vmatpush2.msra.mxu0 0.0
        %1731 = vmatprep.subr.mxu0 0.0
        %1732 = vmatpush2.msra.mxu0 0.0
        %1733 = vmatprep.subr.mxu0 0.0
        %1734 = vmatpush2.msra.mxu0 0.0
        %1735 = vmatprep.subr.mxu0 0.0
        %1736 = vmatpush2.msra.mxu0 0.0
        %1737 = vmatprep.subr.mxu0 0.0
        %1738 = vmatpush2.msra.mxu0 0.0
        %1739 = vmatprep.subr.mxu0 0.0
        %1740 = vmatpush2.msra.mxu0 0.0
        %1741 = vmatprep.subr.mxu0 0.0
        %1742 = vmatpush2.msra.mxu0 0.0
        %1743 = vmatprep.mubr.f32.mxu0 0.0
        %1744 = vmatmul.mubr.f32.gmra.mxu0 %v1608
        %v1745 = vpop.f32.mrf.mxu0
        %v1746 = vadd.f32 0.0, %v1745
        %v1747 = vpop.f32.mrf.mxu0
        %1748 = vmatprep.mubr.f32.mxu0 0.0
        %1749 = vmatmul.mubr.f32.gmra.mxu0 %v1610
        %v1750 = vpop.f32.mrf.mxu0
        %v1751 = vadd.f32 0.0, %v1750
        %v1752 = vpop.f32.mrf.mxu0
        %1753 = vmatprep.mubr.f32.mxu0 0.0
        %1754 = vmatmul.mubr.f32.gmra.mxu0 %v1613
        %v1755 = vpop.f32.mrf.mxu0
        %v1756 = vadd.f32 0.0, %v1755
        %v1757 = vpop.f32.mrf.mxu0
        %1758 = vmatprep.mubr.f32.mxu0 0.0
        %1759 = vmatmul.mubr.f32.gmra.mxu0 %v1615
        %v1760 = vpop.f32.mrf.mxu0
        %v1761 = vadd.f32 0.0, %v1760
        %v1762 = vpop.f32.mrf.mxu0
        %1763 = vmatprep.mubr.f32.mxu0 0.0
        %1764 = vmatmul.mubr.f32.gmra.mxu0 %v1618
        %v1765 = vpop.f32.mrf.mxu0
        %v1766 = vadd.f32 0.0, %v1765
        %v1767 = vpop.f32.mrf.mxu0
        %1768 = vmatprep.mubr.f32.mxu0 0.0
        %1769 = vmatmul.mubr.f32.gmra.mxu0 %v1620
        %v1770 = vpop.f32.mrf.mxu0
        %v1771 = vadd.f32 0.0, %v1770
        %v1772 = vpop.f32.mrf.mxu0
        %1773 = vmatprep.mubr.f32.mxu0 0.0
        %1774 = vmatmul.mubr.f32.gmra.mxu0 %v1623
        %v1775 = vpop.f32.mrf.mxu0
        %v1776 = vadd.f32 0.0, %v1775
        %v1777 = vpop.f32.mrf.mxu0
        %1778 = vmatprep.mubr.f32.mxu0 0.0
        %1779 = vmatmul.mubr.f32.gmra.mxu0 %v1625
        %v1780 = vpop.f32.mrf.mxu0
        %v1781 = vadd.f32 0.0, %v1780
        %v1782 = vpop.f32.mrf.mxu0
        %1783 = vmatprep.mubr.f32.mxu0 0.0
        %1784 = vmatmul.mubr.f32.gmra.mxu0 %v1628
        %v1785 = vpop.f32.mrf.mxu0
        %v1786 = vadd.f32 0.0, %v1785
        %v1787 = vpop.f32.mrf.mxu0
        %1788 = vmatprep.mubr.f32.mxu0 0.0
        %1789 = vmatmul.mubr.f32.gmra.mxu0 %v1630
        %v1790 = vpop.f32.mrf.mxu0
        %v1791 = vadd.f32 0.0, %v1790
        %v1792 = vpop.f32.mrf.mxu0
        %1793 = vmatprep.mubr.f32.mxu0 0.0
        %1794 = vmatmul.mubr.f32.gmra.mxu0 %v1633
        %v1795 = vpop.f32.mrf.mxu0
        %v1796 = vadd.f32 0.0, %v1795
        %v1797 = vpop.f32.mrf.mxu0
        %1798 = vmatprep.mubr.f32.mxu0 0.0
        %1799 = vmatmul.mubr.f32.gmra.mxu0 %v1635
        %v1800 = vpop.f32.mrf.mxu0
        %v1801 = vadd.f32 0.0, %v1800
        %v1802 = vpop.f32.mrf.mxu0
        %1803 = vmatprep.mubr.f32.mxu0 0.0
        %1804 = vmatmul.mubr.f32.gmra.mxu0 %v1638
        %v1805 = vpop.f32.mrf.mxu0
        %v1806 = vadd.f32 0.0, %v1805
        %v1807 = vpop.f32.mrf.mxu0
        %1808 = vmatprep.mubr.f32.mxu0 0.0
        %1809 = vmatmul.mubr.f32.gmra.mxu0 %v1640
        %v1810 = vpop.f32.mrf.mxu0
        %v1811 = vadd.f32 0.0, %v1810
        %v1812 = vpop.f32.mrf.mxu0
        %1813 = vmatprep.mubr.f32.mxu0 0.0
        %1814 = vmatmul.mubr.f32.gmra.mxu0 %v1643
        %v1815 = vpop.f32.mrf.mxu0
        %v1816 = vadd.f32 0.0, %v1815
        %v1817 = vpop.f32.mrf.mxu0
        %1818 = vmatprep.mubr.f32.mxu0 0.0
        %1819 = vmatmul.mubr.f32.gmra.mxu0 %v1645
        %v1820 = vpop.f32.mrf.mxu0
        %v1821 = vadd.f32 0.0, %v1820
        %v1822 = vpop.f32.mrf.mxu0
        %1823 = vdwg.mxu0
        %v1824 = vadd.f32 %v1528, %v1746
        %v1825 = vadd.f32 %v1533, %v1751
        %v1826 = vadd.f32 %v1538, %v1756
        %v1827 = vadd.f32 %v1543, %v1761
        %v1828 = vadd.f32 %v1548, %v1766
        %v1829 = vadd.f32 %v1553, %v1771
        %v1830 = vadd.f32 %v1558, %v1776
        %v1831 = vadd.f32 %v1563, %v1781
        %v1832 = vadd.f32 %v1568, %v1786
        %v1833 = vadd.f32 %v1573, %v1791
        %v1834 = vadd.f32 %v1578, %v1796
        %v1835 = vadd.f32 %v1583, %v1801
        %v1836 = vadd.f32 %v1588, %v1806
        %v1837 = vadd.f32 %v1593, %v1811
        %v1838 = vadd.f32 %v1598, %v1816
        %v1839 = vadd.f32 %v1603, %v1821
        %v1841 = vlaneseq
        %v1842 = vshrl.u32 %v1841, 7
        %v1843 = vsub.s32 0, %v1842
        %v1844 = vrot.slane %v1154, %v1843
        %v1846 = vadd.f32 %v1824, %v1844
        %v1847 = vadd.f32 %v1825, %v1844
        %v1848 = vadd.f32 %v1826, %v1844
        %v1849 = vadd.f32 %v1827, %v1844
        %v1850 = vadd.f32 %v1828, %v1844
        %v1851 = vadd.f32 %v1829, %v1844
        %v1852 = vadd.f32 %v1830, %v1844
        %v1853 = vadd.f32 %v1831, %v1844
        %v1854 = vadd.f32 %v1832, %v1844
        %v1855 = vadd.f32 %v1833, %v1844
        %v1856 = vadd.f32 %v1834, %v1844
        %v1857 = vadd.f32 %v1835, %v1844
        %v1858 = vadd.f32 %v1836, %v1844
        %v1859 = vadd.f32 %v1837, %v1844
        %v1860 = vadd.f32 %v1838, %v1844
        %v1861 = vadd.f32 %v1839, %v1844
        %v1862 = vmax.f32 %v1846, 0.0
        %v1863 = vmax.f32 %v1847, 0.0
        %v1864 = vmax.f32 %v1848, 0.0
        %v1865 = vmax.f32 %v1849, 0.0
        %v1866 = vmax.f32 %v1850, 0.0
        %v1867 = vmax.f32 %v1851, 0.0
        %v1868 = vmax.f32 %v1852, 0.0
        %v1869 = vmax.f32 %v1853, 0.0
        %v1870 = vmax.f32 %v1854, 0.0
        %v1871 = vmax.f32 %v1855, 0.0
        %v1872 = vmax.f32 %v1856, 0.0
        %v1873 = vmax.f32 %v1857, 0.0
        %v1874 = vmax.f32 %v1858, 0.0
        %v1875 = vmax.f32 %v1859, 0.0
        %v1876 = vmax.f32 %v1860, 0.0
        %v1877 = vmax.f32 %v1861, 0.0
        %v1878 = vld [vmem:[#allocation8] sm:$0xff]
        %v1879 = vld [vmem:[#allocation8 + $0x8] sm:$0xff]
        %v1880 = vld [vmem:[#allocation8 + $0x10] sm:$0xff]
        %v1881 = vld [vmem:[#allocation8 + $0x18] sm:$0xff]
        %v1882 = vld [vmem:[#allocation8 + $0x20] sm:$0xff]
        %v1883 = vld [vmem:[#allocation8 + $0x28] sm:$0xff]
        %v1884 = vld [vmem:[#allocation8 + $0x30] sm:$0xff]
        %v1885 = vld [vmem:[#allocation8 + $0x38] sm:$0xff]
        %v1886 = vld [vmem:[#allocation8 + $0x40] sm:$0xff]
        %v1887 = vld [vmem:[#allocation8 + $0x48] sm:$0xff]
        %v1888 = vld [vmem:[#allocation8 + $0x50] sm:$0xff]
        %v1889 = vld [vmem:[#allocation8 + $0x58] sm:$0xff]
        %v1890 = vld [vmem:[#allocation8 + $0x60] sm:$0xff]
        %v1891 = vld [vmem:[#allocation8 + $0x68] sm:$0xff]
        %v1892 = vld [vmem:[#allocation8 + $0x70] sm:$0xff]
        %v1893 = vld [vmem:[#allocation8 + $0x78] sm:$0xff]
        %v1894 = vld [vmem:[%s6] sm:$0x1]
        %v1896 = vlaneseq
        %v1897 = vshrl.u32 %v1896, 7
        %v1898 = vsub.s32 0, %v1897
        %v1899 = vrot.slane %v1894, %v1898
        %1901 = vmatprep.subr.mxu0 0.0
        %1902 = vmatpush1.msra.mxu0 %v1893
        %1903 = vmatprep.subr.mxu0 0.0
        %1904 = vmatpush1.msra.mxu0 %v1892
        %1905 = vmatprep.subr.mxu0 0.0
        %1906 = vmatpush1.msra.mxu0 %v1891
        %1907 = vmatprep.subr.mxu0 0.0
        %1908 = vmatpush1.msra.mxu0 %v1890
        %1909 = vmatprep.subr.mxu0 0.0
        %1910 = vmatpush1.msra.mxu0 %v1889
        %1911 = vmatprep.subr.mxu0 0.0
        %1912 = vmatpush1.msra.mxu0 %v1888
        %1913 = vmatprep.subr.mxu0 0.0
        %1914 = vmatpush1.msra.mxu0 %v1887
        %1915 = vmatprep.subr.mxu0 0.0
        %1916 = vmatpush1.msra.mxu0 %v1886
        %1917 = vmatprep.subr.mxu0 0.0
        %1918 = vmatpush1.msra.mxu0 %v1885
        %1919 = vmatprep.subr.mxu0 0.0
        %1920 = vmatpush1.msra.mxu0 %v1884
        %1921 = vmatprep.subr.mxu0 0.0
        %1922 = vmatpush1.msra.mxu0 %v1883
        %1923 = vmatprep.subr.mxu0 0.0
        %1924 = vmatpush1.msra.mxu0 %v1882
        %1925 = vmatprep.subr.mxu0 0.0
        %1926 = vmatpush1.msra.mxu0 %v1881
        %1927 = vmatprep.subr.mxu0 0.0
        %1928 = vmatpush1.msra.mxu0 %v1880
        %1929 = vmatprep.subr.mxu0 0.0
        %1930 = vmatpush1.msra.mxu0 %v1879
        %1931 = vmatprep.subr.mxu0 0.0
        %1932 = vmatpush1.msra.mxu0 %v1878
        %1933 = vmatprep.subr.mxu0 0.0
        %1934 = vmatpush2.msra.mxu0 0.0
        %1935 = vmatprep.subr.mxu0 0.0
        %1936 = vmatpush2.msra.mxu0 0.0
        %1937 = vmatprep.subr.mxu0 0.0
        %1938 = vmatpush2.msra.mxu0 0.0
        %1939 = vmatprep.subr.mxu0 0.0
        %1940 = vmatpush2.msra.mxu0 0.0
        %1941 = vmatprep.subr.mxu0 0.0
        %1942 = vmatpush2.msra.mxu0 0.0
        %1943 = vmatprep.subr.mxu0 0.0
        %1944 = vmatpush2.msra.mxu0 0.0
        %1945 = vmatprep.subr.mxu0 0.0
        %1946 = vmatpush2.msra.mxu0 0.0
        %1947 = vmatprep.subr.mxu0 0.0
        %1948 = vmatpush2.msra.mxu0 0.0
        %1949 = vmatprep.subr.mxu0 0.0
        %1950 = vmatpush2.msra.mxu0 0.0
        %1951 = vmatprep.subr.mxu0 0.0
        %1952 = vmatpush2.msra.mxu0 0.0
        %1953 = vmatprep.subr.mxu0 0.0
        %1954 = vmatpush2.msra.mxu0 0.0
        %1955 = vmatprep.subr.mxu0 0.0
        %1956 = vmatpush2.msra.mxu0 0.0
        %1957 = vmatprep.subr.mxu0 0.0
        %1958 = vmatpush2.msra.mxu0 0.0
        %1959 = vmatprep.subr.mxu0 0.0
        %1960 = vmatpush2.msra.mxu0 0.0
        %1961 = vmatprep.subr.mxu0 0.0
        %1962 = vmatpush2.msra.mxu0 0.0
        %1963 = vmatprep.subr.mxu0 0.0
        %1964 = vmatpush2.msra.mxu0 0.0
        %1965 = vmatprep.mubr.f32.mxu0 0.0
        %1966 = vmatmul.mubr.f32.gmra.mxu0 %v411
        %v1967 = vpop.f32.mrf.mxu0
        %v1968 = vadd.f32 %v1899, %v1967
        %v1969 = vpop.f32.mrf.mxu0
        %1970 = vmatprep.mubr.f32.mxu0 0.0
        %1971 = vmatmul.mubr.f32.gmra.mxu0 %v412
        %v1972 = vpop.f32.mrf.mxu0
        %v1973 = vadd.f32 %v1899, %v1972
        %v1974 = vpop.f32.mrf.mxu0
        %1975 = vmatprep.mubr.f32.mxu0 0.0
        %1976 = vmatmul.mubr.f32.gmra.mxu0 %v413
        %v1977 = vpop.f32.mrf.mxu0
        %v1978 = vadd.f32 %v1899, %v1977
        %v1979 = vpop.f32.mrf.mxu0
        %1980 = vmatprep.mubr.f32.mxu0 0.0
        %1981 = vmatmul.mubr.f32.gmra.mxu0 %v414
        %v1982 = vpop.f32.mrf.mxu0
        %v1983 = vadd.f32 %v1899, %v1982
        %v1984 = vpop.f32.mrf.mxu0
        %1985 = vmatprep.mubr.f32.mxu0 0.0
        %1986 = vmatmul.mubr.f32.gmra.mxu0 %v415
        %v1987 = vpop.f32.mrf.mxu0
        %v1988 = vadd.f32 %v1899, %v1987
        %v1989 = vpop.f32.mrf.mxu0
        %1990 = vmatprep.mubr.f32.mxu0 0.0
        %1991 = vmatmul.mubr.f32.gmra.mxu0 %v416
        %v1992 = vpop.f32.mrf.mxu0
        %v1993 = vadd.f32 %v1899, %v1992
        %v1994 = vpop.f32.mrf.mxu0
        %1995 = vmatprep.mubr.f32.mxu0 0.0
        %1996 = vmatmul.mubr.f32.gmra.mxu0 %v417
        %v1997 = vpop.f32.mrf.mxu0
        %v1998 = vadd.f32 %v1899, %v1997
        %v1999 = vpop.f32.mrf.mxu0
        %2000 = vmatprep.mubr.f32.mxu0 0.0
        %2001 = vmatmul.mubr.f32.gmra.mxu0 %v418
        %v2002 = vpop.f32.mrf.mxu0
        %v2003 = vadd.f32 %v1899, %v2002
        %v2004 = vpop.f32.mrf.mxu0
        %2005 = vmatprep.mubr.f32.mxu0 0.0
        %2006 = vmatmul.mubr.f32.gmra.mxu0 %v419
        %v2007 = vpop.f32.mrf.mxu0
        %v2008 = vadd.f32 %v1899, %v2007
        %v2009 = vpop.f32.mrf.mxu0
        %2010 = vmatprep.mubr.f32.mxu0 0.0
        %2011 = vmatmul.mubr.f32.gmra.mxu0 %v420
        %v2012 = vpop.f32.mrf.mxu0
        %v2013 = vadd.f32 %v1899, %v2012
        %v2014 = vpop.f32.mrf.mxu0
        %2015 = vmatprep.mubr.f32.mxu0 0.0
        %2016 = vmatmul.mubr.f32.gmra.mxu0 %v421
        %v2017 = vpop.f32.mrf.mxu0
        %v2018 = vadd.f32 %v1899, %v2017
        %v2019 = vpop.f32.mrf.mxu0
        %2020 = vmatprep.mubr.f32.mxu0 0.0
        %2021 = vmatmul.mubr.f32.gmra.mxu0 %v422
        %v2022 = vpop.f32.mrf.mxu0
        %v2023 = vadd.f32 %v1899, %v2022
        %v2024 = vpop.f32.mrf.mxu0
        %2025 = vmatprep.mubr.f32.mxu0 0.0
        %2026 = vmatmul.mubr.f32.gmra.mxu0 %v423
        %v2027 = vpop.f32.mrf.mxu0
        %v2028 = vadd.f32 %v1899, %v2027
        %v2029 = vpop.f32.mrf.mxu0
        %2030 = vmatprep.mubr.f32.mxu0 0.0
        %2031 = vmatmul.mubr.f32.gmra.mxu0 %v424
        %v2032 = vpop.f32.mrf.mxu0
        %v2033 = vadd.f32 %v1899, %v2032
        %v2034 = vpop.f32.mrf.mxu0
        %2035 = vmatprep.mubr.f32.mxu0 0.0
        %2036 = vmatmul.mubr.f32.gmra.mxu0 %v425
        %v2037 = vpop.f32.mrf.mxu0
        %v2038 = vadd.f32 %v1899, %v2037
        %v2039 = vpop.f32.mrf.mxu0
        %2040 = vmatprep.mubr.f32.mxu0 0.0
        %2041 = vmatmul.mubr.f32.gmra.mxu0 %v426
        %v2042 = vpop.f32.mrf.mxu0
        %v2043 = vadd.f32 %v1899, %v2042
        %v2044 = vpop.f32.mrf.mxu0
        %2045 = vdwg.mxu0
        %v2046 = vadd.f32 %v1862, %v1968
        %v2047 = vadd.f32 %v1863, %v1973
        %v2048 = vadd.f32 %v1864, %v1978
        %v2049 = vadd.f32 %v1865, %v1983
        %v2050 = vadd.f32 %v1866, %v1988
        %v2051 = vadd.f32 %v1867, %v1993
        %v2052 = vadd.f32 %v1868, %v1998
        %v2053 = vadd.f32 %v1869, %v2003
        %v2054 = vadd.f32 %v1870, %v2008
        %v2055 = vadd.f32 %v1871, %v2013
        %v2056 = vadd.f32 %v1872, %v2018
        %v2057 = vadd.f32 %v1873, %v2023
        %v2058 = vadd.f32 %v1874, %v2028
        %v2059 = vadd.f32 %v1875, %v2033
        %v2060 = vadd.f32 %v1876, %v2038
        %v2061 = vadd.f32 %v1877, %v2043
        %v2062 = vmax.f32 %v2046, 0.0
        %v2063 = vmax.f32 %v2047, 0.0
        %v2064 = vmax.f32 %v2048, 0.0
        %v2065 = vmax.f32 %v2049, 0.0
        %v2066 = vmax.f32 %v2050, 0.0
        %v2067 = vmax.f32 %v2051, 0.0
        %v2068 = vmax.f32 %v2052, 0.0
        %v2069 = vmax.f32 %v2053, 0.0
        %v2070 = vmax.f32 %v2054, 0.0
        %v2071 = vmax.f32 %v2055, 0.0
        %v2072 = vmax.f32 %v2056, 0.0
        %v2073 = vmax.f32 %v2057, 0.0
        %v2074 = vmax.f32 %v2058, 0.0
        %v2075 = vmax.f32 %v2059, 0.0
        %v2076 = vmax.f32 %v2060, 0.0
        %v2077 = vmax.f32 %v2061, 0.0
        %s2078 = scalar_lea.vmem %s2, 1
        %v2079 = vld [vmem:[%s2078] sm:$0x1]
        %vm2096 = vcmask 1043456
        %v2097 = vrot.slane %v2062, 4
        %v2098 = vrot.slane %v2063, 4
        %v2099 = vsel %vm2096, %v2097, %v2098
        %v2100 = vrot.slane %v2064, 4
        %v2101 = vrot.slane %v2065, 4
        %v2102 = vsel %vm2096, %v2100, %v2101
        %v2103 = vrot.slane %v2066, 4
        %v2104 = vrot.slane %v2067, 4
        %v2105 = vsel %vm2096, %v2103, %v2104
        %v2106 = vrot.slane %v2068, 4
        %v2107 = vrot.slane %v2069, 4
        %v2108 = vsel %vm2096, %v2106, %v2107
        %v2109 = vrot.slane %v2070, 4
        %v2110 = vrot.slane %v2071, 4
        %v2111 = vsel %vm2096, %v2109, %v2110
        %v2112 = vrot.slane %v2072, 4
        %v2113 = vrot.slane %v2073, 4
        %v2114 = vsel %vm2096, %v2112, %v2113
        %v2115 = vrot.slane %v2074, 4
        %v2116 = vrot.slane %v2075, 4
        %v2117 = vsel %vm2096, %v2115, %v2116
        %v2118 = vrot.slane %v2076, 4
        %v2119 = vrot.slane %v2077, 4
        %v2120 = vsel %vm2096, %v2118, %v2119
        %v2137 = vsel %vm2096, 0.0, %v2097
        %v2138 = vsel %vm2096, 0.0, %v2100
        %v2139 = vsel %vm2096, 0.0, %v2103
        %v2140 = vsel %vm2096, 0.0, %v2106
        %v2141 = vsel %vm2096, 0.0, %v2109
        %v2142 = vsel %vm2096, 0.0, %v2112
        %v2143 = vsel %vm2096, 0.0, %v2115
        %v2144 = vsel %vm2096, 0.0, %v2118
        %s2145 = scalar_lea.vmem [#allocation5], 384
        %v2146 = vld [vmem:[%s2145] sm:$0xff]
        %v2147 = vld [vmem:[%s2145 + $0x8] sm:$0xff]
        %v2148 = vld [vmem:[%s2145 + $0x10] sm:$0xff]
        %v2149 = vld [vmem:[%s2145 + $0x18] sm:$0xff]
        %v2150 = vld [vmem:[%s2145 + $0x20] sm:$0xff]
        %v2151 = vld [vmem:[%s2145 + $0x28] sm:$0xff]
        %v2152 = vld [vmem:[%s2145 + $0x30] sm:$0xff]
        %v2153 = vld [vmem:[%s2145 + $0x38] sm:$0xff]
        %v2154 = vld [vmem:[%s2145 + $0x40] sm:$0xff]
        %v2155 = vld [vmem:[%s2145 + $0x48] sm:$0xff]
        %v2156 = vld [vmem:[%s2145 + $0x50] sm:$0xff]
        %v2157 = vld [vmem:[%s2145 + $0x58] sm:$0xff]
        %v2158 = vld [vmem:[%s2145 + $0x60] sm:$0xff]
        %v2159 = vld [vmem:[%s2145 + $0x68] sm:$0xff]
        %v2160 = vld [vmem:[%s2145 + $0x70] sm:$0xff]
        %v2161 = vld [vmem:[%s2145 + $0x78] sm:$0xff]
        %v2170 = vrot.slane %v2137, 2
        %v2171 = vrot.slane %v2099, 2
        %v2172 = vsel %vm881, %v2170, %v2171
        %v2173 = vrot.slane %v2098, 2
        %v2174 = vsel %vm881, %v2171, %v2173
        %v2175 = vrot.slane %v2138, 2
        %v2176 = vrot.slane %v2102, 2
        %v2177 = vsel %vm881, %v2175, %v2176
        %v2178 = vrot.slane %v2101, 2
        %v2179 = vsel %vm881, %v2176, %v2178
        %v2180 = vrot.slane %v2139, 2
        %v2181 = vrot.slane %v2105, 2
        %v2182 = vsel %vm881, %v2180, %v2181
        %v2183 = vrot.slane %v2104, 2
        %v2184 = vsel %vm881, %v2181, %v2183
        %v2185 = vrot.slane %v2140, 2
        %v2186 = vrot.slane %v2108, 2
        %v2187 = vsel %vm881, %v2185, %v2186
        %v2188 = vrot.slane %v2107, 2
        %v2189 = vsel %vm881, %v2186, %v2188
        %v2190 = vrot.slane %v2141, 2
        %v2191 = vrot.slane %v2111, 2
        %v2192 = vsel %vm881, %v2190, %v2191
        %v2193 = vrot.slane %v2110, 2
        %v2194 = vsel %vm881, %v2191, %v2193
        %v2195 = vrot.slane %v2142, 2
        %v2196 = vrot.slane %v2114, 2
        %v2197 = vsel %vm881, %v2195, %v2196
        %v2198 = vrot.slane %v2113, 2
        %v2199 = vsel %vm881, %v2196, %v2198
        %v2200 = vrot.slane %v2143, 2
        %v2201 = vrot.slane %v2117, 2
        %v2202 = vsel %vm881, %v2200, %v2201
        %v2203 = vrot.slane %v2116, 2
        %v2204 = vsel %vm881, %v2201, %v2203
        %v2205 = vrot.slane %v2144, 2
        %v2206 = vrot.slane %v2120, 2
        %v2207 = vsel %vm881, %v2205, %v2206
        %v2208 = vrot.slane %v2119, 2
        %v2209 = vsel %vm881, %v2206, %v2208
        %s2226 = scalar_lea.vmem [#allocation5], 512
        %v2227 = vld [vmem:[%s2226] sm:$0xff]
        %v2228 = vld [vmem:[%s2226 + $0x8] sm:$0xff]
        %v2229 = vld [vmem:[%s2226 + $0x10] sm:$0xff]
        %v2230 = vld [vmem:[%s2226 + $0x18] sm:$0xff]
        %v2231 = vld [vmem:[%s2226 + $0x20] sm:$0xff]
        %v2232 = vld [vmem:[%s2226 + $0x28] sm:$0xff]
        %v2233 = vld [vmem:[%s2226 + $0x30] sm:$0xff]
        %v2234 = vld [vmem:[%s2226 + $0x38] sm:$0xff]
        %v2235 = vld [vmem:[%s2226 + $0x40] sm:$0xff]
        %v2236 = vld [vmem:[%s2226 + $0x48] sm:$0xff]
        %v2237 = vld [vmem:[%s2226 + $0x50] sm:$0xff]
        %v2238 = vld [vmem:[%s2226 + $0x58] sm:$0xff]
        %v2239 = vld [vmem:[%s2226 + $0x60] sm:$0xff]
        %v2240 = vld [vmem:[%s2226 + $0x68] sm:$0xff]
        %v2241 = vld [vmem:[%s2226 + $0x70] sm:$0xff]
        %v2242 = vld [vmem:[%s2226 + $0x78] sm:$0xff]
        %2243 = vmatprep.subr.mxu0 0.0
        %2244 = vmatpush1.msra.mxu0 %v2242
        %2245 = vmatprep.subr.mxu0 0.0
        %2246 = vmatpush1.msra.mxu0 %v2241
        %2247 = vmatprep.subr.mxu0 0.0
        %2248 = vmatpush1.msra.mxu0 %v2240
        %2249 = vmatprep.subr.mxu0 0.0
        %2250 = vmatpush1.msra.mxu0 %v2239
        %2251 = vmatprep.subr.mxu0 0.0
        %2252 = vmatpush1.msra.mxu0 %v2238
        %2253 = vmatprep.subr.mxu0 0.0
        %2254 = vmatpush1.msra.mxu0 %v2237
        %2255 = vmatprep.subr.mxu0 0.0
        %2256 = vmatpush1.msra.mxu0 %v2236
        %2257 = vmatprep.subr.mxu0 0.0
        %2258 = vmatpush1.msra.mxu0 %v2235
        %2259 = vmatprep.subr.mxu0 0.0
        %2260 = vmatpush1.msra.mxu0 %v2234
        %2261 = vmatprep.subr.mxu0 0.0
        %2262 = vmatpush1.msra.mxu0 %v2233
        %2263 = vmatprep.subr.mxu0 0.0
        %2264 = vmatpush1.msra.mxu0 %v2232
        %2265 = vmatprep.subr.mxu0 0.0
        %2266 = vmatpush1.msra.mxu0 %v2231
        %2267 = vmatprep.subr.mxu0 0.0
        %2268 = vmatpush1.msra.mxu0 %v2230
        %2269 = vmatprep.subr.mxu0 0.0
        %2270 = vmatpush1.msra.mxu0 %v2229
        %2271 = vmatprep.subr.mxu0 0.0
        %2272 = vmatpush1.msra.mxu0 %v2228
        %2273 = vmatprep.subr.mxu0 0.0
        %2274 = vmatpush1.msra.mxu0 %v2227
        %2275 = vmatprep.subr.mxu0 0.0
        %2276 = vmatpush2.msra.mxu0 0.0
        %2277 = vmatprep.subr.mxu0 0.0
        %2278 = vmatpush2.msra.mxu0 0.0
        %2279 = vmatprep.subr.mxu0 0.0
        %2280 = vmatpush2.msra.mxu0 0.0
        %2281 = vmatprep.subr.mxu0 0.0
        %2282 = vmatpush2.msra.mxu0 0.0
        %2283 = vmatprep.subr.mxu0 0.0
        %2284 = vmatpush2.msra.mxu0 0.0
        %2285 = vmatprep.subr.mxu0 0.0
        %2286 = vmatpush2.msra.mxu0 0.0
        %2287 = vmatprep.subr.mxu0 0.0
        %2288 = vmatpush2.msra.mxu0 0.0
        %2289 = vmatprep.subr.mxu0 0.0
        %2290 = vmatpush2.msra.mxu0 0.0
        %2291 = vmatprep.subr.mxu0 0.0
        %2292 = vmatpush2.msra.mxu0 0.0
        %2293 = vmatprep.subr.mxu0 0.0
        %2294 = vmatpush2.msra.mxu0 0.0
        %2295 = vmatprep.subr.mxu0 0.0
        %2296 = vmatpush2.msra.mxu0 0.0
        %2297 = vmatprep.subr.mxu0 0.0
        %2298 = vmatpush2.msra.mxu0 0.0
        %2299 = vmatprep.subr.mxu0 0.0
        %2300 = vmatpush2.msra.mxu0 0.0
        %2301 = vmatprep.subr.mxu0 0.0
        %2302 = vmatpush2.msra.mxu0 0.0
        %2303 = vmatprep.subr.mxu0 0.0
        %2304 = vmatpush2.msra.mxu0 0.0
        %2305 = vmatprep.subr.mxu0 0.0
        %2306 = vmatpush2.msra.mxu0 0.0
        %2307 = vmatprep.mubr.f32.mxu0 0.0
        %2308 = vmatmul.mubr.f32.gmra.mxu0 %v2172
        %v2309 = vpop.f32.mrf.mxu0
        %v2310 = vadd.f32 0.0, %v2309
        %v2311 = vpop.f32.mrf.mxu0
        %2312 = vmatprep.mubr.f32.mxu0 0.0
        %2313 = vmatmul.mubr.f32.gmra.mxu0 %v2174
        %v2314 = vpop.f32.mrf.mxu0
        %v2315 = vadd.f32 0.0, %v2314
        %v2316 = vpop.f32.mrf.mxu0
        %2317 = vmatprep.mubr.f32.mxu0 0.0
        %2318 = vmatmul.mubr.f32.gmra.mxu0 %v2177
        %v2319 = vpop.f32.mrf.mxu0
        %v2320 = vadd.f32 0.0, %v2319
        %v2321 = vpop.f32.mrf.mxu0
        %2322 = vmatprep.mubr.f32.mxu0 0.0
        %2323 = vmatmul.mubr.f32.gmra.mxu0 %v2179
        %v2324 = vpop.f32.mrf.mxu0
        %v2325 = vadd.f32 0.0, %v2324
        %v2326 = vpop.f32.mrf.mxu0
        %2327 = vmatprep.mubr.f32.mxu0 0.0
        %2328 = vmatmul.mubr.f32.gmra.mxu0 %v2182
        %v2329 = vpop.f32.mrf.mxu0
        %v2330 = vadd.f32 0.0, %v2329
        %v2331 = vpop.f32.mrf.mxu0
        %2332 = vmatprep.mubr.f32.mxu0 0.0
        %2333 = vmatmul.mubr.f32.gmra.mxu0 %v2184
        %v2334 = vpop.f32.mrf.mxu0
        %v2335 = vadd.f32 0.0, %v2334
        %v2336 = vpop.f32.mrf.mxu0
        %2337 = vmatprep.mubr.f32.mxu0 0.0
        %2338 = vmatmul.mubr.f32.gmra.mxu0 %v2187
        %v2339 = vpop.f32.mrf.mxu0
        %v2340 = vadd.f32 0.0, %v2339
        %v2341 = vpop.f32.mrf.mxu0
        %2342 = vmatprep.mubr.f32.mxu0 0.0
        %2343 = vmatmul.mubr.f32.gmra.mxu0 %v2189
        %v2344 = vpop.f32.mrf.mxu0
        %v2345 = vadd.f32 0.0, %v2344
        %v2346 = vpop.f32.mrf.mxu0
        %2347 = vmatprep.mubr.f32.mxu0 0.0
        %2348 = vmatmul.mubr.f32.gmra.mxu0 %v2192
        %v2349 = vpop.f32.mrf.mxu0
        %v2350 = vadd.f32 0.0, %v2349
        %v2351 = vpop.f32.mrf.mxu0
        %2352 = vmatprep.mubr.f32.mxu0 0.0
        %2353 = vmatmul.mubr.f32.gmra.mxu0 %v2194
        %v2354 = vpop.f32.mrf.mxu0
        %v2355 = vadd.f32 0.0, %v2354
        %v2356 = vpop.f32.mrf.mxu0
        %2357 = vmatprep.mubr.f32.mxu0 0.0
        %2358 = vmatmul.mubr.f32.gmra.mxu0 %v2197
        %v2359 = vpop.f32.mrf.mxu0
        %v2360 = vadd.f32 0.0, %v2359
        %v2361 = vpop.f32.mrf.mxu0
        %2362 = vmatprep.mubr.f32.mxu0 0.0
        %2363 = vmatmul.mubr.f32.gmra.mxu0 %v2199
        %v2364 = vpop.f32.mrf.mxu0
        %v2365 = vadd.f32 0.0, %v2364
        %v2366 = vpop.f32.mrf.mxu0
        %2367 = vmatprep.mubr.f32.mxu0 0.0
        %2368 = vmatmul.mubr.f32.gmra.mxu0 %v2202
        %v2369 = vpop.f32.mrf.mxu0
        %v2370 = vadd.f32 0.0, %v2369
        %v2371 = vpop.f32.mrf.mxu0
        %2372 = vmatprep.mubr.f32.mxu0 0.0
        %2373 = vmatmul.mubr.f32.gmra.mxu0 %v2204
        %v2374 = vpop.f32.mrf.mxu0
        %v2375 = vadd.f32 0.0, %v2374
        %v2376 = vpop.f32.mrf.mxu0
        %2377 = vmatprep.mubr.f32.mxu0 0.0
        %2378 = vmatmul.mubr.f32.gmra.mxu0 %v2207
        %v2379 = vpop.f32.mrf.mxu0
        %v2380 = vadd.f32 0.0, %v2379
        %v2381 = vpop.f32.mrf.mxu0
        %2382 = vmatprep.mubr.f32.mxu0 0.0
        %2383 = vmatmul.mubr.f32.gmra.mxu0 %v2209
        %v2384 = vpop.f32.mrf.mxu0
        %v2385 = vadd.f32 0.0, %v2384
        %v2386 = vpop.f32.mrf.mxu0
        %2387 = vdwg.mxu0
        %2388 = vmatprep.subr.mxu0 0.0
        %2389 = vmatpush1.msra.mxu0 %v2161
        %2390 = vmatprep.subr.mxu0 0.0
        %2391 = vmatpush1.msra.mxu0 %v2160
        %2392 = vmatprep.subr.mxu0 0.0
        %2393 = vmatpush1.msra.mxu0 %v2159
        %2394 = vmatprep.subr.mxu0 0.0
        %2395 = vmatpush1.msra.mxu0 %v2158
        %2396 = vmatprep.subr.mxu0 0.0
        %2397 = vmatpush1.msra.mxu0 %v2157
        %2398 = vmatprep.subr.mxu0 0.0
        %2399 = vmatpush1.msra.mxu0 %v2156
        %2400 = vmatprep.subr.mxu0 0.0
        %2401 = vmatpush1.msra.mxu0 %v2155
        %2402 = vmatprep.subr.mxu0 0.0
        %2403 = vmatpush1.msra.mxu0 %v2154
        %2404 = vmatprep.subr.mxu0 0.0
        %2405 = vmatpush1.msra.mxu0 %v2153
        %2406 = vmatprep.subr.mxu0 0.0
        %2407 = vmatpush1.msra.mxu0 %v2152
        %2408 = vmatprep.subr.mxu0 0.0
        %2409 = vmatpush1.msra.mxu0 %v2151
        %2410 = vmatprep.subr.mxu0 0.0
        %2411 = vmatpush1.msra.mxu0 %v2150
        %2412 = vmatprep.subr.mxu0 0.0
        %2413 = vmatpush1.msra.mxu0 %v2149
        %2414 = vmatprep.subr.mxu0 0.0
        %2415 = vmatpush1.msra.mxu0 %v2148
        %2416 = vmatprep.subr.mxu0 0.0
        %2417 = vmatpush1.msra.mxu0 %v2147
        %2418 = vmatprep.subr.mxu0 0.0
        %2419 = vmatpush1.msra.mxu0 %v2146
        %2420 = vmatprep.subr.mxu0 0.0
        %2421 = vmatpush2.msra.mxu0 0.0
        %2422 = vmatprep.subr.mxu0 0.0
        %2423 = vmatpush2.msra.mxu0 0.0
        %2424 = vmatprep.subr.mxu0 0.0
        %2425 = vmatpush2.msra.mxu0 0.0
        %2426 = vmatprep.subr.mxu0 0.0
        %2427 = vmatpush2.msra.mxu0 0.0
        %2428 = vmatprep.subr.mxu0 0.0
        %2429 = vmatpush2.msra.mxu0 0.0
        %2430 = vmatprep.subr.mxu0 0.0
        %2431 = vmatpush2.msra.mxu0 0.0
        %2432 = vmatprep.subr.mxu0 0.0
        %2433 = vmatpush2.msra.mxu0 0.0
        %2434 = vmatprep.subr.mxu0 0.0
        %2435 = vmatpush2.msra.mxu0 0.0
        %2436 = vmatprep.subr.mxu0 0.0
        %2437 = vmatpush2.msra.mxu0 0.0
        %2438 = vmatprep.subr.mxu0 0.0
        %2439 = vmatpush2.msra.mxu0 0.0
        %2440 = vmatprep.subr.mxu0 0.0
        %2441 = vmatpush2.msra.mxu0 0.0
        %2442 = vmatprep.subr.mxu0 0.0
        %2443 = vmatpush2.msra.mxu0 0.0
        %2444 = vmatprep.subr.mxu0 0.0
        %2445 = vmatpush2.msra.mxu0 0.0
        %2446 = vmatprep.subr.mxu0 0.0
        %2447 = vmatpush2.msra.mxu0 0.0
        %2448 = vmatprep.subr.mxu0 0.0
        %2449 = vmatpush2.msra.mxu0 0.0
        %2450 = vmatprep.subr.mxu0 0.0
        %2451 = vmatpush2.msra.mxu0 0.0
        %2452 = vmatprep.mubr.f32.mxu0 0.0
        %2453 = vmatmul.mubr.f32.gmra.mxu0 %v2137
        %v2454 = vpop.f32.mrf.mxu0
        %v2455 = vadd.f32 %v2310, %v2454
        %v2456 = vpop.f32.mrf.mxu0
        %2457 = vmatprep.mubr.f32.mxu0 0.0
        %2458 = vmatmul.mubr.f32.gmra.mxu0 %v2099
        %v2459 = vpop.f32.mrf.mxu0
        %v2460 = vadd.f32 %v2315, %v2459
        %v2461 = vpop.f32.mrf.mxu0
        %2462 = vmatprep.mubr.f32.mxu0 0.0
        %2463 = vmatmul.mubr.f32.gmra.mxu0 %v2138
        %v2464 = vpop.f32.mrf.mxu0
        %v2465 = vadd.f32 %v2320, %v2464
        %v2466 = vpop.f32.mrf.mxu0
        %2467 = vmatprep.mubr.f32.mxu0 0.0
        %2468 = vmatmul.mubr.f32.gmra.mxu0 %v2102
        %v2469 = vpop.f32.mrf.mxu0
        %v2470 = vadd.f32 %v2325, %v2469
        %v2471 = vpop.f32.mrf.mxu0
        %2472 = vmatprep.mubr.f32.mxu0 0.0
        %2473 = vmatmul.mubr.f32.gmra.mxu0 %v2139
        %v2474 = vpop.f32.mrf.mxu0
        %v2475 = vadd.f32 %v2330, %v2474
        %v2476 = vpop.f32.mrf.mxu0
        %2477 = vmatprep.mubr.f32.mxu0 0.0
        %2478 = vmatmul.mubr.f32.gmra.mxu0 %v2105
        %v2479 = vpop.f32.mrf.mxu0
        %v2480 = vadd.f32 %v2335, %v2479
        %v2481 = vpop.f32.mrf.mxu0
        %2482 = vmatprep.mubr.f32.mxu0 0.0
        %2483 = vmatmul.mubr.f32.gmra.mxu0 %v2140
        %v2484 = vpop.f32.mrf.mxu0
        %v2485 = vadd.f32 %v2340, %v2484
        %v2486 = vpop.f32.mrf.mxu0
        %2487 = vmatprep.mubr.f32.mxu0 0.0
        %2488 = vmatmul.mubr.f32.gmra.mxu0 %v2108
        %v2489 = vpop.f32.mrf.mxu0
        %v2490 = vadd.f32 %v2345, %v2489
        %v2491 = vpop.f32.mrf.mxu0
        %2492 = vmatprep.mubr.f32.mxu0 0.0
        %2493 = vmatmul.mubr.f32.gmra.mxu0 %v2141
        %v2494 = vpop.f32.mrf.mxu0
        %v2495 = vadd.f32 %v2350, %v2494
        %v2496 = vpop.f32.mrf.mxu0
        %2497 = vmatprep.mubr.f32.mxu0 0.0
        %2498 = vmatmul.mubr.f32.gmra.mxu0 %v2111
        %v2499 = vpop.f32.mrf.mxu0
        %v2500 = vadd.f32 %v2355, %v2499
        %v2501 = vpop.f32.mrf.mxu0
        %2502 = vmatprep.mubr.f32.mxu0 0.0
        %2503 = vmatmul.mubr.f32.gmra.mxu0 %v2142
        %v2504 = vpop.f32.mrf.mxu0
        %v2505 = vadd.f32 %v2360, %v2504
        %v2506 = vpop.f32.mrf.mxu0
        %2507 = vmatprep.mubr.f32.mxu0 0.0
        %2508 = vmatmul.mubr.f32.gmra.mxu0 %v2114
        %v2509 = vpop.f32.mrf.mxu0
        %v2510 = vadd.f32 %v2365, %v2509
        %v2511 = vpop.f32.mrf.mxu0
        %2512 = vmatprep.mubr.f32.mxu0 0.0
        %2513 = vmatmul.mubr.f32.gmra.mxu0 %v2143
        %v2514 = vpop.f32.mrf.mxu0
        %v2515 = vadd.f32 %v2370, %v2514
        %v2516 = vpop.f32.mrf.mxu0
        %2517 = vmatprep.mubr.f32.mxu0 0.0
        %2518 = vmatmul.mubr.f32.gmra.mxu0 %v2117
        %v2519 = vpop.f32.mrf.mxu0
        %v2520 = vadd.f32 %v2375, %v2519
        %v2521 = vpop.f32.mrf.mxu0
        %2522 = vmatprep.mubr.f32.mxu0 0.0
        %2523 = vmatmul.mubr.f32.gmra.mxu0 %v2144
        %v2524 = vpop.f32.mrf.mxu0
        %v2525 = vadd.f32 %v2380, %v2524
        %v2526 = vpop.f32.mrf.mxu0
        %2527 = vmatprep.mubr.f32.mxu0 0.0
        %2528 = vmatmul.mubr.f32.gmra.mxu0 %v2120
        %v2529 = vpop.f32.mrf.mxu0
        %v2530 = vadd.f32 %v2385, %v2529
        %v2531 = vpop.f32.mrf.mxu0
        %2532 = vdwg.mxu0
        %v2533 = vrot.slane %v2137, 4
        %v2534 = vrot.slane %v2099, 4
        %v2535 = vsel %vm2096, %v2533, %v2534
        %v2536 = vrot.slane %v2098, 4
        %v2537 = vsel %vm2096, %v2534, %v2536
        %v2538 = vrot.slane %v2138, 4
        %v2539 = vrot.slane %v2102, 4
        %v2540 = vsel %vm2096, %v2538, %v2539
        %v2541 = vrot.slane %v2101, 4
        %v2542 = vsel %vm2096, %v2539, %v2541
        %v2543 = vrot.slane %v2139, 4
        %v2544 = vrot.slane %v2105, 4
        %v2545 = vsel %vm2096, %v2543, %v2544
        %v2546 = vrot.slane %v2104, 4
        %v2547 = vsel %vm2096, %v2544, %v2546
        %v2548 = vrot.slane %v2140, 4
        %v2549 = vrot.slane %v2108, 4
        %v2550 = vsel %vm2096, %v2548, %v2549
        %v2551 = vrot.slane %v2107, 4
        %v2552 = vsel %vm2096, %v2549, %v2551
        %v2553 = vrot.slane %v2141, 4
        %v2554 = vrot.slane %v2111, 4
        %v2555 = vsel %vm2096, %v2553, %v2554
        %v2556 = vrot.slane %v2110, 4
        %v2557 = vsel %vm2096, %v2554, %v2556
        %v2558 = vrot.slane %v2142, 4
        %v2559 = vrot.slane %v2114, 4
        %v2560 = vsel %vm2096, %v2558, %v2559
        %v2561 = vrot.slane %v2113, 4
        %v2562 = vsel %vm2096, %v2559, %v2561
        %v2563 = vrot.slane %v2143, 4
        %v2564 = vrot.slane %v2117, 4
        %v2565 = vsel %vm2096, %v2563, %v2564
        %v2566 = vrot.slane %v2116, 4
        %v2567 = vsel %vm2096, %v2564, %v2566
        %v2568 = vrot.slane %v2144, 4
        %v2569 = vrot.slane %v2120, 4
        %v2570 = vsel %vm2096, %v2568, %v2569
        %v2571 = vrot.slane %v2119, 4
        %v2572 = vsel %vm2096, %v2569, %v2571
        %s2589 = scalar_lea.vmem [#allocation5], 640
        %v2590 = vld [vmem:[%s2589] sm:$0xff]
        %v2591 = vld [vmem:[%s2589 + $0x8] sm:$0xff]
        %v2592 = vld [vmem:[%s2589 + $0x10] sm:$0xff]
        %v2593 = vld [vmem:[%s2589 + $0x18] sm:$0xff]
        %v2594 = vld [vmem:[%s2589 + $0x20] sm:$0xff]
        %v2595 = vld [vmem:[%s2589 + $0x28] sm:$0xff]
        %v2596 = vld [vmem:[%s2589 + $0x30] sm:$0xff]
        %v2597 = vld [vmem:[%s2589 + $0x38] sm:$0xff]
        %v2598 = vld [vmem:[%s2589 + $0x40] sm:$0xff]
        %v2599 = vld [vmem:[%s2589 + $0x48] sm:$0xff]
        %v2600 = vld [vmem:[%s2589 + $0x50] sm:$0xff]
        %v2601 = vld [vmem:[%s2589 + $0x58] sm:$0xff]
        %v2602 = vld [vmem:[%s2589 + $0x60] sm:$0xff]
        %v2603 = vld [vmem:[%s2589 + $0x68] sm:$0xff]
        %v2604 = vld [vmem:[%s2589 + $0x70] sm:$0xff]
        %v2605 = vld [vmem:[%s2589 + $0x78] sm:$0xff]
        %2606 = vmatprep.subr.mxu0 0.0
        %2607 = vmatpush1.msra.mxu0 %v2605
        %2608 = vmatprep.subr.mxu0 0.0
        %2609 = vmatpush1.msra.mxu0 %v2604
        %2610 = vmatprep.subr.mxu0 0.0
        %2611 = vmatpush1.msra.mxu0 %v2603
        %2612 = vmatprep.subr.mxu0 0.0
        %2613 = vmatpush1.msra.mxu0 %v2602
        %2614 = vmatprep.subr.mxu0 0.0
        %2615 = vmatpush1.msra.mxu0 %v2601
        %2616 = vmatprep.subr.mxu0 0.0
        %2617 = vmatpush1.msra.mxu0 %v2600
        %2618 = vmatprep.subr.mxu0 0.0
        %2619 = vmatpush1.msra.mxu0 %v2599
        %2620 = vmatprep.subr.mxu0 0.0
        %2621 = vmatpush1.msra.mxu0 %v2598
        %2622 = vmatprep.subr.mxu0 0.0
        %2623 = vmatpush1.msra.mxu0 %v2597
        %2624 = vmatprep.subr.mxu0 0.0
        %2625 = vmatpush1.msra.mxu0 %v2596
        %2626 = vmatprep.subr.mxu0 0.0
        %2627 = vmatpush1.msra.mxu0 %v2595
        %2628 = vmatprep.subr.mxu0 0.0
        %2629 = vmatpush1.msra.mxu0 %v2594
        %2630 = vmatprep.subr.mxu0 0.0
        %2631 = vmatpush1.msra.mxu0 %v2593
        %2632 = vmatprep.subr.mxu0 0.0
        %2633 = vmatpush1.msra.mxu0 %v2592
        %2634 = vmatprep.subr.mxu0 0.0
        %2635 = vmatpush1.msra.mxu0 %v2591
        %2636 = vmatprep.subr.mxu0 0.0
        %2637 = vmatpush1.msra.mxu0 %v2590
        %2638 = vmatprep.subr.mxu0 0.0
        %2639 = vmatpush2.msra.mxu0 0.0
        %2640 = vmatprep.subr.mxu0 0.0
        %2641 = vmatpush2.msra.mxu0 0.0
        %2642 = vmatprep.subr.mxu0 0.0
        %2643 = vmatpush2.msra.mxu0 0.0
        %2644 = vmatprep.subr.mxu0 0.0
        %2645 = vmatpush2.msra.mxu0 0.0
        %2646 = vmatprep.subr.mxu0 0.0
        %2647 = vmatpush2.msra.mxu0 0.0
        %2648 = vmatprep.subr.mxu0 0.0
        %2649 = vmatpush2.msra.mxu0 0.0
        %2650 = vmatprep.subr.mxu0 0.0
        %2651 = vmatpush2.msra.mxu0 0.0
        %2652 = vmatprep.subr.mxu0 0.0
        %2653 = vmatpush2.msra.mxu0 0.0
        %2654 = vmatprep.subr.mxu0 0.0
        %2655 = vmatpush2.msra.mxu0 0.0
        %2656 = vmatprep.subr.mxu0 0.0
        %2657 = vmatpush2.msra.mxu0 0.0
        %2658 = vmatprep.subr.mxu0 0.0
        %2659 = vmatpush2.msra.mxu0 0.0
        %2660 = vmatprep.subr.mxu0 0.0
        %2661 = vmatpush2.msra.mxu0 0.0
        %2662 = vmatprep.subr.mxu0 0.0
        %2663 = vmatpush2.msra.mxu0 0.0
        %2664 = vmatprep.subr.mxu0 0.0
        %2665 = vmatpush2.msra.mxu0 0.0
        %2666 = vmatprep.subr.mxu0 0.0
        %2667 = vmatpush2.msra.mxu0 0.0
        %2668 = vmatprep.subr.mxu0 0.0
        %2669 = vmatpush2.msra.mxu0 0.0
        %2670 = vmatprep.mubr.f32.mxu0 0.0
        %2671 = vmatmul.mubr.f32.gmra.mxu0 %v2535
        %v2672 = vpop.f32.mrf.mxu0
        %v2673 = vadd.f32 0.0, %v2672
        %v2674 = vpop.f32.mrf.mxu0
        %2675 = vmatprep.mubr.f32.mxu0 0.0
        %2676 = vmatmul.mubr.f32.gmra.mxu0 %v2537
        %v2677 = vpop.f32.mrf.mxu0
        %v2678 = vadd.f32 0.0, %v2677
        %v2679 = vpop.f32.mrf.mxu0
        %2680 = vmatprep.mubr.f32.mxu0 0.0
        %2681 = vmatmul.mubr.f32.gmra.mxu0 %v2540
        %v2682 = vpop.f32.mrf.mxu0
        %v2683 = vadd.f32 0.0, %v2682
        %v2684 = vpop.f32.mrf.mxu0
        %2685 = vmatprep.mubr.f32.mxu0 0.0
        %2686 = vmatmul.mubr.f32.gmra.mxu0 %v2542
        %v2687 = vpop.f32.mrf.mxu0
        %v2688 = vadd.f32 0.0, %v2687
        %v2689 = vpop.f32.mrf.mxu0
        %2690 = vmatprep.mubr.f32.mxu0 0.0
        %2691 = vmatmul.mubr.f32.gmra.mxu0 %v2545
        %v2692 = vpop.f32.mrf.mxu0
        %v2693 = vadd.f32 0.0, %v2692
        %v2694 = vpop.f32.mrf.mxu0
        %2695 = vmatprep.mubr.f32.mxu0 0.0
        %2696 = vmatmul.mubr.f32.gmra.mxu0 %v2547
        %v2697 = vpop.f32.mrf.mxu0
        %v2698 = vadd.f32 0.0, %v2697
        %v2699 = vpop.f32.mrf.mxu0
        %2700 = vmatprep.mubr.f32.mxu0 0.0
        %2701 = vmatmul.mubr.f32.gmra.mxu0 %v2550
        %v2702 = vpop.f32.mrf.mxu0
        %v2703 = vadd.f32 0.0, %v2702
        %v2704 = vpop.f32.mrf.mxu0
        %2705 = vmatprep.mubr.f32.mxu0 0.0
        %2706 = vmatmul.mubr.f32.gmra.mxu0 %v2552
        %v2707 = vpop.f32.mrf.mxu0
        %v2708 = vadd.f32 0.0, %v2707
        %v2709 = vpop.f32.mrf.mxu0
        %2710 = vmatprep.mubr.f32.mxu0 0.0
        %2711 = vmatmul.mubr.f32.gmra.mxu0 %v2555
        %v2712 = vpop.f32.mrf.mxu0
        %v2713 = vadd.f32 0.0, %v2712
        %v2714 = vpop.f32.mrf.mxu0
        %2715 = vmatprep.mubr.f32.mxu0 0.0
        %2716 = vmatmul.mubr.f32.gmra.mxu0 %v2557
        %v2717 = vpop.f32.mrf.mxu0
        %v2718 = vadd.f32 0.0, %v2717
        %v2719 = vpop.f32.mrf.mxu0
        %2720 = vmatprep.mubr.f32.mxu0 0.0
        %2721 = vmatmul.mubr.f32.gmra.mxu0 %v2560
        %v2722 = vpop.f32.mrf.mxu0
        %v2723 = vadd.f32 0.0, %v2722
        %v2724 = vpop.f32.mrf.mxu0
        %2725 = vmatprep.mubr.f32.mxu0 0.0
        %2726 = vmatmul.mubr.f32.gmra.mxu0 %v2562
        %v2727 = vpop.f32.mrf.mxu0
        %v2728 = vadd.f32 0.0, %v2727
        %v2729 = vpop.f32.mrf.mxu0
        %2730 = vmatprep.mubr.f32.mxu0 0.0
        %2731 = vmatmul.mubr.f32.gmra.mxu0 %v2565
        %v2732 = vpop.f32.mrf.mxu0
        %v2733 = vadd.f32 0.0, %v2732
        %v2734 = vpop.f32.mrf.mxu0
        %2735 = vmatprep.mubr.f32.mxu0 0.0
        %2736 = vmatmul.mubr.f32.gmra.mxu0 %v2567
        %v2737 = vpop.f32.mrf.mxu0
        %v2738 = vadd.f32 0.0, %v2737
        %v2739 = vpop.f32.mrf.mxu0
        %2740 = vmatprep.mubr.f32.mxu0 0.0
        %2741 = vmatmul.mubr.f32.gmra.mxu0 %v2570
        %v2742 = vpop.f32.mrf.mxu0
        %v2743 = vadd.f32 0.0, %v2742
        %v2744 = vpop.f32.mrf.mxu0
        %2745 = vmatprep.mubr.f32.mxu0 0.0
        %2746 = vmatmul.mubr.f32.gmra.mxu0 %v2572
        %v2747 = vpop.f32.mrf.mxu0
        %v2748 = vadd.f32 0.0, %v2747
        %v2749 = vpop.f32.mrf.mxu0
        %2750 = vdwg.mxu0
        %v2751 = vadd.f32 %v2455, %v2673
        %v2752 = vadd.f32 %v2460, %v2678
        %v2753 = vadd.f32 %v2465, %v2683
        %v2754 = vadd.f32 %v2470, %v2688
        %v2755 = vadd.f32 %v2475, %v2693
        %v2756 = vadd.f32 %v2480, %v2698
        %v2757 = vadd.f32 %v2485, %v2703
        %v2758 = vadd.f32 %v2490, %v2708
        %v2759 = vadd.f32 %v2495, %v2713
        %v2760 = vadd.f32 %v2500, %v2718
        %v2761 = vadd.f32 %v2505, %v2723
        %v2762 = vadd.f32 %v2510, %v2728
        %v2763 = vadd.f32 %v2515, %v2733
        %v2764 = vadd.f32 %v2520, %v2738
        %v2765 = vadd.f32 %v2525, %v2743
        %v2766 = vadd.f32 %v2530, %v2748
        %v2768 = vlaneseq
        %v2769 = vshrl.u32 %v2768, 7
        %v2770 = vsub.s32 0, %v2769
        %v2771 = vrot.slane %v2079, %v2770
        %v2773 = vadd.f32 %v2751, %v2771
        %v2774 = vadd.f32 %v2752, %v2771
        %v2775 = vadd.f32 %v2753, %v2771
        %v2776 = vadd.f32 %v2754, %v2771
        %v2777 = vadd.f32 %v2755, %v2771
        %v2778 = vadd.f32 %v2756, %v2771
        %v2779 = vadd.f32 %v2757, %v2771
        %v2780 = vadd.f32 %v2758, %v2771
        %v2781 = vadd.f32 %v2759, %v2771
        %v2782 = vadd.f32 %v2760, %v2771
        %v2783 = vadd.f32 %v2761, %v2771
        %v2784 = vadd.f32 %v2762, %v2771
        %v2785 = vadd.f32 %v2763, %v2771
        %v2786 = vadd.f32 %v2764, %v2771
        %v2787 = vadd.f32 %v2765, %v2771
        %v2788 = vadd.f32 %v2766, %v2771
        %v2789 = vmax.f32 %v2773, 0.0
        %v2790 = vmax.f32 %v2774, 0.0
        %v2791 = vmax.f32 %v2775, 0.0
        %v2792 = vmax.f32 %v2776, 0.0
        %v2793 = vmax.f32 %v2777, 0.0
        %v2794 = vmax.f32 %v2778, 0.0
        %v2795 = vmax.f32 %v2779, 0.0
        %v2796 = vmax.f32 %v2780, 0.0
        %v2797 = vmax.f32 %v2781, 0.0
        %v2798 = vmax.f32 %v2782, 0.0
        %v2799 = vmax.f32 %v2783, 0.0
        %v2800 = vmax.f32 %v2784, 0.0
        %v2801 = vmax.f32 %v2785, 0.0
        %v2802 = vmax.f32 %v2786, 0.0
        %v2803 = vmax.f32 %v2787, 0.0
        %v2804 = vmax.f32 %v2788, 0.0
        %s2805 = scalar_lea.vmem %s4, 1
        %v2806 = vld [vmem:[%s2805] sm:$0x1]
        %v2823 = vrot.slane %v2789, 4
        %v2824 = vrot.slane %v2790, 4
        %v2825 = vsel %vm2096, %v2823, %v2824
        %v2826 = vrot.slane %v2791, 4
        %v2827 = vrot.slane %v2792, 4
        %v2828 = vsel %vm2096, %v2826, %v2827
        %v2829 = vrot.slane %v2793, 4
        %v2830 = vrot.slane %v2794, 4
        %v2831 = vsel %vm2096, %v2829, %v2830
        %v2832 = vrot.slane %v2795, 4
        %v2833 = vrot.slane %v2796, 4
        %v2834 = vsel %vm2096, %v2832, %v2833
        %v2835 = vrot.slane %v2797, 4
        %v2836 = vrot.slane %v2798, 4
        %v2837 = vsel %vm2096, %v2835, %v2836
        %v2838 = vrot.slane %v2799, 4
        %v2839 = vrot.slane %v2800, 4
        %v2840 = vsel %vm2096, %v2838, %v2839
        %v2841 = vrot.slane %v2801, 4
        %v2842 = vrot.slane %v2802, 4
        %v2843 = vsel %vm2096, %v2841, %v2842
        %v2844 = vrot.slane %v2803, 4
        %v2845 = vrot.slane %v2804, 4
        %v2846 = vsel %vm2096, %v2844, %v2845
        %v2863 = vsel %vm2096, 0.0, %v2823
        %v2864 = vsel %vm2096, 0.0, %v2826
        %v2865 = vsel %vm2096, 0.0, %v2829
        %v2866 = vsel %vm2096, 0.0, %v2832
        %v2867 = vsel %vm2096, 0.0, %v2835
        %v2868 = vsel %vm2096, 0.0, %v2838
        %v2869 = vsel %vm2096, 0.0, %v2841
        %v2870 = vsel %vm2096, 0.0, %v2844
        %s2871 = scalar_lea.vmem [#allocation7], 384
        %v2872 = vld [vmem:[%s2871] sm:$0xff]
        %v2873 = vld [vmem:[%s2871 + $0x8] sm:$0xff]
        %v2874 = vld [vmem:[%s2871 + $0x10] sm:$0xff]
        %v2875 = vld [vmem:[%s2871 + $0x18] sm:$0xff]
        %v2876 = vld [vmem:[%s2871 + $0x20] sm:$0xff]
        %v2877 = vld [vmem:[%s2871 + $0x28] sm:$0xff]
        %v2878 = vld [vmem:[%s2871 + $0x30] sm:$0xff]
        %v2879 = vld [vmem:[%s2871 + $0x38] sm:$0xff]
        %v2880 = vld [vmem:[%s2871 + $0x40] sm:$0xff]
        %v2881 = vld [vmem:[%s2871 + $0x48] sm:$0xff]
        %v2882 = vld [vmem:[%s2871 + $0x50] sm:$0xff]
        %v2883 = vld [vmem:[%s2871 + $0x58] sm:$0xff]
        %v2884 = vld [vmem:[%s2871 + $0x60] sm:$0xff]
        %v2885 = vld [vmem:[%s2871 + $0x68] sm:$0xff]
        %v2886 = vld [vmem:[%s2871 + $0x70] sm:$0xff]
        %v2887 = vld [vmem:[%s2871 + $0x78] sm:$0xff]
        %v2896 = vrot.slane %v2863, 2
        %v2897 = vrot.slane %v2825, 2
        %v2898 = vsel %vm881, %v2896, %v2897
        %v2899 = vrot.slane %v2824, 2
        %v2900 = vsel %vm881, %v2897, %v2899
        %v2901 = vrot.slane %v2864, 2
        %v2902 = vrot.slane %v2828, 2
        %v2903 = vsel %vm881, %v2901, %v2902
        %v2904 = vrot.slane %v2827, 2
        %v2905 = vsel %vm881, %v2902, %v2904
        %v2906 = vrot.slane %v2865, 2
        %v2907 = vrot.slane %v2831, 2
        %v2908 = vsel %vm881, %v2906, %v2907
        %v2909 = vrot.slane %v2830, 2
        %v2910 = vsel %vm881, %v2907, %v2909
        %v2911 = vrot.slane %v2866, 2
        %v2912 = vrot.slane %v2834, 2
        %v2913 = vsel %vm881, %v2911, %v2912
        %v2914 = vrot.slane %v2833, 2
        %v2915 = vsel %vm881, %v2912, %v2914
        %v2916 = vrot.slane %v2867, 2
        %v2917 = vrot.slane %v2837, 2
        %v2918 = vsel %vm881, %v2916, %v2917
        %v2919 = vrot.slane %v2836, 2
        %v2920 = vsel %vm881, %v2917, %v2919
        %v2921 = vrot.slane %v2868, 2
        %v2922 = vrot.slane %v2840, 2
        %v2923 = vsel %vm881, %v2921, %v2922
        %v2924 = vrot.slane %v2839, 2
        %v2925 = vsel %vm881, %v2922, %v2924
        %v2926 = vrot.slane %v2869, 2
        %v2927 = vrot.slane %v2843, 2
        %v2928 = vsel %vm881, %v2926, %v2927
        %v2929 = vrot.slane %v2842, 2
        %v2930 = vsel %vm881, %v2927, %v2929
        %v2931 = vrot.slane %v2870, 2
        %v2932 = vrot.slane %v2846, 2
        %v2933 = vsel %vm881, %v2931, %v2932
        %v2934 = vrot.slane %v2845, 2
        %v2935 = vsel %vm881, %v2932, %v2934
        %s2952 = scalar_lea.vmem [#allocation7], 512
        %v2953 = vld [vmem:[%s2952] sm:$0xff]
        %v2954 = vld [vmem:[%s2952 + $0x8] sm:$0xff]
        %v2955 = vld [vmem:[%s2952 + $0x10] sm:$0xff]
        %v2956 = vld [vmem:[%s2952 + $0x18] sm:$0xff]
        %v2957 = vld [vmem:[%s2952 + $0x20] sm:$0xff]
        %v2958 = vld [vmem:[%s2952 + $0x28] sm:$0xff]
        %v2959 = vld [vmem:[%s2952 + $0x30] sm:$0xff]
        %v2960 = vld [vmem:[%s2952 + $0x38] sm:$0xff]
        %v2961 = vld [vmem:[%s2952 + $0x40] sm:$0xff]
        %v2962 = vld [vmem:[%s2952 + $0x48] sm:$0xff]
        %v2963 = vld [vmem:[%s2952 + $0x50] sm:$0xff]
        %v2964 = vld [vmem:[%s2952 + $0x58] sm:$0xff]
        %v2965 = vld [vmem:[%s2952 + $0x60] sm:$0xff]
        %v2966 = vld [vmem:[%s2952 + $0x68] sm:$0xff]
        %v2967 = vld [vmem:[%s2952 + $0x70] sm:$0xff]
        %v2968 = vld [vmem:[%s2952 + $0x78] sm:$0xff]
        %2969 = vmatprep.subr.mxu0 0.0
        %2970 = vmatpush1.msra.mxu0 %v2968
        %2971 = vmatprep.subr.mxu0 0.0
        %2972 = vmatpush1.msra.mxu0 %v2967
        %2973 = vmatprep.subr.mxu0 0.0
        %2974 = vmatpush1.msra.mxu0 %v2966
        %2975 = vmatprep.subr.mxu0 0.0
        %2976 = vmatpush1.msra.mxu0 %v2965
        %2977 = vmatprep.subr.mxu0 0.0
        %2978 = vmatpush1.msra.mxu0 %v2964
        %2979 = vmatprep.subr.mxu0 0.0
        %2980 = vmatpush1.msra.mxu0 %v2963
        %2981 = vmatprep.subr.mxu0 0.0
        %2982 = vmatpush1.msra.mxu0 %v2962
        %2983 = vmatprep.subr.mxu0 0.0
        %2984 = vmatpush1.msra.mxu0 %v2961
        %2985 = vmatprep.subr.mxu0 0.0
        %2986 = vmatpush1.msra.mxu0 %v2960
        %2987 = vmatprep.subr.mxu0 0.0
        %2988 = vmatpush1.msra.mxu0 %v2959
        %2989 = vmatprep.subr.mxu0 0.0
        %2990 = vmatpush1.msra.mxu0 %v2958
        %2991 = vmatprep.subr.mxu0 0.0
        %2992 = vmatpush1.msra.mxu0 %v2957
        %2993 = vmatprep.subr.mxu0 0.0
        %2994 = vmatpush1.msra.mxu0 %v2956
        %2995 = vmatprep.subr.mxu0 0.0
        %2996 = vmatpush1.msra.mxu0 %v2955
        %2997 = vmatprep.subr.mxu0 0.0
        %2998 = vmatpush1.msra.mxu0 %v2954
        %2999 = vmatprep.subr.mxu0 0.0
        %3000 = vmatpush1.msra.mxu0 %v2953
        %3001 = vmatprep.subr.mxu0 0.0
        %3002 = vmatpush2.msra.mxu0 0.0
        %3003 = vmatprep.subr.mxu0 0.0
        %3004 = vmatpush2.msra.mxu0 0.0
        %3005 = vmatprep.subr.mxu0 0.0
        %3006 = vmatpush2.msra.mxu0 0.0
        %3007 = vmatprep.subr.mxu0 0.0
        %3008 = vmatpush2.msra.mxu0 0.0
        %3009 = vmatprep.subr.mxu0 0.0
        %3010 = vmatpush2.msra.mxu0 0.0
        %3011 = vmatprep.subr.mxu0 0.0
        %3012 = vmatpush2.msra.mxu0 0.0
        %3013 = vmatprep.subr.mxu0 0.0
        %3014 = vmatpush2.msra.mxu0 0.0
        %3015 = vmatprep.subr.mxu0 0.0
        %3016 = vmatpush2.msra.mxu0 0.0
        %3017 = vmatprep.subr.mxu0 0.0
        %3018 = vmatpush2.msra.mxu0 0.0
        %3019 = vmatprep.subr.mxu0 0.0
        %3020 = vmatpush2.msra.mxu0 0.0
        %3021 = vmatprep.subr.mxu0 0.0
        %3022 = vmatpush2.msra.mxu0 0.0
        %3023 = vmatprep.subr.mxu0 0.0
        %3024 = vmatpush2.msra.mxu0 0.0
        %3025 = vmatprep.subr.mxu0 0.0
        %3026 = vmatpush2.msra.mxu0 0.0
        %3027 = vmatprep.subr.mxu0 0.0
        %3028 = vmatpush2.msra.mxu0 0.0
        %3029 = vmatprep.subr.mxu0 0.0
        %3030 = vmatpush2.msra.mxu0 0.0
        %3031 = vmatprep.subr.mxu0 0.0
        %3032 = vmatpush2.msra.mxu0 0.0
        %3033 = vmatprep.mubr.f32.mxu0 0.0
        %3034 = vmatmul.mubr.f32.gmra.mxu0 %v2898
        %v3035 = vpop.f32.mrf.mxu0
        %v3036 = vpop.f32.mrf.mxu0
        %3037 = vmatprep.mubr.f32.mxu0 0.0
        %3038 = vmatmul.mubr.f32.gmra.mxu0 %v2900
        %v3039 = vpop.f32.mrf.mxu0
        %v3040 = vadd.f32 0.0, %v3039
        %v3041 = vpop.f32.mrf.mxu0
        %3042 = vmatprep.mubr.f32.mxu0 0.0
        %3043 = vmatmul.mubr.f32.gmra.mxu0 %v2903
        %v3044 = vpop.f32.mrf.mxu0
        %v3045 = vpop.f32.mrf.mxu0
        %3046 = vmatprep.mubr.f32.mxu0 0.0
        %3047 = vmatmul.mubr.f32.gmra.mxu0 %v2905
        %v3048 = vpop.f32.mrf.mxu0
        %v3049 = vadd.f32 0.0, %v3048
        %v3050 = vpop.f32.mrf.mxu0
        %3051 = vmatprep.mubr.f32.mxu0 0.0
        %3052 = vmatmul.mubr.f32.gmra.mxu0 %v2908
        %v3053 = vpop.f32.mrf.mxu0
        %v3054 = vpop.f32.mrf.mxu0
        %3055 = vmatprep.mubr.f32.mxu0 0.0
        %3056 = vmatmul.mubr.f32.gmra.mxu0 %v2910
        %v3057 = vpop.f32.mrf.mxu0
        %v3058 = vadd.f32 0.0, %v3057
        %v3059 = vpop.f32.mrf.mxu0
        %3060 = vmatprep.mubr.f32.mxu0 0.0
        %3061 = vmatmul.mubr.f32.gmra.mxu0 %v2913
        %v3062 = vpop.f32.mrf.mxu0
        %v3063 = vpop.f32.mrf.mxu0
        %3064 = vmatprep.mubr.f32.mxu0 0.0
        %3065 = vmatmul.mubr.f32.gmra.mxu0 %v2915
        %v3066 = vpop.f32.mrf.mxu0
        %v3067 = vadd.f32 0.0, %v3066
        %v3068 = vpop.f32.mrf.mxu0
        %3069 = vmatprep.mubr.f32.mxu0 0.0
        %3070 = vmatmul.mubr.f32.gmra.mxu0 %v2918
        %v3071 = vpop.f32.mrf.mxu0
        %v3072 = vpop.f32.mrf.mxu0
        %3073 = vmatprep.mubr.f32.mxu0 0.0
        %3074 = vmatmul.mubr.f32.gmra.mxu0 %v2920
        %v3075 = vpop.f32.mrf.mxu0
        %v3076 = vadd.f32 0.0, %v3075
        %v3077 = vpop.f32.mrf.mxu0
        %3078 = vmatprep.mubr.f32.mxu0 0.0
        %3079 = vmatmul.mubr.f32.gmra.mxu0 %v2923
        %v3080 = vpop.f32.mrf.mxu0
        %v3081 = vpop.f32.mrf.mxu0
        %3082 = vmatprep.mubr.f32.mxu0 0.0
        %3083 = vmatmul.mubr.f32.gmra.mxu0 %v2925
        %v3084 = vpop.f32.mrf.mxu0
        %v3085 = vadd.f32 0.0, %v3084
        %v3086 = vpop.f32.mrf.mxu0
        %3087 = vmatprep.mubr.f32.mxu0 0.0
        %3088 = vmatmul.mubr.f32.gmra.mxu0 %v2928
        %v3089 = vpop.f32.mrf.mxu0
        %v3090 = vpop.f32.mrf.mxu0
        %3091 = vmatprep.mubr.f32.mxu0 0.0
        %3092 = vmatmul.mubr.f32.gmra.mxu0 %v2930
        %v3093 = vpop.f32.mrf.mxu0
        %v3094 = vadd.f32 0.0, %v3093
        %v3095 = vpop.f32.mrf.mxu0
        %3096 = vmatprep.mubr.f32.mxu0 0.0
        %3097 = vmatmul.mubr.f32.gmra.mxu0 %v2933
        %v3098 = vpop.f32.mrf.mxu0
        %v3099 = vpop.f32.mrf.mxu0
        %3100 = vmatprep.mubr.f32.mxu0 0.0
        %3101 = vmatmul.mubr.f32.gmra.mxu0 %v2935
        %v3102 = vpop.f32.mrf.mxu0
        %v3103 = vadd.f32 0.0, %v3102
        %v3104 = vpop.f32.mrf.mxu0
        %3105 = vdwg.mxu0
        %3106 = vmatprep.subr.mxu0 0.0
        %3107 = vmatpush1.msra.mxu0 %v2887
        %3108 = vmatprep.subr.mxu0 0.0
        %3109 = vmatpush1.msra.mxu0 %v2886
        %3110 = vmatprep.subr.mxu0 0.0
        %3111 = vmatpush1.msra.mxu0 %v2885
        %3112 = vmatprep.subr.mxu0 0.0
        %3113 = vmatpush1.msra.mxu0 %v2884
        %3114 = vmatprep.subr.mxu0 0.0
        %3115 = vmatpush1.msra.mxu0 %v2883
        %3116 = vmatprep.subr.mxu0 0.0
        %3117 = vmatpush1.msra.mxu0 %v2882
        %3118 = vmatprep.subr.mxu0 0.0
        %3119 = vmatpush1.msra.mxu0 %v2881
        %3120 = vmatprep.subr.mxu0 0.0
        %3121 = vmatpush1.msra.mxu0 %v2880
        %3122 = vmatprep.subr.mxu0 0.0
        %3123 = vmatpush1.msra.mxu0 %v2879
        %3124 = vmatprep.subr.mxu0 0.0
        %3125 = vmatpush1.msra.mxu0 %v2878
        %3126 = vmatprep.subr.mxu0 0.0
        %3127 = vmatpush1.msra.mxu0 %v2877
        %3128 = vmatprep.subr.mxu0 0.0
        %3129 = vmatpush1.msra.mxu0 %v2876
        %3130 = vmatprep.subr.mxu0 0.0
        %3131 = vmatpush1.msra.mxu0 %v2875
        %3132 = vmatprep.subr.mxu0 0.0
        %3133 = vmatpush1.msra.mxu0 %v2874
        %3134 = vmatprep.subr.mxu0 0.0
        %3135 = vmatpush1.msra.mxu0 %v2873
        %3136 = vmatprep.subr.mxu0 0.0
        %3137 = vmatpush1.msra.mxu0 %v2872
        %3138 = vmatprep.subr.mxu0 0.0
        %3139 = vmatpush2.msra.mxu0 0.0
        %3140 = vmatprep.subr.mxu0 0.0
        %3141 = vmatpush2.msra.mxu0 0.0
        %3142 = vmatprep.subr.mxu0 0.0
        %3143 = vmatpush2.msra.mxu0 0.0
        %3144 = vmatprep.subr.mxu0 0.0
        %3145 = vmatpush2.msra.mxu0 0.0
        %3146 = vmatprep.subr.mxu0 0.0
        %3147 = vmatpush2.msra.mxu0 0.0
        %3148 = vmatprep.subr.mxu0 0.0
        %3149 = vmatpush2.msra.mxu0 0.0
        %3150 = vmatprep.subr.mxu0 0.0
        %3151 = vmatpush2.msra.mxu0 0.0
        %3152 = vmatprep.subr.mxu0 0.0
        %3153 = vmatpush2.msra.mxu0 0.0
        %3154 = vmatprep.subr.mxu0 0.0
        %3155 = vmatpush2.msra.mxu0 0.0
        %3156 = vmatprep.subr.mxu0 0.0
        %3157 = vmatpush2.msra.mxu0 0.0
        %3158 = vmatprep.subr.mxu0 0.0
        %3159 = vmatpush2.msra.mxu0 0.0
        %3160 = vmatprep.subr.mxu0 0.0
        %3161 = vmatpush2.msra.mxu0 0.0
        %3162 = vmatprep.subr.mxu0 0.0
        %3163 = vmatpush2.msra.mxu0 0.0
        %3164 = vmatprep.subr.mxu0 0.0
        %3165 = vmatpush2.msra.mxu0 0.0
        %3166 = vmatprep.subr.mxu0 0.0
        %3167 = vmatpush2.msra.mxu0 0.0
        %3168 = vmatprep.subr.mxu0 0.0
        %3169 = vmatpush2.msra.mxu0 0.0
        %3170 = vmatprep.mubr.f32.mxu0 0.0
        %3171 = vmatmul.mubr.f32.gmra.mxu0 %v2863
        %v3172 = vpop.f32.mrf.mxu0
        %v3173 = vpop.f32.mrf.mxu0
        %3174 = vmatprep.mubr.f32.mxu0 0.0
        %3175 = vmatmul.mubr.f32.gmra.mxu0 %v2825
        %v3176 = vpop.f32.mrf.mxu0
        %v3177 = vadd.f32 %v3040, %v3176
        %v3178 = vpop.f32.mrf.mxu0
        %3179 = vmatprep.mubr.f32.mxu0 0.0
        %3180 = vmatmul.mubr.f32.gmra.mxu0 %v2864
        %v3181 = vpop.f32.mrf.mxu0
        %v3182 = vpop.f32.mrf.mxu0
        %3183 = vmatprep.mubr.f32.mxu0 0.0
        %3184 = vmatmul.mubr.f32.gmra.mxu0 %v2828
        %v3185 = vpop.f32.mrf.mxu0
        %v3186 = vadd.f32 %v3049, %v3185
        %v3187 = vpop.f32.mrf.mxu0
        %3188 = vmatprep.mubr.f32.mxu0 0.0
        %3189 = vmatmul.mubr.f32.gmra.mxu0 %v2865
        %v3190 = vpop.f32.mrf.mxu0
        %v3191 = vpop.f32.mrf.mxu0
        %3192 = vmatprep.mubr.f32.mxu0 0.0
        %3193 = vmatmul.mubr.f32.gmra.mxu0 %v2831
        %v3194 = vpop.f32.mrf.mxu0
        %v3195 = vadd.f32 %v3058, %v3194
        %v3196 = vpop.f32.mrf.mxu0
        %3197 = vmatprep.mubr.f32.mxu0 0.0
        %3198 = vmatmul.mubr.f32.gmra.mxu0 %v2866
        %v3199 = vpop.f32.mrf.mxu0
        %v3200 = vpop.f32.mrf.mxu0
        %3201 = vmatprep.mubr.f32.mxu0 0.0
        %3202 = vmatmul.mubr.f32.gmra.mxu0 %v2834
        %v3203 = vpop.f32.mrf.mxu0
        %v3204 = vadd.f32 %v3067, %v3203
        %v3205 = vpop.f32.mrf.mxu0
        %3206 = vmatprep.mubr.f32.mxu0 0.0
        %3207 = vmatmul.mubr.f32.gmra.mxu0 %v2867
        %v3208 = vpop.f32.mrf.mxu0
        %v3209 = vpop.f32.mrf.mxu0
        %3210 = vmatprep.mubr.f32.mxu0 0.0
        %3211 = vmatmul.mubr.f32.gmra.mxu0 %v2837
        %v3212 = vpop.f32.mrf.mxu0
        %v3213 = vadd.f32 %v3076, %v3212
        %v3214 = vpop.f32.mrf.mxu0
        %3215 = vmatprep.mubr.f32.mxu0 0.0
        %3216 = vmatmul.mubr.f32.gmra.mxu0 %v2868
        %v3217 = vpop.f32.mrf.mxu0
        %v3218 = vpop.f32.mrf.mxu0
        %3219 = vmatprep.mubr.f32.mxu0 0.0
        %3220 = vmatmul.mubr.f32.gmra.mxu0 %v2840
        %v3221 = vpop.f32.mrf.mxu0
        %v3222 = vadd.f32 %v3085, %v3221
        %v3223 = vpop.f32.mrf.mxu0
        %3224 = vmatprep.mubr.f32.mxu0 0.0
        %3225 = vmatmul.mubr.f32.gmra.mxu0 %v2869
        %v3226 = vpop.f32.mrf.mxu0
        %v3227 = vpop.f32.mrf.mxu0
        %3228 = vmatprep.mubr.f32.mxu0 0.0
        %3229 = vmatmul.mubr.f32.gmra.mxu0 %v2843
        %v3230 = vpop.f32.mrf.mxu0
        %v3231 = vadd.f32 %v3094, %v3230
        %v3232 = vpop.f32.mrf.mxu0
        %3233 = vmatprep.mubr.f32.mxu0 0.0
        %3234 = vmatmul.mubr.f32.gmra.mxu0 %v2870
        %v3235 = vpop.f32.mrf.mxu0
        %v3236 = vpop.f32.mrf.mxu0
        %3237 = vmatprep.mubr.f32.mxu0 0.0
        %3238 = vmatmul.mubr.f32.gmra.mxu0 %v2846
        %v3239 = vpop.f32.mrf.mxu0
        %v3240 = vadd.f32 %v3103, %v3239
        %v3241 = vpop.f32.mrf.mxu0
        %3242 = vdwg.mxu0
        %v3243 = vrot.slane %v2863, 4
        %v3244 = vrot.slane %v2825, 4
        %v3245 = vsel %vm2096, %v3243, %v3244
        %v3246 = vrot.slane %v2824, 4
        %v3247 = vsel %vm2096, %v3244, %v3246
        %v3248 = vrot.slane %v2864, 4
        %v3249 = vrot.slane %v2828, 4
        %v3250 = vsel %vm2096, %v3248, %v3249
        %v3251 = vrot.slane %v2827, 4
        %v3252 = vsel %vm2096, %v3249, %v3251
        %v3253 = vrot.slane %v2865, 4
        %v3254 = vrot.slane %v2831, 4
        %v3255 = vsel %vm2096, %v3253, %v3254
        %v3256 = vrot.slane %v2830, 4
        %v3257 = vsel %vm2096, %v3254, %v3256
        %v3258 = vrot.slane %v2866, 4
        %v3259 = vrot.slane %v2834, 4
        %v3260 = vsel %vm2096, %v3258, %v3259
        %v3261 = vrot.slane %v2833, 4
        %v3262 = vsel %vm2096, %v3259, %v3261
        %v3263 = vrot.slane %v2867, 4
        %v3264 = vrot.slane %v2837, 4
        %v3265 = vsel %vm2096, %v3263, %v3264
        %v3266 = vrot.slane %v2836, 4
        %v3267 = vsel %vm2096, %v3264, %v3266
        %v3268 = vrot.slane %v2868, 4
        %v3269 = vrot.slane %v2840, 4
        %v3270 = vsel %vm2096, %v3268, %v3269
        %v3271 = vrot.slane %v2839, 4
        %v3272 = vsel %vm2096, %v3269, %v3271
        %v3273 = vrot.slane %v2869, 4
        %v3274 = vrot.slane %v2843, 4
        %v3275 = vsel %vm2096, %v3273, %v3274
        %v3276 = vrot.slane %v2842, 4
        %v3277 = vsel %vm2096, %v3274, %v3276
        %v3278 = vrot.slane %v2870, 4
        %v3279 = vrot.slane %v2846, 4
        %v3280 = vsel %vm2096, %v3278, %v3279
        %v3281 = vrot.slane %v2845, 4
        %v3282 = vsel %vm2096, %v3279, %v3281
        %s3299 = scalar_lea.vmem [#allocation7], 640
        %v3300 = vld [vmem:[%s3299] sm:$0xff]
        %v3301 = vld [vmem:[%s3299 + $0x8] sm:$0xff]
        %v3302 = vld [vmem:[%s3299 + $0x10] sm:$0xff]
        %v3303 = vld [vmem:[%s3299 + $0x18] sm:$0xff]
        %v3304 = vld [vmem:[%s3299 + $0x20] sm:$0xff]
        %v3305 = vld [vmem:[%s3299 + $0x28] sm:$0xff]
        %v3306 = vld [vmem:[%s3299 + $0x30] sm:$0xff]
        %v3307 = vld [vmem:[%s3299 + $0x38] sm:$0xff]
        %v3308 = vld [vmem:[%s3299 + $0x40] sm:$0xff]
        %v3309 = vld [vmem:[%s3299 + $0x48] sm:$0xff]
        %v3310 = vld [vmem:[%s3299 + $0x50] sm:$0xff]
        %v3311 = vld [vmem:[%s3299 + $0x58] sm:$0xff]
        %v3312 = vld [vmem:[%s3299 + $0x60] sm:$0xff]
        %v3313 = vld [vmem:[%s3299 + $0x68] sm:$0xff]
        %v3314 = vld [vmem:[%s3299 + $0x70] sm:$0xff]
        %v3315 = vld [vmem:[%s3299 + $0x78] sm:$0xff]
        %3316 = vmatprep.subr.mxu0 0.0
        %3317 = vmatpush1.msra.mxu0 %v3315
        %3318 = vmatprep.subr.mxu0 0.0
        %3319 = vmatpush1.msra.mxu0 %v3314
        %3320 = vmatprep.subr.mxu0 0.0
        %3321 = vmatpush1.msra.mxu0 %v3313
        %3322 = vmatprep.subr.mxu0 0.0
        %3323 = vmatpush1.msra.mxu0 %v3312
        %3324 = vmatprep.subr.mxu0 0.0
        %3325 = vmatpush1.msra.mxu0 %v3311
        %3326 = vmatprep.subr.mxu0 0.0
        %3327 = vmatpush1.msra.mxu0 %v3310
        %3328 = vmatprep.subr.mxu0 0.0
        %3329 = vmatpush1.msra.mxu0 %v3309
        %3330 = vmatprep.subr.mxu0 0.0
        %3331 = vmatpush1.msra.mxu0 %v3308
        %3332 = vmatprep.subr.mxu0 0.0
        %3333 = vmatpush1.msra.mxu0 %v3307
        %3334 = vmatprep.subr.mxu0 0.0
        %3335 = vmatpush1.msra.mxu0 %v3306
        %3336 = vmatprep.subr.mxu0 0.0
        %3337 = vmatpush1.msra.mxu0 %v3305
        %3338 = vmatprep.subr.mxu0 0.0
        %3339 = vmatpush1.msra.mxu0 %v3304
        %3340 = vmatprep.subr.mxu0 0.0
        %3341 = vmatpush1.msra.mxu0 %v3303
        %3342 = vmatprep.subr.mxu0 0.0
        %3343 = vmatpush1.msra.mxu0 %v3302
        %3344 = vmatprep.subr.mxu0 0.0
        %3345 = vmatpush1.msra.mxu0 %v3301
        %3346 = vmatprep.subr.mxu0 0.0
        %3347 = vmatpush1.msra.mxu0 %v3300
        %3348 = vmatprep.subr.mxu0 0.0
        %3349 = vmatpush2.msra.mxu0 0.0
        %3350 = vmatprep.subr.mxu0 0.0
        %3351 = vmatpush2.msra.mxu0 0.0
        %3352 = vmatprep.subr.mxu0 0.0
        %3353 = vmatpush2.msra.mxu0 0.0
        %3354 = vmatprep.subr.mxu0 0.0
        %3355 = vmatpush2.msra.mxu0 0.0
        %3356 = vmatprep.subr.mxu0 0.0
        %3357 = vmatpush2.msra.mxu0 0.0
        %3358 = vmatprep.subr.mxu0 0.0
        %3359 = vmatpush2.msra.mxu0 0.0
        %3360 = vmatprep.subr.mxu0 0.0
        %3361 = vmatpush2.msra.mxu0 0.0
        %3362 = vmatprep.subr.mxu0 0.0
        %3363 = vmatpush2.msra.mxu0 0.0
        %3364 = vmatprep.subr.mxu0 0.0
        %3365 = vmatpush2.msra.mxu0 0.0
        %3366 = vmatprep.subr.mxu0 0.0
        %3367 = vmatpush2.msra.mxu0 0.0
        %3368 = vmatprep.subr.mxu0 0.0
        %3369 = vmatpush2.msra.mxu0 0.0
        %3370 = vmatprep.subr.mxu0 0.0
        %3371 = vmatpush2.msra.mxu0 0.0
        %3372 = vmatprep.subr.mxu0 0.0
        %3373 = vmatpush2.msra.mxu0 0.0
        %3374 = vmatprep.subr.mxu0 0.0
        %3375 = vmatpush2.msra.mxu0 0.0
        %3376 = vmatprep.subr.mxu0 0.0
        %3377 = vmatpush2.msra.mxu0 0.0
        %3378 = vmatprep.subr.mxu0 0.0
        %3379 = vmatpush2.msra.mxu0 0.0
        %3380 = vmatprep.mubr.f32.mxu0 0.0
        %3381 = vmatmul.mubr.f32.gmra.mxu0 %v3245
        %v3382 = vpop.f32.mrf.mxu0
        %v3383 = vpop.f32.mrf.mxu0
        %3384 = vmatprep.mubr.f32.mxu0 0.0
        %3385 = vmatmul.mubr.f32.gmra.mxu0 %v3247
        %v3386 = vpop.f32.mrf.mxu0
        %v3387 = vadd.f32 0.0, %v3386
        %v3388 = vpop.f32.mrf.mxu0
        %3389 = vmatprep.mubr.f32.mxu0 0.0
        %3390 = vmatmul.mubr.f32.gmra.mxu0 %v3250
        %v3391 = vpop.f32.mrf.mxu0
        %v3392 = vpop.f32.mrf.mxu0
        %3393 = vmatprep.mubr.f32.mxu0 0.0
        %3394 = vmatmul.mubr.f32.gmra.mxu0 %v3252
        %v3395 = vpop.f32.mrf.mxu0
        %v3396 = vadd.f32 0.0, %v3395
        %v3397 = vpop.f32.mrf.mxu0
        %3398 = vmatprep.mubr.f32.mxu0 0.0
        %3399 = vmatmul.mubr.f32.gmra.mxu0 %v3255
        %v3400 = vpop.f32.mrf.mxu0
        %v3401 = vpop.f32.mrf.mxu0
        %3402 = vmatprep.mubr.f32.mxu0 0.0
        %3403 = vmatmul.mubr.f32.gmra.mxu0 %v3257
        %v3404 = vpop.f32.mrf.mxu0
        %v3405 = vadd.f32 0.0, %v3404
        %v3406 = vpop.f32.mrf.mxu0
        %3407 = vmatprep.mubr.f32.mxu0 0.0
        %3408 = vmatmul.mubr.f32.gmra.mxu0 %v3260
        %v3409 = vpop.f32.mrf.mxu0
        %v3410 = vpop.f32.mrf.mxu0
        %3411 = vmatprep.mubr.f32.mxu0 0.0
        %3412 = vmatmul.mubr.f32.gmra.mxu0 %v3262
        %v3413 = vpop.f32.mrf.mxu0
        %v3414 = vadd.f32 0.0, %v3413
        %v3415 = vpop.f32.mrf.mxu0
        %3416 = vmatprep.mubr.f32.mxu0 0.0
        %3417 = vmatmul.mubr.f32.gmra.mxu0 %v3265
        %v3418 = vpop.f32.mrf.mxu0
        %v3419 = vpop.f32.mrf.mxu0
        %3420 = vmatprep.mubr.f32.mxu0 0.0
        %3421 = vmatmul.mubr.f32.gmra.mxu0 %v3267
        %v3422 = vpop.f32.mrf.mxu0
        %v3423 = vadd.f32 0.0, %v3422
        %v3424 = vpop.f32.mrf.mxu0
        %3425 = vmatprep.mubr.f32.mxu0 0.0
        %3426 = vmatmul.mubr.f32.gmra.mxu0 %v3270
        %v3427 = vpop.f32.mrf.mxu0
        %v3428 = vpop.f32.mrf.mxu0
        %3429 = vmatprep.mubr.f32.mxu0 0.0
        %3430 = vmatmul.mubr.f32.gmra.mxu0 %v3272
        %v3431 = vpop.f32.mrf.mxu0
        %v3432 = vadd.f32 0.0, %v3431
        %v3433 = vpop.f32.mrf.mxu0
        %3434 = vmatprep.mubr.f32.mxu0 0.0
        %3435 = vmatmul.mubr.f32.gmra.mxu0 %v3275
        %v3436 = vpop.f32.mrf.mxu0
        %v3437 = vpop.f32.mrf.mxu0
        %3438 = vmatprep.mubr.f32.mxu0 0.0
        %3439 = vmatmul.mubr.f32.gmra.mxu0 %v3277
        %v3440 = vpop.f32.mrf.mxu0
        %v3441 = vadd.f32 0.0, %v3440
        %v3442 = vpop.f32.mrf.mxu0
        %3443 = vmatprep.mubr.f32.mxu0 0.0
        %3444 = vmatmul.mubr.f32.gmra.mxu0 %v3280
        %v3445 = vpop.f32.mrf.mxu0
        %v3446 = vpop.f32.mrf.mxu0
        %3447 = vmatprep.mubr.f32.mxu0 0.0
        %3448 = vmatmul.mubr.f32.gmra.mxu0 %v3282
        %v3449 = vpop.f32.mrf.mxu0
        %v3450 = vadd.f32 0.0, %v3449
        %v3451 = vpop.f32.mrf.mxu0
        %3452 = vdwg.mxu0
        %v3453 = vadd.f32 %v3177, %v3387
        %v3454 = vadd.f32 %v3186, %v3396
        %v3455 = vadd.f32 %v3195, %v3405
        %v3456 = vadd.f32 %v3204, %v3414
        %v3457 = vadd.f32 %v3213, %v3423
        %v3458 = vadd.f32 %v3222, %v3432
        %v3459 = vadd.f32 %v3231, %v3441
        %v3460 = vadd.f32 %v3240, %v3450
        %v3462 = vlaneseq
        %v3463 = vshrl.u32 %v3462, 7
        %v3464 = vsub.s32 0, %v3463
        %v3465 = vrot.slane %v2806, %v3464
        %v3467 = vadd.f32 %v3453, %v3465
        %v3468 = vadd.f32 %v3454, %v3465
        %v3469 = vadd.f32 %v3455, %v3465
        %v3470 = vadd.f32 %v3456, %v3465
        %v3471 = vadd.f32 %v3457, %v3465
        %v3472 = vadd.f32 %v3458, %v3465
        %v3473 = vadd.f32 %v3459, %v3465
        %v3474 = vadd.f32 %v3460, %v3465
        %v3475 = vmax.f32 %v3467, 0.0
        %v3476 = vmax.f32 %v3468, 0.0
        %v3477 = vmax.f32 %v3469, 0.0
        %v3478 = vmax.f32 %v3470, 0.0
        %v3479 = vmax.f32 %v3471, 0.0
        %v3480 = vmax.f32 %v3472, 0.0
        %v3481 = vmax.f32 %v3473, 0.0
        %v3482 = vmax.f32 %v3474, 0.0
        %v3483 = vadd.f32 %v3475, %v2063
        %v3484 = vadd.f32 %v3476, %v2065
        %v3485 = vadd.f32 %v3477, %v2067
        %v3486 = vadd.f32 %v3478, %v2069
        %v3487 = vadd.f32 %v3479, %v2071
        %v3488 = vadd.f32 %v3480, %v2073
        %v3489 = vadd.f32 %v3481, %v2075
        %v3490 = vadd.f32 %v3482, %v2077
        %v3491 = vmax.f32 %v3483, 0.0
        %v3492 = vmax.f32 %v3484, 0.0
        %v3493 = vmax.f32 %v3485, 0.0
        %v3494 = vmax.f32 %v3486, 0.0
        %v3495 = vmax.f32 %v3487, 0.0
        %v3496 = vmax.f32 %v3488, 0.0
        %v3497 = vmax.f32 %v3489, 0.0
        %v3498 = vmax.f32 %v3490, 0.0
        %v3499 = vld [vmem:[#allocation10] sm:$0xff]
        %v3500 = vld [vmem:[#allocation10 + $0x8] sm:$0xff]
        %v3501 = vld [vmem:[#allocation10 + $0x10] sm:$0xff]
        %v3502 = vld [vmem:[#allocation10 + $0x18] sm:$0xff]
        %v3503 = vld [vmem:[#allocation10 + $0x20] sm:$0xff]
        %v3504 = vld [vmem:[#allocation10 + $0x28] sm:$0xff]
        %v3505 = vld [vmem:[#allocation10 + $0x30] sm:$0xff]
        %v3506 = vld [vmem:[#allocation10 + $0x38] sm:$0xff]
        %v3507 = vld [vmem:[#allocation10 + $0x40] sm:$0xff]
        %v3508 = vld [vmem:[#allocation10 + $0x48] sm:$0xff]
        %v3509 = vld [vmem:[#allocation10 + $0x50] sm:$0xff]
        %v3510 = vld [vmem:[#allocation10 + $0x58] sm:$0xff]
        %v3511 = vld [vmem:[#allocation10 + $0x60] sm:$0xff]
        %v3512 = vld [vmem:[#allocation10 + $0x68] sm:$0xff]
        %v3513 = vld [vmem:[#allocation10 + $0x70] sm:$0xff]
        %v3514 = vld [vmem:[#allocation10 + $0x78] sm:$0xff]
        %v3515 = vld [vmem:[%s8] sm:$0x1]
        %v3517 = vlaneseq
        %v3518 = vshrl.u32 %v3517, 7
        %v3519 = vsub.s32 0, %v3518
        %v3520 = vrot.slane %v3515, %v3519
        %v3530 = vrot.slane %v3491, 7
        %v3531 = vrot.slane %v3492, 6
        %vm3532 = vcmask 1041409
        %v3533 = vsel %vm3532, %v3531, %v3530
        %v3534 = vrot.slane %v3493, 5
        %vm3535 = vcmask 1042434
        %v3536 = vsel %vm3535, %v3534, %v3533
        %v3537 = vrot.slane %v3494, 4
        %vm3538 = vcmask 1043459
        %v3539 = vsel %vm3538, %v3537, %v3536
        %v3540 = vrot.slane %v3495, 3
        %vm3541 = vcmask 1044484
        %v3542 = vsel %vm3541, %v3540, %v3539
        %v3543 = vrot.slane %v3496, 2
        %vm3544 = vcmask 1045509
        %v3545 = vsel %vm3544, %v3543, %v3542
        %v3546 = vrot.slane %v3497, 1
        %vm3547 = vcmask 1046534
        %v3548 = vsel %vm3547, %v3546, %v3545
        %vm3549 = vcmask 1047559
        %v3550 = vsel %vm3549, %v3498, %v3548
        %3552 = vmatprep.subr.mxu0 0.0
        %3553 = vmatpush1.msra.mxu0 %v3514
        %3554 = vmatprep.subr.mxu0 0.0
        %3555 = vmatpush1.msra.mxu0 %v3513
        %3556 = vmatprep.subr.mxu0 0.0
        %3557 = vmatpush1.msra.mxu0 %v3512
        %3558 = vmatprep.subr.mxu0 0.0
        %3559 = vmatpush1.msra.mxu0 %v3511
        %3560 = vmatprep.subr.mxu0 0.0
        %3561 = vmatpush1.msra.mxu0 %v3510
        %3562 = vmatprep.subr.mxu0 0.0
        %3563 = vmatpush1.msra.mxu0 %v3509
        %3564 = vmatprep.subr.mxu0 0.0
        %3565 = vmatpush1.msra.mxu0 %v3508
        %3566 = vmatprep.subr.mxu0 0.0
        %3567 = vmatpush1.msra.mxu0 %v3507
        %3568 = vmatprep.subr.mxu0 0.0
        %3569 = vmatpush1.msra.mxu0 %v3506
        %3570 = vmatprep.subr.mxu0 0.0
        %3571 = vmatpush1.msra.mxu0 %v3505
        %3572 = vmatprep.subr.mxu0 0.0
        %3573 = vmatpush1.msra.mxu0 %v3504
        %3574 = vmatprep.subr.mxu0 0.0
        %3575 = vmatpush1.msra.mxu0 %v3503
        %3576 = vmatprep.subr.mxu0 0.0
        %3577 = vmatpush1.msra.mxu0 %v3502
        %3578 = vmatprep.subr.mxu0 0.0
        %3579 = vmatpush1.msra.mxu0 %v3501
        %3580 = vmatprep.subr.mxu0 0.0
        %3581 = vmatpush1.msra.mxu0 %v3500
        %3582 = vmatprep.subr.mxu0 0.0
        %3583 = vmatpush1.msra.mxu0 %v3499
        %3584 = vmatprep.subr.mxu0 0.0
        %3585 = vmatpush2.msra.mxu0 0.0
        %3586 = vmatprep.subr.mxu0 0.0
        %3587 = vmatpush2.msra.mxu0 0.0
        %3588 = vmatprep.subr.mxu0 0.0
        %3589 = vmatpush2.msra.mxu0 0.0
        %3590 = vmatprep.subr.mxu0 0.0
        %3591 = vmatpush2.msra.mxu0 0.0
        %3592 = vmatprep.subr.mxu0 0.0
        %3593 = vmatpush2.msra.mxu0 0.0
        %3594 = vmatprep.subr.mxu0 0.0
        %3595 = vmatpush2.msra.mxu0 0.0
        %3596 = vmatprep.subr.mxu0 0.0
        %3597 = vmatpush2.msra.mxu0 0.0
        %3598 = vmatprep.subr.mxu0 0.0
        %3599 = vmatpush2.msra.mxu0 0.0
        %3600 = vmatprep.subr.mxu0 0.0
        %3601 = vmatpush2.msra.mxu0 0.0
        %3602 = vmatprep.subr.mxu0 0.0
        %3603 = vmatpush2.msra.mxu0 0.0
        %3604 = vmatprep.subr.mxu0 0.0
        %3605 = vmatpush2.msra.mxu0 0.0
        %3606 = vmatprep.subr.mxu0 0.0
        %3607 = vmatpush2.msra.mxu0 0.0
        %3608 = vmatprep.subr.mxu0 0.0
        %3609 = vmatpush2.msra.mxu0 0.0
        %3610 = vmatprep.subr.mxu0 0.0
        %3611 = vmatpush2.msra.mxu0 0.0
        %3612 = vmatprep.subr.mxu0 0.0
        %3613 = vmatpush2.msra.mxu0 0.0
        %3614 = vmatprep.subr.mxu0 0.0
        %3615 = vmatpush2.msra.mxu0 0.0
        %3616 = vmatprep.mubr.f32.mxu0 0.0
        %3617 = vmatmul.mubr.f32.gmra.mxu0 %v3550
        %v3618 = vpop.f32.mrf.mxu0
        %v3619 = vadd.f32 %v3520, %v3618
        %v3620 = vpop.f32.mrf.mxu0
        %3621 = vdwg.mxu0
        %v3622 = vlaneseq
        %v3623 = vand.u32 %v3622, 127
        %vm3624 = vcmp.lt.s32.totalorder %v3623, 5
        %v3625 = vsel %vm3624, %v3619, -1e+30
        %3626 = vmax.xlane.f32.xlu0 %v3625
        %v3627 = vpop.xlane.xlu0 %3626
        %v3628 = vsub.f32 %v3625, %v3627
        %v3629 = vmul.f32 %v3628, 1.442695
        %v3630 = vpow.pop %v3629
        %3631 = vadd.xlane.f32.xlu0 %v3630
        %v3632 = vpop.xlane.xlu0 %3631
        %v3633 = vlog2.pop %v3632
        %v3634 = vmul.f32 %v3633, 0.6931472
        %v3635 = vadd.f32 %v3634, %v3627
        %v3636 = vsub.f32 %v3625, %v3635
        %3637 = vst [vmem:[%s409] sm:$0xff] %v3636
        %s3638 = sand.u32 %s230, 1
        %s3639 = scalar_lea.sflag [#allocation4], %s3638
        %s3640 = sand.u32 %s230, 1
        %s3641 = smul.addr %s3640, 8
        %s3642 = scalar_lea.vmem [#allocation11], %s3641
        // Predicated region
        $region77: #{tpu_custom_call.1} parent=55 // pred_check
          %p3643 = pneg %p240
        $region78: #{tpu_custom_call.1} parent=55 // pred_check_branch
          %3645 = sbr.rel (%p3643) target = $region80
        $region79: #{tpu_custom_call.1} parent=55 // pred_region
          %s3647 = ssub.s32 128, 128
          %3648 = vsyncadd %s3639, %s3647
          %s3649 = smul.addr %s28, 128
          %s3650 = scalar_lea.hbm %s9, %s3649
          %s3652 = sshll.u32 %s3642, 4
          %s3653 = int_to_ptr.vmem [resolvable:$true] %s3652
          %3655 = dma.vmem_to_hbm [thread:$0]  %s3653, 128, %s3650, %s3639
        $region80: #{tpu_custom_call.1} parent=55 // pred_fallthru
          _
      $region56: #{tpu_custom_call.1} parent=5 // pred_fallthru
        _
      %p3656 = scmp.le.s32.totalorder 2, %s23
      // Predicated region
      $region81: #{tpu_custom_call.1} parent=5 // pred_check
        %p3657 = pneg %p3656
      $region82: #{tpu_custom_call.1} parent=5 // pred_check_branch
        %3659 = sbr.rel (%p3657) target = $region84
      $region83: #{tpu_custom_call.1} parent=5 // pred_region
        %s3660 = ssub.s32 %s23, 2
        // Predicated region
        $region85: #{tpu_custom_call.1} parent=83 // pred_check
          %p3661 = pneg %p246
        $region86: #{tpu_custom_call.1} parent=83 // pred_check_branch
          %3663 = sbr.rel (%p3661) target = $region88
        $region87: #{tpu_custom_call.1} parent=83 // pred_region
          %s3664 = sand.u32 %s231, 1
          %s3665 = scalar_lea.sflag [#allocation4], %s3664
          %s3666 = sand.u32 %s231, 1
          %s3667 = smul.addr %s3666, 8
          %s3668 = scalar_lea.vmem [#allocation11], %s3667
          %3669 = dma.done %s3665, 128
        $region88: #{tpu_custom_call.1} parent=83 // pred_fallthru
          _
      $region84: #{tpu_custom_call.1} parent=5 // pred_fallthru
        _
    $region6: #{tpu_custom_call.1} parent=1 // loop_footer
      %s27 = sadd.s32 1, %s23
    $region7: #{tpu_custom_call.1} parent=1 // loop_footer_branch
      %22 = sbr.rel target = $region3
    $region8: #{tpu_custom_call.1} parent=1 // loop_exit
      _
    %3670 = vsyncpa [#allocation3], 1
    %s3671 = scalar_lea.sflag [#allocation3], 1
    %3672 = vsyncpa %s3671, 1
    %3673 = vsyncpa [#allocation6], 1
    %3674 = vsyncpa [#allocation9], 1
    %3675 = vsyncpa [#allocation4], 1
    %s3676 = scalar_lea.sflag [#allocation4], 1
    %3677 = vsyncpa %s3676, 1

</llo_original>
